<compile_context>
chip_gen: v7x
topology: tpu7x:2x2x1
jax: 0.10.0
libtpu: 0.0.40
codegen_flags: <defaults>
</compile_context>

<pallas_src>
import jax
import jax.numpy as jnp
from jax.experimental import pallas as pl
from jax.experimental.pallas import tpu as pltpu

EPS = 1e-5  # nn.InstanceNorm2d default eps


def _conv3x3_reflect_instnorm(x, w_bf16, *, relu):
    """ReflectionPad2d(1) + 3x3 conv + InstanceNorm (affine=False, biased var)
    on a single image held in VMEM.

    x:      (H, W, C)  float32 activation.
    w_bf16: (9, Cin, Cout) bf16 weights, tap index k = 3*dy + dx.
    Returns (H, W, Cout) float32.
    """
    H, W, C = x.shape
    Cout = w_bf16.shape[2]
    xb = x.astype(jnp.bfloat16)

    # ReflectionPad2d(1) along H (leading dim -> cheap plane concat).
    # Mirror index 1 at each edge: pad_top = row 1, pad_bottom = row H-2.
    xp = jnp.concatenate([xb[1:2], xb, xb[H - 2:H - 1]], axis=0)          # (H+2, W, C)

    # The three dx-shifted, W-wide slabs of the (virtually) W-padded image,
    # built once and reused for all three dy taps:
    #   padded cols 0..W-1  = [x1, x0, x1, ..., x_{W-3}]
    #   padded cols 1..W    = x
    #   padded cols 2..W+1  = [x1, ..., x_{W-1}, x_{W-2}]
    slab_l = jnp.concatenate([xp[:, 1:2], xp[:, 0:W - 1]], axis=1)        # dx = 0
    slab_m = xp                                                           # dx = 1
    slab_r = jnp.concatenate([xp[:, 1:W], xp[:, W - 2:W - 1]], axis=1)    # dx = 2
    # Flatten each slab to 2-D once (3 relayouts per conv instead of 9); the
    # per-tap dy slices below are then plain leading-dim row slices at dy*W.
    slabs = [s.reshape((H + 2) * W, C) for s in (slab_l, slab_m, slab_r)]

    acc = jnp.zeros((H * W, Cout), jnp.float32)
    for dy in range(3):
        for dx in range(3):
            lhs = slabs[dx][dy * W:dy * W + H * W, :]                     # (H*W, C) bf16
            acc = acc + jnp.dot(lhs, w_bf16[3 * dy + dx],
                                preferred_element_type=jnp.float32)

    # InstanceNorm2d(affine=False): per-(image, channel) spatial statistics,
    # one pass over acc (sum and sum-of-squares), f32 throughout.
    inv_n = 1.0 / (H * W)
    mean = jnp.sum(acc, axis=0, keepdims=True) * inv_n
    ex2 = jnp.sum(acc * acc, axis=0, keepdims=True) * inv_n
    var = jnp.maximum(ex2 - mean * mean, 0.0)
    y = (acc - mean) * jax.lax.rsqrt(var + EPS)
    if relu:
        y = jnp.maximum(y, 0.0)                                           # nn.ReLU(True)
    return y.reshape(H, W, Cout)


def resnet_block_kernel(x_ref, w1_ref, w2_ref, o_ref):
    # x_ref / o_ref: (1, H, W, C) f32;  w*_ref: (9, C, C) bf16.
    _, H, W, C = x_ref.shape
    x = x_ref[0]                                          # (H, W, C) f32, single load
    h = _conv3x3_reflect_instnorm(x, w1_ref[...], relu=True)    # conv1 + IN + ReLU
    y = _conv3x3_reflect_instnorm(h, w2_ref[...], relu=False)   # conv2 + IN
    o_ref[0] = (x + y).astype(o_ref.dtype)                # residual add, single store


def resnet_block_nhwc(x, w1_bf16, w2_bf16):
    """x: (N, H, W, C) f32; w*: (9, C, C) bf16 (tap-major). Returns (N, H, W, C)."""
    N, H, W, C = x.shape
    img_spec = pl.BlockSpec((1, H, W, C), lambda n: (n, 0, 0, 0))
    w_spec = pl.BlockSpec((9, C, C), lambda n: (0, 0, 0))
    # TODO(synk): very large images (e.g. H=W>=128 with C>=256 on v7x's 64 MiB
    # VMEM) need an H-band grid axis with two-pass InstanceNorm statistics;
    # full-image tiles are used here.
    return pl.pallas_call(
        resnet_block_kernel,
        out_shape=jax.ShapeDtypeStruct((N, H, W, C), x.dtype),
        grid=(N,),
        in_specs=[img_spec, w_spec, w_spec],
        out_specs=img_spec,
        compiler_params=pltpu.CompilerParams(
            dimension_semantics=("parallel",),
            vmem_limit_bytes=48 * 1024 * 1024,   # above the 16/32 MiB scoped defaults
        ),
    )(x, w1_bf16, w2_bf16)


def resnet_block_nchw(x_nchw, w1_oihw, b1, w2_oihw, b2):
    """PyTorch-facing entry: NCHW input, OIHW conv weights (nn.Conv2d layout).

    b1/b2 are accepted for drop-in compatibility but unused: with
    InstanceNorm2d(affine=False) immediately after each conv, the per-channel
    conv bias is exactly cancelled by the mean subtraction.
    """
    del b1, b2
    x = jnp.transpose(x_nchw, (0, 2, 3, 1))               # -> NHWC
    C = x.shape[-1]
    # (Cout, Cin, kh, kw) -> (kh, kw, Cin, Cout) -> (9, Cin, Cout), bf16 for the MXU.
    w1 = jnp.transpose(w1_oihw, (2, 3, 1, 0)).reshape(9, C, C).astype(jnp.bfloat16)
    w2 = jnp.transpose(w2_oihw, (2, 3, 1, 0)).reshape(9, C, C).astype(jnp.bfloat16)
    out = resnet_block_nhwc(x, w1, w2)
    return jnp.transpose(out, (0, 3, 1, 2))               # -> NCHW


# ---------------- pure-JAX f32 reference (PyTorch-faithful, with biases) -------------
def _ref_forward(x_nchw, w1_oihw, b1, w2_oihw, b2):
    def conv3x3_reflect(x, w, b):
        xp = jnp.pad(x, ((0, 0), (0, 0), (1, 1), (1, 1)), mode="reflect")
        y = jax.lax.conv_general_dilated(
            xp, w, (1, 1), "VALID", dimension_numbers=("NCHW", "OIHW", "NCHW"))
        return y + b[None, :, None, None]

    def inorm(x):
        m = jnp.mean(x, axis=(2, 3), keepdims=True)
        v = jnp.mean((x - m) ** 2, axis=(2, 3), keepdims=True)
        return (x - m) * jax.lax.rsqrt(v + EPS)

    h = jnp.maximum(inorm(conv3x3_reflect(x_nchw, w1_oihw, b1)), 0.0)
    return x_nchw + inorm(conv3x3_reflect(h, w2_oihw, b2))


if __name__ == "__main__":
    N, C, H, W = 2, 4, 16, 16  # dim = 4 (tiny correctness config)
    key = jax.random.PRNGKey(0)
    kx, kw1, kb1, kw2, kb2 = jax.random.split(key, 5)

    x_nchw = jax.random.normal(kx, (N, C, H, W), jnp.float32)
    # Synthetic parameters with nn.Conv2d(dim, dim, 3) shapes.
    w1_oihw = jax.random.normal(kw1, (C, C, 3, 3), jnp.float32) * 0.2
    b1 = jax.random.normal(kb1, (C,), jnp.float32) * 0.1
    w2_oihw = jax.random.normal(kw2, (C, C, 3, 3), jnp.float32) * 0.2
    b2 = jax.random.normal(kb2, (C,), jnp.float32) * 0.1

    out = jax.jit(resnet_block_nchw)(x_nchw, w1_oihw, b1, w2_oihw, b2)
    out = jax.block_until_ready(out)

    ref = _ref_forward(x_nchw, w1_oihw, b1, w2_oihw, b2)
    assert out.shape == (N, C, H, W)
    # bf16 MXU feed (f32 accumulation) -> tolerance accounts for bf16 rounding.
    max_diff = float(jnp.max(jnp.abs(out - ref)))
    assert jnp.allclose(out, ref, atol=5e-2, rtol=5e-2), (
        "mismatch vs reference, max|diff|=%e" % max_diff)

    print("KERNEL_OK")
</pallas_src>

<mosaic_0001>
module attributes {stable_mosaic.version = 11 : i64} {
  func.func @resnet_block_kernel(%arg0: i32, %arg1: memref<1x16x16x4xf32, #tpu.memory_space<vmem>>, %arg2: memref<9x4x4xbf16, #tpu.memory_space<vmem>>, %arg3: memref<9x4x4xbf16, #tpu.memory_space<vmem>>, %arg4: memref<1x16x16x4xf32, #tpu.memory_space<vmem>>) attributes {dimension_semantics = [#tpu.dimension_semantics<parallel>], iteration_bounds = array<i64: 2>, scalar_prefetch = 0 : i64, scratch_operands = 0 : i64, tpu.core_type = #tpu.core_type<tc>, window_params = [{transform_indices = @transform_0, window_bounds = array<i64: 1, 16, 16, 4>}, {pipeline_mode = #tpu.pipeline_mode<synchronous>, transform_indices = @transform_1, window_bounds = array<i64: 9, 4, 4>}, {pipeline_mode = #tpu.pipeline_mode<synchronous>, transform_indices = @transform_2, window_bounds = array<i64: 9, 4, 4>}, {transform_indices = @transform_3, window_bounds = array<i64: 1, 16, 16, 4>}]} {
    %c0 = arith.constant 0 : index
    %c0_0 = arith.constant 0 : index
    %c0_1 = arith.constant 0 : index
    %c0_2 = arith.constant 0 : index
    %0 = vector.load %arg1[%c0, %c0_0, %c0_1, %c0_2] : memref<1x16x16x4xf32, #tpu.memory_space<vmem>>, vector<1x16x16x4xf32>
    %1 = vector.shape_cast %0 : vector<1x16x16x4xf32> to vector<16x16x4xf32>
    %c0_3 = arith.constant 0 : index
    %c0_4 = arith.constant 0 : index
    %c0_5 = arith.constant 0 : index
    %2 = vector.load %arg2[%c0_3, %c0_4, %c0_5] : memref<9x4x4xbf16, #tpu.memory_space<vmem>>, vector<9x4x4xbf16>
    %3 = arith.truncf %1 : vector<16x16x4xf32> to vector<16x16x4xbf16>
    %4 = vector.extract_strided_slice %3 {offsets = [1, 0, 0], sizes = [1, 16, 4], strides = [1, 1, 1]} : vector<16x16x4xbf16> to vector<1x16x4xbf16>
    %5 = vector.extract_strided_slice %3 {offsets = [14, 0, 0], sizes = [1, 16, 4], strides = [1, 1, 1]} : vector<16x16x4xbf16> to vector<1x16x4xbf16>
    %6 = tpu.concatenate %4, %3, %5 in 0 : vector<1x16x4xbf16>, vector<16x16x4xbf16>, vector<1x16x4xbf16> -> vector<18x16x4xbf16>
    %7 = vector.extract_strided_slice %6 {offsets = [0, 1, 0], sizes = [18, 1, 4], strides = [1, 1, 1]} : vector<18x16x4xbf16> to vector<18x1x4xbf16>
    %8 = vector.extract_strided_slice %6 {offsets = [0, 0, 0], sizes = [18, 15, 4], strides = [1, 1, 1]} : vector<18x16x4xbf16> to vector<18x15x4xbf16>
    %9 = tpu.concatenate %7, %8 in 1 : vector<18x1x4xbf16>, vector<18x15x4xbf16> -> vector<18x16x4xbf16>
    %10 = vector.extract_strided_slice %6 {offsets = [0, 1, 0], sizes = [18, 15, 4], strides = [1, 1, 1]} : vector<18x16x4xbf16> to vector<18x15x4xbf16>
    %11 = vector.extract_strided_slice %6 {offsets = [0, 14, 0], sizes = [18, 1, 4], strides = [1, 1, 1]} : vector<18x16x4xbf16> to vector<18x1x4xbf16>
    %12 = tpu.concatenate %10, %11 in 1 : vector<18x15x4xbf16>, vector<18x1x4xbf16> -> vector<18x16x4xbf16>
    %13 = vector.shape_cast %9 : vector<18x16x4xbf16> to vector<288x4xbf16>
    %14 = vector.shape_cast %6 : vector<18x16x4xbf16> to vector<288x4xbf16>
    %15 = vector.shape_cast %12 : vector<18x16x4xbf16> to vector<288x4xbf16>
    %cst = arith.constant 0.000000e+00 : f32
    %16 = vector.broadcast %cst : f32 to vector<256x4xf32>
    %17 = vector.extract_strided_slice %13 {offsets = [0, 0], sizes = [256, 4], strides = [1, 1]} : vector<288x4xbf16> to vector<256x4xbf16>
    %18 = vector.extract_strided_slice %2 {offsets = [0, 0, 0], sizes = [1, 4, 4], strides = [1, 1, 1]} : vector<9x4x4xbf16> to vector<1x4x4xbf16>
    %19 = vector.shape_cast %18 : vector<1x4x4xbf16> to vector<4x4xbf16>
    %cst_6 = arith.constant dense<0.000000e+00> : vector<256x4xf32>
    %20 = tpu.matmul %17, %19, %cst_6 {dimension_numbers = #tpu.dot_dimension_numbers<[1], [0], [0], [1], [0, 0, 1, 1], [], []>} : vector<256x4xbf16>, vector<4x4xbf16>, vector<256x4xf32> -> vector<256x4xf32>
    %21 = arith.addf %16, %20 : vector<256x4xf32>
    %22 = vector.extract_strided_slice %14 {offsets = [0, 0], sizes = [256, 4], strides = [1, 1]} : vector<288x4xbf16> to vector<256x4xbf16>
    %23 = vector.extract_strided_slice %2 {offsets = [1, 0, 0], sizes = [1, 4, 4], strides = [1, 1, 1]} : vector<9x4x4xbf16> to vector<1x4x4xbf16>
    %24 = vector.shape_cast %23 : vector<1x4x4xbf16> to vector<4x4xbf16>
    %cst_7 = arith.constant dense<0.000000e+00> : vector<256x4xf32>
    %25 = tpu.matmul %22, %24, %cst_7 {dimension_numbers = #tpu.dot_dimension_numbers<[1], [0], [0], [1], [0, 0, 1, 1], [], []>} : vector<256x4xbf16>, vector<4x4xbf16>, vector<256x4xf32> -> vector<256x4xf32>
    %26 = arith.addf %21, %25 : vector<256x4xf32>
    %27 = vector.extract_strided_slice %15 {offsets = [0, 0], sizes = [256, 4], strides = [1, 1]} : vector<288x4xbf16> to vector<256x4xbf16>
    %28 = vector.extract_strided_slice %2 {offsets = [2, 0, 0], sizes = [1, 4, 4], strides = [1, 1, 1]} : vector<9x4x4xbf16> to vector<1x4x4xbf16>
    %29 = vector.shape_cast %28 : vector<1x4x4xbf16> to vector<4x4xbf16>
    %cst_8 = arith.constant dense<0.000000e+00> : vector<256x4xf32>
    %30 = tpu.matmul %27, %29, %cst_8 {dimension_numbers = #tpu.dot_dimension_numbers<[1], [0], [0], [1], [0, 0, 1, 1], [], []>} : vector<256x4xbf16>, vector<4x4xbf16>, vector<256x4xf32> -> vector<256x4xf32>
    %31 = arith.addf %26, %30 : vector<256x4xf32>
    %32 = vector.extract_strided_slice %13 {offsets = [16, 0], sizes = [256, 4], strides = [1, 1]} : vector<288x4xbf16> to vector<256x4xbf16>
    %33 = vector.extract_strided_slice %2 {offsets = [3, 0, 0], sizes = [1, 4, 4], strides = [1, 1, 1]} : vector<9x4x4xbf16> to vector<1x4x4xbf16>
    %34 = vector.shape_cast %33 : vector<1x4x4xbf16> to vector<4x4xbf16>
    %cst_9 = arith.constant dense<0.000000e+00> : vector<256x4xf32>
    %35 = tpu.matmul %32, %34, %cst_9 {dimension_numbers = #tpu.dot_dimension_numbers<[1], [0], [0], [1], [0, 0, 1, 1], [], []>} : vector<256x4xbf16>, vector<4x4xbf16>, vector<256x4xf32> -> vector<256x4xf32>
    %36 = arith.addf %31, %35 : vector<256x4xf32>
    %37 = vector.extract_strided_slice %14 {offsets = [16, 0], sizes = [256, 4], strides = [1, 1]} : vector<288x4xbf16> to vector<256x4xbf16>
    %38 = vector.extract_strided_slice %2 {offsets = [4, 0, 0], sizes = [1, 4, 4], strides = [1, 1, 1]} : vector<9x4x4xbf16> to vector<1x4x4xbf16>
    %39 = vector.shape_cast %38 : vector<1x4x4xbf16> to vector<4x4xbf16>
    %cst_10 = arith.constant dense<0.000000e+00> : vector<256x4xf32>
    %40 = tpu.matmul %37, %39, %cst_10 {dimension_numbers = #tpu.dot_dimension_numbers<[1], [0], [0], [1], [0, 0, 1, 1], [], []>} : vector<256x4xbf16>, vector<4x4xbf16>, vector<256x4xf32> -> vector<256x4xf32>
    %41 = arith.addf %36, %40 : vector<256x4xf32>
    %42 = vector.extract_strided_slice %15 {offsets = [16, 0], sizes = [256, 4], strides = [1, 1]} : vector<288x4xbf16> to vector<256x4xbf16>
    %43 = vector.extract_strided_slice %2 {offsets = [5, 0, 0], sizes = [1, 4, 4], strides = [1, 1, 1]} : vector<9x4x4xbf16> to vector<1x4x4xbf16>
    %44 = vector.shape_cast %43 : vector<1x4x4xbf16> to vector<4x4xbf16>
    %cst_11 = arith.constant dense<0.000000e+00> : vector<256x4xf32>
    %45 = tpu.matmul %42, %44, %cst_11 {dimension_numbers = #tpu.dot_dimension_numbers<[1], [0], [0], [1], [0, 0, 1, 1], [], []>} : vector<256x4xbf16>, vector<4x4xbf16>, vector<256x4xf32> -> vector<256x4xf32>
    %46 = arith.addf %41, %45 : vector<256x4xf32>
    %47 = vector.extract_strided_slice %13 {offsets = [32, 0], sizes = [256, 4], strides = [1, 1]} : vector<288x4xbf16> to vector<256x4xbf16>
    %48 = vector.extract_strided_slice %2 {offsets = [6, 0, 0], sizes = [1, 4, 4], strides = [1, 1, 1]} : vector<9x4x4xbf16> to vector<1x4x4xbf16>
    %49 = vector.shape_cast %48 : vector<1x4x4xbf16> to vector<4x4xbf16>
    %cst_12 = arith.constant dense<0.000000e+00> : vector<256x4xf32>
    %50 = tpu.matmul %47, %49, %cst_12 {dimension_numbers = #tpu.dot_dimension_numbers<[1], [0], [0], [1], [0, 0, 1, 1], [], []>} : vector<256x4xbf16>, vector<4x4xbf16>, vector<256x4xf32> -> vector<256x4xf32>
    %51 = arith.addf %46, %50 : vector<256x4xf32>
    %52 = vector.extract_strided_slice %14 {offsets = [32, 0], sizes = [256, 4], strides = [1, 1]} : vector<288x4xbf16> to vector<256x4xbf16>
    %53 = vector.extract_strided_slice %2 {offsets = [7, 0, 0], sizes = [1, 4, 4], strides = [1, 1, 1]} : vector<9x4x4xbf16> to vector<1x4x4xbf16>
    %54 = vector.shape_cast %53 : vector<1x4x4xbf16> to vector<4x4xbf16>
    %cst_13 = arith.constant dense<0.000000e+00> : vector<256x4xf32>
    %55 = tpu.matmul %52, %54, %cst_13 {dimension_numbers = #tpu.dot_dimension_numbers<[1], [0], [0], [1], [0, 0, 1, 1], [], []>} : vector<256x4xbf16>, vector<4x4xbf16>, vector<256x4xf32> -> vector<256x4xf32>
    %56 = arith.addf %51, %55 : vector<256x4xf32>
    %57 = vector.extract_strided_slice %15 {offsets = [32, 0], sizes = [256, 4], strides = [1, 1]} : vector<288x4xbf16> to vector<256x4xbf16>
    %58 = vector.extract_strided_slice %2 {offsets = [8, 0, 0], sizes = [1, 4, 4], strides = [1, 1, 1]} : vector<9x4x4xbf16> to vector<1x4x4xbf16>
    %59 = vector.shape_cast %58 : vector<1x4x4xbf16> to vector<4x4xbf16>
    %cst_14 = arith.constant dense<0.000000e+00> : vector<256x4xf32>
    %60 = tpu.matmul %57, %59, %cst_14 {dimension_numbers = #tpu.dot_dimension_numbers<[1], [0], [0], [1], [0, 0, 1, 1], [], []>} : vector<256x4xbf16>, vector<4x4xbf16>, vector<256x4xf32> -> vector<256x4xf32>
    %61 = arith.addf %56, %60 : vector<256x4xf32>
    %cst_15 = arith.constant dense<0.000000e+00> : vector<4xf32>
    %62 = vector.multi_reduction <add>, %61, %cst_15 [0] : vector<256x4xf32> to vector<4xf32>
    %63 = vector.shape_cast %62 : vector<4xf32> to vector<1x4xf32>
    %cst_16 = arith.constant 3.906250e-03 : f32
    %64 = vector.broadcast %cst_16 : f32 to vector<1x4xf32>
    %65 = arith.mulf %63, %64 : vector<1x4xf32>
    %66 = arith.mulf %61, %61 : vector<256x4xf32>
    %cst_17 = arith.constant dense<0.000000e+00> : vector<4xf32>
    %67 = vector.multi_reduction <add>, %66, %cst_17 [0] : vector<256x4xf32> to vector<4xf32>
    %68 = vector.shape_cast %67 : vector<4xf32> to vector<1x4xf32>
    %cst_18 = arith.constant 3.906250e-03 : f32
    %69 = vector.broadcast %cst_18 : f32 to vector<1x4xf32>
    %70 = arith.mulf %68, %69 : vector<1x4xf32>
    %71 = arith.mulf %65, %65 : vector<1x4xf32>
    %72 = arith.subf %70, %71 : vector<1x4xf32>
    %cst_19 = arith.constant 0.000000e+00 : f32
    %73 = vector.broadcast %cst_19 : f32 to vector<1x4xf32>
    %74 = arith.maximumf %72, %73 : vector<1x4xf32>
    %75 = vector.broadcast %65 : vector<1x4xf32> to vector<256x4xf32>
    %76 = arith.subf %61, %75 : vector<256x4xf32>
    %cst_20 = arith.constant 9.99999974E-6 : f32
    %77 = vector.broadcast %cst_20 : f32 to vector<1x4xf32>
    %78 = arith.addf %74, %77 : vector<1x4xf32>
    %79 = math.rsqrt %78 : vector<1x4xf32>
    %80 = vector.broadcast %79 : vector<1x4xf32> to vector<256x4xf32>
    %81 = arith.mulf %76, %80 : vector<256x4xf32>
    %cst_21 = arith.constant 0.000000e+00 : f32
    %82 = vector.broadcast %cst_21 : f32 to vector<256x4xf32>
    %83 = arith.maximumf %81, %82 : vector<256x4xf32>
    %84 = vector.shape_cast %83 : vector<256x4xf32> to vector<16x16x4xf32>
    %c0_22 = arith.constant 0 : index
    %c0_23 = arith.constant 0 : index
    %c0_24 = arith.constant 0 : index
    %85 = vector.load %arg3[%c0_22, %c0_23, %c0_24] : memref<9x4x4xbf16, #tpu.memory_space<vmem>>, vector<9x4x4xbf16>
    %86 = arith.truncf %84 : vector<16x16x4xf32> to vector<16x16x4xbf16>
    %87 = vector.extract_strided_slice %86 {offsets = [1, 0, 0], sizes = [1, 16, 4], strides = [1, 1, 1]} : vector<16x16x4xbf16> to vector<1x16x4xbf16>
    %88 = vector.extract_strided_slice %86 {offsets = [14, 0, 0], sizes = [1, 16, 4], strides = [1, 1, 1]} : vector<16x16x4xbf16> to vector<1x16x4xbf16>
    %89 = tpu.concatenate %87, %86, %88 in 0 : vector<1x16x4xbf16>, vector<16x16x4xbf16>, vector<1x16x4xbf16> -> vector<18x16x4xbf16>
    %90 = vector.extract_strided_slice %89 {offsets = [0, 1, 0], sizes = [18, 1, 4], strides = [1, 1, 1]} : vector<18x16x4xbf16> to vector<18x1x4xbf16>
    %91 = vector.extract_strided_slice %89 {offsets = [0, 0, 0], sizes = [18, 15, 4], strides = [1, 1, 1]} : vector<18x16x4xbf16> to vector<18x15x4xbf16>
    %92 = tpu.concatenate %90, %91 in 1 : vector<18x1x4xbf16>, vector<18x15x4xbf16> -> vector<18x16x4xbf16>
    %93 = vector.extract_strided_slice %89 {offsets = [0, 1, 0], sizes = [18, 15, 4], strides = [1, 1, 1]} : vector<18x16x4xbf16> to vector<18x15x4xbf16>
    %94 = vector.extract_strided_slice %89 {offsets = [0, 14, 0], sizes = [18, 1, 4], strides = [1, 1, 1]} : vector<18x16x4xbf16> to vector<18x1x4xbf16>
    %95 = tpu.concatenate %93, %94 in 1 : vector<18x15x4xbf16>, vector<18x1x4xbf16> -> vector<18x16x4xbf16>
    %96 = vector.shape_cast %92 : vector<18x16x4xbf16> to vector<288x4xbf16>
    %97 = vector.shape_cast %89 : vector<18x16x4xbf16> to vector<288x4xbf16>
    %98 = vector.shape_cast %95 : vector<18x16x4xbf16> to vector<288x4xbf16>
    %cst_25 = arith.constant 0.000000e+00 : f32
    %99 = vector.broadcast %cst_25 : f32 to vector<256x4xf32>
    %100 = vector.extract_strided_slice %96 {offsets = [0, 0], sizes = [256, 4], strides = [1, 1]} : vector<288x4xbf16> to vector<256x4xbf16>
    %101 = vector.extract_strided_slice %85 {offsets = [0, 0, 0], sizes = [1, 4, 4], strides = [1, 1, 1]} : vector<9x4x4xbf16> to vector<1x4x4xbf16>
    %102 = vector.shape_cast %101 : vector<1x4x4xbf16> to vector<4x4xbf16>
    %cst_26 = arith.constant dense<0.000000e+00> : vector<256x4xf32>
    %103 = tpu.matmul %100, %102, %cst_26 {dimension_numbers = #tpu.dot_dimension_numbers<[1], [0], [0], [1], [0, 0, 1, 1], [], []>} : vector<256x4xbf16>, vector<4x4xbf16>, vector<256x4xf32> -> vector<256x4xf32>
    %104 = arith.addf %99, %103 : vector<256x4xf32>
    %105 = vector.extract_strided_slice %97 {offsets = [0, 0], sizes = [256, 4], strides = [1, 1]} : vector<288x4xbf16> to vector<256x4xbf16>
    %106 = vector.extract_strided_slice %85 {offsets = [1, 0, 0], sizes = [1, 4, 4], strides = [1, 1, 1]} : vector<9x4x4xbf16> to vector<1x4x4xbf16>
    %107 = vector.shape_cast %106 : vector<1x4x4xbf16> to vector<4x4xbf16>
    %cst_27 = arith.constant dense<0.000000e+00> : vector<256x4xf32>
    %108 = tpu.matmul %105, %107, %cst_27 {dimension_numbers = #tpu.dot_dimension_numbers<[1], [0], [0], [1], [0, 0, 1, 1], [], []>} : vector<256x4xbf16>, vector<4x4xbf16>, vector<256x4xf32> -> vector<256x4xf32>
    %109 = arith.addf %104, %108 : vector<256x4xf32>
    %110 = vector.extract_strided_slice %98 {offsets = [0, 0], sizes = [256, 4], strides = [1, 1]} : vector<288x4xbf16> to vector<256x4xbf16>
    %111 = vector.extract_strided_slice %85 {offsets = [2, 0, 0], sizes = [1, 4, 4], strides = [1, 1, 1]} : vector<9x4x4xbf16> to vector<1x4x4xbf16>
    %112 = vector.shape_cast %111 : vector<1x4x4xbf16> to vector<4x4xbf16>
    %cst_28 = arith.constant dense<0.000000e+00> : vector<256x4xf32>
    %113 = tpu.matmul %110, %112, %cst_28 {dimension_numbers = #tpu.dot_dimension_numbers<[1], [0], [0], [1], [0, 0, 1, 1], [], []>} : vector<256x4xbf16>, vector<4x4xbf16>, vector<256x4xf32> -> vector<256x4xf32>
    %114 = arith.addf %109, %113 : vector<256x4xf32>
    %115 = vector.extract_strided_slice %96 {offsets = [16, 0], sizes = [256, 4], strides = [1, 1]} : vector<288x4xbf16> to vector<256x4xbf16>
    %116 = vector.extract_strided_slice %85 {offsets = [3, 0, 0], sizes = [1, 4, 4], strides = [1, 1, 1]} : vector<9x4x4xbf16> to vector<1x4x4xbf16>
    %117 = vector.shape_cast %116 : vector<1x4x4xbf16> to vector<4x4xbf16>
    %cst_29 = arith.constant dense<0.000000e+00> : vector<256x4xf32>
    %118 = tpu.matmul %115, %117, %cst_29 {dimension_numbers = #tpu.dot_dimension_numbers<[1], [0], [0], [1], [0, 0, 1, 1], [], []>} : vector<256x4xbf16>, vector<4x4xbf16>, vector<256x4xf32> -> vector<256x4xf32>
    %119 = arith.addf %114, %118 : vector<256x4xf32>
    %120 = vector.extract_strided_slice %97 {offsets = [16, 0], sizes = [256, 4], strides = [1, 1]} : vector<288x4xbf16> to vector<256x4xbf16>
    %121 = vector.extract_strided_slice %85 {offsets = [4, 0, 0], sizes = [1, 4, 4], strides = [1, 1, 1]} : vector<9x4x4xbf16> to vector<1x4x4xbf16>
    %122 = vector.shape_cast %121 : vector<1x4x4xbf16> to vector<4x4xbf16>
    %cst_30 = arith.constant dense<0.000000e+00> : vector<256x4xf32>
    %123 = tpu.matmul %120, %122, %cst_30 {dimension_numbers = #tpu.dot_dimension_numbers<[1], [0], [0], [1], [0, 0, 1, 1], [], []>} : vector<256x4xbf16>, vector<4x4xbf16>, vector<256x4xf32> -> vector<256x4xf32>
    %124 = arith.addf %119, %123 : vector<256x4xf32>
    %125 = vector.extract_strided_slice %98 {offsets = [16, 0], sizes = [256, 4], strides = [1, 1]} : vector<288x4xbf16> to vector<256x4xbf16>
    %126 = vector.extract_strided_slice %85 {offsets = [5, 0, 0], sizes = [1, 4, 4], strides = [1, 1, 1]} : vector<9x4x4xbf16> to vector<1x4x4xbf16>
    %127 = vector.shape_cast %126 : vector<1x4x4xbf16> to vector<4x4xbf16>
    %cst_31 = arith.constant dense<0.000000e+00> : vector<256x4xf32>
    %128 = tpu.matmul %125, %127, %cst_31 {dimension_numbers = #tpu.dot_dimension_numbers<[1], [0], [0], [1], [0, 0, 1, 1], [], []>} : vector<256x4xbf16>, vector<4x4xbf16>, vector<256x4xf32> -> vector<256x4xf32>
    %129 = arith.addf %124, %128 : vector<256x4xf32>
    %130 = vector.extract_strided_slice %96 {offsets = [32, 0], sizes = [256, 4], strides = [1, 1]} : vector<288x4xbf16> to vector<256x4xbf16>
    %131 = vector.extract_strided_slice %85 {offsets = [6, 0, 0], sizes = [1, 4, 4], strides = [1, 1, 1]} : vector<9x4x4xbf16> to vector<1x4x4xbf16>
    %132 = vector.shape_cast %131 : vector<1x4x4xbf16> to vector<4x4xbf16>
    %cst_32 = arith.constant dense<0.000000e+00> : vector<256x4xf32>
    %133 = tpu.matmul %130, %132, %cst_32 {dimension_numbers = #tpu.dot_dimension_numbers<[1], [0], [0], [1], [0, 0, 1, 1], [], []>} : vector<256x4xbf16>, vector<4x4xbf16>, vector<256x4xf32> -> vector<256x4xf32>
    %134 = arith.addf %129, %133 : vector<256x4xf32>
    %135 = vector.extract_strided_slice %97 {offsets = [32, 0], sizes = [256, 4], strides = [1, 1]} : vector<288x4xbf16> to vector<256x4xbf16>
    %136 = vector.extract_strided_slice %85 {offsets = [7, 0, 0], sizes = [1, 4, 4], strides = [1, 1, 1]} : vector<9x4x4xbf16> to vector<1x4x4xbf16>
    %137 = vector.shape_cast %136 : vector<1x4x4xbf16> to vector<4x4xbf16>
    %cst_33 = arith.constant dense<0.000000e+00> : vector<256x4xf32>
    %138 = tpu.matmul %135, %137, %cst_33 {dimension_numbers = #tpu.dot_dimension_numbers<[1], [0], [0], [1], [0, 0, 1, 1], [], []>} : vector<256x4xbf16>, vector<4x4xbf16>, vector<256x4xf32> -> vector<256x4xf32>
    %139 = arith.addf %134, %138 : vector<256x4xf32>
    %140 = vector.extract_strided_slice %98 {offsets = [32, 0], sizes = [256, 4], strides = [1, 1]} : vector<288x4xbf16> to vector<256x4xbf16>
    %141 = vector.extract_strided_slice %85 {offsets = [8, 0, 0], sizes = [1, 4, 4], strides = [1, 1, 1]} : vector<9x4x4xbf16> to vector<1x4x4xbf16>
    %142 = vector.shape_cast %141 : vector<1x4x4xbf16> to vector<4x4xbf16>
    %cst_34 = arith.constant dense<0.000000e+00> : vector<256x4xf32>
    %143 = tpu.matmul %140, %142, %cst_34 {dimension_numbers = #tpu.dot_dimension_numbers<[1], [0], [0], [1], [0, 0, 1, 1], [], []>} : vector<256x4xbf16>, vector<4x4xbf16>, vector<256x4xf32> -> vector<256x4xf32>
    %144 = arith.addf %139, %143 : vector<256x4xf32>
    %cst_35 = arith.constant dense<0.000000e+00> : vector<4xf32>
    %145 = vector.multi_reduction <add>, %144, %cst_35 [0] : vector<256x4xf32> to vector<4xf32>
    %146 = vector.shape_cast %145 : vector<4xf32> to vector<1x4xf32>
    %cst_36 = arith.constant 3.906250e-03 : f32
    %147 = vector.broadcast %cst_36 : f32 to vector<1x4xf32>
    %148 = arith.mulf %146, %147 : vector<1x4xf32>
    %149 = arith.mulf %144, %144 : vector<256x4xf32>
    %cst_37 = arith.constant dense<0.000000e+00> : vector<4xf32>
    %150 = vector.multi_reduction <add>, %149, %cst_37 [0] : vector<256x4xf32> to vector<4xf32>
    %151 = vector.shape_cast %150 : vector<4xf32> to vector<1x4xf32>
    %cst_38 = arith.constant 3.906250e-03 : f32
    %152 = vector.broadcast %cst_38 : f32 to vector<1x4xf32>
    %153 = arith.mulf %151, %152 : vector<1x4xf32>
    %154 = arith.mulf %148, %148 : vector<1x4xf32>
    %155 = arith.subf %153, %154 : vector<1x4xf32>
    %cst_39 = arith.constant 0.000000e+00 : f32
    %156 = vector.broadcast %cst_39 : f32 to vector<1x4xf32>
    %157 = arith.maximumf %155, %156 : vector<1x4xf32>
    %158 = vector.broadcast %148 : vector<1x4xf32> to vector<256x4xf32>
    %159 = arith.subf %144, %158 : vector<256x4xf32>
    %cst_40 = arith.constant 9.99999974E-6 : f32
    %160 = vector.broadcast %cst_40 : f32 to vector<1x4xf32>
    %161 = arith.addf %157, %160 : vector<1x4xf32>
    %162 = math.rsqrt %161 : vector<1x4xf32>
    %163 = vector.broadcast %162 : vector<1x4xf32> to vector<256x4xf32>
    %164 = arith.mulf %159, %163 : vector<256x4xf32>
    %165 = vector.shape_cast %164 : vector<256x4xf32> to vector<16x16x4xf32>
    %166 = arith.addf %1, %165 : vector<16x16x4xf32>
    %c0_41 = arith.constant 0 : index
    %c0_42 = arith.constant 0 : index
    %c0_43 = arith.constant 0 : index
    %c0_44 = arith.constant 0 : index
    %167 = vector.load %arg4[%c0_41, %c0_42, %c0_43, %c0_44] : memref<1x16x16x4xf32, #tpu.memory_space<vmem>>, vector<1x16x16x4xf32>
    %168 = vector.shape_cast %167 : vector<1x16x16x4xf32> to vector<16x16x4xf32>
    %169 = vector.shape_cast %166 : vector<16x16x4xf32> to vector<1x16x16x4xf32>
    tpu.vector_store %arg4[%c0_41, %c0_42, %c0_43, %c0_44], %169 {strides = array<i32>} : memref<1x16x16x4xf32, #tpu.memory_space<vmem>>, vector<1x16x16x4xf32>,
    return
  }
  func.func @transform_0(%arg0: i32) -> (i32, i32, i32, i32) {
    %c0_i32 = arith.constant 0 : i32
    %c0_i32_0 = arith.constant 0 : i32
    %c0_i32_1 = arith.constant 0 : i32
    %c0_i32_2 = arith.constant 0 : i32
    return %arg0, %c0_i32, %c0_i32_0, %c0_i32_1 : i32, i32, i32, i32
  }
  func.func @transform_1(%arg0: i32) -> (i32, i32, i32) {
    %c0_i32 = arith.constant 0 : i32
    %c0_i32_0 = arith.constant 0 : i32
    %c0_i32_1 = arith.constant 0 : i32
    %c0_i32_2 = arith.constant 0 : i32
    return %c0_i32, %c0_i32_0, %c0_i32_1 : i32, i32, i32
  }
  func.func @transform_2(%arg0: i32) -> (i32, i32, i32) {
    %c0_i32 = arith.constant 0 : i32
    %c0_i32_0 = arith.constant 0 : i32
    %c0_i32_1 = arith.constant 0 : i32
    %c0_i32_2 = arith.constant 0 : i32
    return %c0_i32, %c0_i32_0, %c0_i32_1 : i32, i32, i32
  }
  func.func @transform_3(%arg0: i32) -> (i32, i32, i32, i32) {
    %c0_i32 = arith.constant 0 : i32
    %c0_i32_0 = arith.constant 0 : i32
    %c0_i32_1 = arith.constant 0 : i32
    %c0_i32_2 = arith.constant 0 : i32
    return %arg0, %c0_i32, %c0_i32_0, %c0_i32_1 : i32, i32, i32, i32
  }
}

</mosaic_0001>

<llo_original>
// kernel: resnet_block_nchw.1
$region0: #{resnet_block_nchw.1}
  #allocation0 [shape = 'u32[]', space=smem, size = 0x4, offset = 0x4, fixed_abs, tag = 'smem constant byte address 0x4 - core index']
  #allocation1 [shape = 'u32[144,128]{1,0:T(1,128)}', space=vmem, size = 0x12000, scoped, tag = 'internal scratch']
  %s0 = inlined_call_operand.vmem [shape: f32[2,16,16,4], index: 0, kind: input, shape index: {}]
  %s1 = inlined_call_operand.vmem [shape: bf16[9,4,4], index: 1, kind: input, shape index: {}]
  %s2 = inlined_call_operand.vmem [shape: bf16[9,4,4], index: 2, kind: input, shape index: {}]
  %s3 = inlined_call_operand.vmem [shape: f32[2,16,16,4], index: 3, kind: output, shape index: {}]
  %s4 = sld [smem:[#allocation0]]
  $region45: #{resnet_block_nchw.1} parent=0
    _
  %s6 = ssub.s32 1, %s4
  %s7 = scalar_select 0, %s6, %s4
  loop: start=0, step=1, limit=4
  $region2: #{resnet_block_nchw.1} parent=0 // loop_pre_header
    _
  $region3: #{resnet_block_nchw.1} parent=0 // loop_header
    %s9 = sphi 0, %s13
    %p10 = scmp.ge.s32.totalorder %s9, 4
    %s19 = sphi 0, %s21
    %s22 = sphi 0, %s19
    %s23 = sphi 0, %s22
    %s39 = sphi 0, %s23
    %s43 = sphi 0, %s43
    %s45 = sphi 0, %s43
    %s46 = sphi 0, %s45
    %s60 = sphi 0, %s46
    %s64 = sphi 0, %s64
    %s66 = sphi 0, %s64
    %s67 = sphi 0, %s66
    %s81 = sphi 0, %s67
    %s87 = sphi 0, %s89
    %s90 = sphi 0, %s87
    %s91 = sphi 0, %s90
    %s107 = sphi 0, %s91
  $region4: #{resnet_block_nchw.1} parent=0 // loop_header_branch
    %12 = sbr.rel (%p10) target = $region8
  $region5: #{resnet_block_nchw.1} parent=0 // loop_body
    %s14 = ssub.s32 %s9, 1
    %s15 = ssub.s32 %s9, 2
    %s16 = sadd.s32 %s9, 1
    %s17 = ssub.s32 %s9, %s16
    %p18 = scmp.eq.s32.totalorder %s17, 0
    %s20 = sadd.s32 %s19, 1
    %s21 = scalar_select %p18, %s19, %s20
    %p24 = pneg %p18
    %p25 = scmp.eq.s32.totalorder %s9, 1
    %p26 = por %p24, %p25
    %p27 = scmp.ne.s32.totalorder %s19, %s22
    %p28 = scmp.eq.s32.totalorder %s9, 0
    %p29 = por %p27, %p28
    %p30 = scmp.ne.s32.totalorder %s19, %s22
    %p31 = scmp.eq.s32.totalorder %s14, 1
    %p32 = por %p30, %p31
    %p33 = scmp.ne.s32.totalorder %s22, %s23
    %p34 = scmp.eq.s32.totalorder %s14, 0
    %p35 = por %p33, %p34
    %p36 = scmp.ne.s32.totalorder %s22, %s23
    %p37 = scmp.eq.s32.totalorder %s15, 1
    %p38 = por %p36, %p37
    %p40 = scmp.ne.s32.totalorder %s23, %s39
    %p41 = scmp.eq.s32.totalorder %s15, 0
    %p42 = por %p40, %p41
    %s44 = sadd.s32 %s43, 1
    %p47 = scmp.eq.s32.totalorder %s9, 1
    %p48 = scmp.ne.s32.totalorder %s43, %s45
    %p49 = scmp.eq.s32.totalorder %s9, 0
    %p50 = por %p48, %p49
    %p51 = scmp.ne.s32.totalorder %s43, %s45
    %p52 = scmp.eq.s32.totalorder %s14, 1
    %p53 = por %p51, %p52
    %p54 = scmp.ne.s32.totalorder %s45, %s46
    %p55 = scmp.eq.s32.totalorder %s14, 0
    %p56 = por %p54, %p55
    %p57 = scmp.ne.s32.totalorder %s45, %s46
    %p58 = scmp.eq.s32.totalorder %s15, 1
    %p59 = por %p57, %p58
    %p61 = scmp.ne.s32.totalorder %s46, %s60
    %p62 = scmp.eq.s32.totalorder %s15, 0
    %p63 = por %p61, %p62
    %s65 = sadd.s32 %s64, 1
    %p68 = scmp.eq.s32.totalorder %s9, 1
    %p69 = scmp.ne.s32.totalorder %s64, %s66
    %p70 = scmp.eq.s32.totalorder %s9, 0
    %p71 = por %p69, %p70
    %p72 = scmp.ne.s32.totalorder %s64, %s66
    %p73 = scmp.eq.s32.totalorder %s14, 1
    %p74 = por %p72, %p73
    %p75 = scmp.ne.s32.totalorder %s66, %s67
    %p76 = scmp.eq.s32.totalorder %s14, 0
    %p77 = por %p75, %p76
    %p78 = scmp.ne.s32.totalorder %s66, %s67
    %p79 = scmp.eq.s32.totalorder %s15, 1
    %p80 = por %p78, %p79
    %p82 = scmp.ne.s32.totalorder %s67, %s81
    %p83 = scmp.eq.s32.totalorder %s15, 0
    %p84 = por %p82, %p83
    %s85 = ssub.s32 %s9, %s16
    %p86 = scmp.eq.s32.totalorder %s85, 0
    %s88 = sadd.s32 %s87, 1
    %s89 = scalar_select %p86, %s87, %s88
    %p92 = pneg %p86
    %p93 = scmp.eq.s32.totalorder %s9, 1
    %p94 = por %p92, %p93
    %p95 = scmp.ne.s32.totalorder %s87, %s90
    %p96 = scmp.eq.s32.totalorder %s9, 0
    %p97 = por %p95, %p96
    %p98 = scmp.ne.s32.totalorder %s87, %s90
    %p99 = scmp.eq.s32.totalorder %s14, 1
    %p100 = por %p98, %p99
    %p101 = scmp.ne.s32.totalorder %s90, %s91
    %p102 = scmp.eq.s32.totalorder %s14, 0
    %p103 = por %p101, %p102
    %p104 = scmp.ne.s32.totalorder %s90, %s91
    %p105 = scmp.eq.s32.totalorder %s15, 1
    %p106 = por %p104, %p105
    %p108 = scmp.ne.s32.totalorder %s91, %s107
    %p109 = scmp.eq.s32.totalorder %s15, 0
    %p110 = por %p108, %p109
    %p111 = scmp.le.s32.totalorder 1, %s9
    %p112 = scmp.lt.s32.totalorder %s9, 3
    %p113 = pnand %p111, %p112
    %p114 = pneg %p113
    // Predicated region
    $region9: #{resnet_block_nchw.1} parent=5 // pred_check
      _
    $region10: #{resnet_block_nchw.1} parent=5 // pred_check_branch
      %116 = sbr.rel (%p113) target = $region12
    $region11: #{resnet_block_nchw.1} parent=5 // pred_region
      %s117 = ssub.s32 %s9, 1
      // Predicated region
      $region13: #{resnet_block_nchw.1} parent=11 // pred_check
        %p118 = pneg %p56
      $region14: #{resnet_block_nchw.1} parent=11 // pred_check_branch
        %120 = sbr.rel (%p118) target = $region16
      $region15: #{resnet_block_nchw.1} parent=11 // pred_region
        _
      $region16: #{resnet_block_nchw.1} parent=11 // pred_fallthru
        _
      // Predicated region
      $region17: #{resnet_block_nchw.1} parent=11 // pred_check
        %p121 = pneg %p77
      $region18: #{resnet_block_nchw.1} parent=11 // pred_check_branch
        %123 = sbr.rel (%p121) target = $region20
      $region19: #{resnet_block_nchw.1} parent=11 // pred_region
        _
      $region20: #{resnet_block_nchw.1} parent=11 // pred_fallthru
        _
    $region12: #{resnet_block_nchw.1} parent=5 // pred_fallthru
      _
    %p124 = scmp.lt.s32.totalorder %s9, 2
    // Predicated region
    $region21: #{resnet_block_nchw.1} parent=5 // pred_check
      %p125 = pneg %p124
    $region22: #{resnet_block_nchw.1} parent=5 // pred_check_branch
      %127 = sbr.rel (%p125) target = $region24
    $region23: #{resnet_block_nchw.1} parent=5 // pred_region
      // Predicated region
      $region25: #{resnet_block_nchw.1} parent=23 // pred_check
        %p128 = pneg %p29
      $region26: #{resnet_block_nchw.1} parent=23 // pred_check_branch
        %130 = sbr.rel (%p128) target = $region28
      $region27: #{resnet_block_nchw.1} parent=23 // pred_region
        %p131 = scmp.lt.s32.totalorder %s9, 1
        %s132 = scalar_select %p131, %s9, 1
        %s133 = smul.addr %s132, 32
        %s134 = smul.addr %s133, 8
        %s135 = scalar_lea.vmem %s0, %s134
      $region28: #{resnet_block_nchw.1} parent=23 // pred_fallthru
        _
    $region24: #{resnet_block_nchw.1} parent=5 // pred_fallthru
      _
    %p136 = scmp.le.s32.totalorder 1, %s9
    %p137 = scmp.lt.s32.totalorder %s9, 3
    %p138 = pnand %p136, %p137
    %p139 = pneg %p138
    // Predicated region
    $region29: #{resnet_block_nchw.1} parent=5 // pred_check
      _
    $region30: #{resnet_block_nchw.1} parent=5 // pred_check_branch
      %141 = sbr.rel (%p138) target = $region32
    $region31: #{resnet_block_nchw.1} parent=5 // pred_region
      %s142 = ssub.s32 %s9, 1
      %p143 = scmp.lt.s32.totalorder %s14, 1
      %s144 = scalar_select %p143, %s14, 1
      %s145 = smul.addr %s144, 32
      %s146 = smul.addr %s145, 8
      %s147 = scalar_lea.vmem %s0, %s146
      %p148 = pneg %p35
      %p149 = pneg %p32
      %p150 = pneg %p56
      %p151 = pneg %p53
      %p152 = pneg %p77
      %p153 = pneg %p74
      %p154 = pneg %p103
      %p155 = pneg %p100
      %p156 = scmp.lt.s32.totalorder %s14, 1
      %s157 = scalar_select %p156, %s14, 1
      %s158 = smul.addr %s157, 32
      %s159 = smul.addr %s158, 8
      %s160 = scalar_lea.vmem %s3, %s159
      %p161 = scmp.lt.s32.totalorder %s14, 1
      %s162 = scalar_select %p161, %s14, 1
      %s163 = smul.addr %s162, 32
      %s164 = smul.addr %s163, 8
      %s165 = scalar_lea.vmem %s0, %s164
      %p166 = scmp.lt.s32.totalorder %s14, 1
      %s167 = scalar_select %p166, %s14, 1
      %s168 = smul.addr %s167, 32
      %s169 = smul.addr %s168, 8
      %s170 = scalar_lea.vmem %s3, %s169
      %v172 = vld [vmem:[%s165] sm:$0xff]
      %v173 = vld [vmem:[%s165 + $0x8] sm:$0xff]
      %v174 = vld [vmem:[%s165 + $0x10] sm:$0xff]
      %v175 = vld [vmem:[%s165 + $0x18] sm:$0xff]
      %v176 = vld [vmem:[%s165 + $0x20] sm:$0xff]
      %v177 = vld [vmem:[%s165 + $0x28] sm:$0xff]
      %v178 = vld [vmem:[%s165 + $0x30] sm:$0xff]
      %v179 = vld [vmem:[%s165 + $0x38] sm:$0xff]
      %v180 = vld [vmem:[%s165 + $0x40] sm:$0xff]
      %v181 = vld [vmem:[%s165 + $0x48] sm:$0xff]
      %v182 = vld [vmem:[%s165 + $0x50] sm:$0xff]
      %v183 = vld [vmem:[%s165 + $0x58] sm:$0xff]
      %v184 = vld [vmem:[%s165 + $0x60] sm:$0xff]
      %v185 = vld [vmem:[%s165 + $0x68] sm:$0xff]
      %v186 = vld [vmem:[%s165 + $0x70] sm:$0xff]
      %v187 = vld [vmem:[%s165 + $0x78] sm:$0xff]
      %v188 = vld [vmem:[%s165 + $0x80] sm:$0xff]
      %v189 = vld [vmem:[%s165 + $0x88] sm:$0xff]
      %v190 = vld [vmem:[%s165 + $0x90] sm:$0xff]
      %v191 = vld [vmem:[%s165 + $0x98] sm:$0xff]
      %v192 = vld [vmem:[%s165 + $0xa0] sm:$0xff]
      %v193 = vld [vmem:[%s165 + $0xa8] sm:$0xff]
      %v194 = vld [vmem:[%s165 + $0xb0] sm:$0xff]
      %v195 = vld [vmem:[%s165 + $0xb8] sm:$0xff]
      %v196 = vld [vmem:[%s165 + $0xc0] sm:$0xff]
      %v197 = vld [vmem:[%s165 + $0xc8] sm:$0xff]
      %v198 = vld [vmem:[%s165 + $0xd0] sm:$0xff]
      %v199 = vld [vmem:[%s165 + $0xd8] sm:$0xff]
      %v200 = vld [vmem:[%s165 + $0xe0] sm:$0xff]
      %v201 = vld [vmem:[%s165 + $0xe8] sm:$0xff]
      %v202 = vld [vmem:[%s165 + $0xf0] sm:$0xff]
      %v203 = vld [vmem:[%s165 + $0xf8] sm:$0xff]
      %v204 = vld [vmem:[%s1] sm:$0x3]
      %v205 = vld [vmem:[%s1 + $0x2] sm:$0x3]
      %v206 = vld [vmem:[%s1 + $0x4] sm:$0x3]
      %v207 = vld [vmem:[%s1 + $0x6] sm:$0x3]
      %v208 = vld [vmem:[%s1 + $0x8] sm:$0x3]
      %v209 = vld [vmem:[%s1 + $0xa] sm:$0x3]
      %v210 = vld [vmem:[%s1 + $0xc] sm:$0x3]
      %v211 = vld [vmem:[%s1 + $0xe] sm:$0x3]
      %v212 = vld [vmem:[%s1 + $0x10] sm:$0x3]
      %v213 = vpack.c.bf16 %v173, %v172
      %v214 = vpack.c.bf16 %v175, %v174
      %v215 = vpack.c.bf16 %v177, %v176
      %v216 = vpack.c.bf16 %v179, %v178
      %v217 = vpack.c.bf16 %v181, %v180
      %v218 = vpack.c.bf16 %v183, %v182
      %v219 = vpack.c.bf16 %v185, %v184
      %v220 = vpack.c.bf16 %v187, %v186
      %v221 = vpack.c.bf16 %v189, %v188
      %v222 = vpack.c.bf16 %v191, %v190
      %v223 = vpack.c.bf16 %v193, %v192
      %v224 = vpack.c.bf16 %v195, %v194
      %v225 = vpack.c.bf16 %v197, %v196
      %v226 = vpack.c.bf16 %v199, %v198
      %v227 = vpack.c.bf16 %v201, %v200
      %v228 = vpack.c.bf16 %v203, %v202
      %v230 = vshrl.u32 %v214, 16
      %v233 = vshrl.u32 %v213, 16
      %v236 = vshrl.u32 %v215, 16
      %v239 = vshrl.u32 %v216, 16
      %v242 = vshrl.u32 %v217, 16
      %v245 = vshrl.u32 %v218, 16
      %v248 = vshrl.u32 %v219, 16
      %v251 = vshrl.u32 %v220, 16
      %v254 = vshrl.u32 %v221, 16
      %v257 = vshrl.u32 %v222, 16
      %v260 = vshrl.u32 %v223, 16
      %v263 = vshrl.u32 %v224, 16
      %v266 = vshrl.u32 %v225, 16
      %v269 = vshrl.u32 %v226, 16
      %v272 = vshrl.u32 %v227, 16
      %v275 = vshrl.u32 %v228, 16
      %v293 = vrot.slane %v230, 7
      %v294 = vshll.u32 %v214, 16
      %v296 = vor.u32 %v293, %v294
      %v297 = vrot.slane %v233, 7
      %v298 = vshll.u32 %v213, 16
      %v300 = vor.u32 %v297, %v298
      %v301 = vrot.slane %v236, 7
      %v302 = vshll.u32 %v215, 16
      %v304 = vor.u32 %v301, %v302
      %v305 = vrot.slane %v239, 7
      %v306 = vshll.u32 %v216, 16
      %v308 = vor.u32 %v305, %v306
      %v309 = vrot.slane %v242, 7
      %v310 = vshll.u32 %v217, 16
      %v312 = vor.u32 %v309, %v310
      %v313 = vrot.slane %v245, 7
      %v314 = vshll.u32 %v218, 16
      %v316 = vor.u32 %v313, %v314
      %v317 = vrot.slane %v248, 7
      %v318 = vshll.u32 %v219, 16
      %v320 = vor.u32 %v317, %v318
      %v321 = vrot.slane %v251, 7
      %v322 = vshll.u32 %v220, 16
      %v324 = vor.u32 %v321, %v322
      %v325 = vrot.slane %v254, 7
      %v326 = vshll.u32 %v221, 16
      %v328 = vor.u32 %v325, %v326
      %v329 = vrot.slane %v257, 7
      %v330 = vshll.u32 %v222, 16
      %v332 = vor.u32 %v329, %v330
      %v333 = vrot.slane %v260, 7
      %v334 = vshll.u32 %v223, 16
      %v336 = vor.u32 %v333, %v334
      %v337 = vrot.slane %v263, 7
      %v338 = vshll.u32 %v224, 16
      %v340 = vor.u32 %v337, %v338
      %v341 = vrot.slane %v266, 7
      %v342 = vshll.u32 %v225, 16
      %v344 = vor.u32 %v341, %v342
      %v345 = vrot.slane %v269, 7
      %v346 = vshll.u32 %v226, 16
      %v348 = vor.u32 %v345, %v346
      %v349 = vrot.slane %v272, 7
      %v350 = vshll.u32 %v227, 16
      %v352 = vor.u32 %v349, %v350
      %v353 = vrot.slane %v275, 7
      %v354 = vshll.u32 %v228, 16
      %v356 = vor.u32 %v353, %v354
      %vm373 = vcmask 1040384
      %vm374 = vsmask.f32 256
      %vm375 = vmand %vm373, %vm374
      %v376 = vsel %vm375, %v230, %v296
      %v377 = vsel %vm375, %v233, %v300
      %v378 = vsel %vm375, %v236, %v304
      %v379 = vsel %vm375, %v239, %v308
      %v380 = vsel %vm375, %v242, %v312
      %v381 = vsel %vm375, %v245, %v316
      %v382 = vsel %vm375, %v248, %v320
      %v383 = vsel %vm375, %v251, %v324
      %v384 = vsel %vm375, %v254, %v328
      %v385 = vsel %vm375, %v257, %v332
      %v386 = vsel %vm375, %v260, %v336
      %v387 = vsel %vm375, %v263, %v340
      %v388 = vsel %vm375, %v266, %v344
      %v389 = vsel %vm375, %v269, %v348
      %v390 = vsel %vm375, %v272, %v352
      %v391 = vsel %vm375, %v275, %v356
      %v392 = vrot.slane %v294, 1
      %v393 = vor.u32 %v230, %v392
      %v394 = vrot.slane %v298, 1
      %v395 = vor.u32 %v233, %v394
      %v396 = vrot.slane %v302, 1
      %v397 = vor.u32 %v236, %v396
      %v398 = vrot.slane %v306, 1
      %v399 = vor.u32 %v239, %v398
      %v400 = vrot.slane %v310, 1
      %v401 = vor.u32 %v242, %v400
      %v402 = vrot.slane %v314, 1
      %v403 = vor.u32 %v245, %v402
      %v404 = vrot.slane %v318, 1
      %v405 = vor.u32 %v248, %v404
      %v406 = vrot.slane %v322, 1
      %v407 = vor.u32 %v251, %v406
      %v408 = vrot.slane %v326, 1
      %v409 = vor.u32 %v254, %v408
      %v410 = vrot.slane %v330, 1
      %v411 = vor.u32 %v257, %v410
      %v412 = vrot.slane %v334, 1
      %v413 = vor.u32 %v260, %v412
      %v414 = vrot.slane %v338, 1
      %v415 = vor.u32 %v263, %v414
      %v416 = vrot.slane %v342, 1
      %v417 = vor.u32 %v266, %v416
      %v418 = vrot.slane %v346, 1
      %v419 = vor.u32 %v269, %v418
      %v420 = vrot.slane %v350, 1
      %v421 = vor.u32 %v272, %v420
      %v422 = vrot.slane %v354, 1
      %v423 = vor.u32 %v275, %v422
      %vm456 = vcmask 1047552
      %vm457 = vsmask.f32 7424
      %vm458 = vmand %vm456, %vm457
      %v459 = vsel %vm458, %v393, %v294
      %v460 = vsel %vm458, %v395, %v298
      %v461 = vsel %vm458, %v397, %v302
      %v462 = vsel %vm458, %v399, %v306
      %v463 = vsel %vm458, %v401, %v310
      %v464 = vsel %vm458, %v403, %v314
      %v465 = vsel %vm458, %v405, %v318
      %v466 = vsel %vm458, %v407, %v322
      %v467 = vsel %vm458, %v409, %v326
      %v468 = vsel %vm458, %v411, %v330
      %v469 = vsel %vm458, %v413, %v334
      %v470 = vsel %vm458, %v415, %v338
      %v471 = vsel %vm458, %v417, %v342
      %v472 = vsel %vm458, %v419, %v346
      %v473 = vsel %vm458, %v421, %v350
      %v474 = vsel %vm458, %v423, %v354
      %vm475 = vcmask 31744
      %v476 = vsel %vm475, %v214, 0
      %v478 = vsel %vm475, %v213, 0
      %v480 = vsel %vm475, %v215, 0
      %v482 = vsel %vm475, %v216, 0
      %v484 = vsel %vm475, %v217, 0
      %v486 = vsel %vm475, %v218, 0
      %v488 = vsel %vm475, %v219, 0
      %v490 = vsel %vm475, %v220, 0
      %v492 = vsel %vm475, %v221, 0
      %v494 = vsel %vm475, %v222, 0
      %v496 = vsel %vm475, %v223, 0
      %v498 = vsel %vm475, %v224, 0
      %v500 = vsel %vm475, %v225, 0
      %v502 = vsel %vm475, %v226, 0
      %v504 = vsel %vm475, %v227, 0
      %vm506 = vcmask 1041408
      %v508 = vsel %vm506, %v205, 0
      %510 = vmatprep.subr.bf16.mxu0 0
      %511 = vmatpush1.bf16.msra.mxu0 %v508
      %512 = vmatprep.subr.bf16.mxu0 0
      %513 = vmatpush1.bf16.msra.mxu0 0
      %514 = vmatprep.subr.bf16.mxu0 0
      %515 = vmatpush1.bf16.msra.mxu0 0
      %516 = vmatprep.subr.bf16.mxu0 0
      %517 = vmatpush1.bf16.msra.mxu0 0
      %518 = vmatprep.subr.bf16.mxu0 0
      %519 = vmatpush1.bf16.msra.mxu0 0
      %520 = vmatprep.subr.bf16.mxu0 0
      %521 = vmatpush1.bf16.msra.mxu0 0
      %522 = vmatprep.subr.bf16.mxu0 0
      %523 = vmatpush1.bf16.msra.mxu0 0
      %524 = vmatprep.subr.bf16.mxu0 0
      %525 = vmatpush1.bf16.msra.mxu0 0
      %526 = vmatprep.subr.bf16.mxu0 0
      %527 = vmatpush1.bf16.msra.mxu0 0
      %528 = vmatprep.subr.bf16.mxu0 0
      %529 = vmatpush1.bf16.msra.mxu0 0
      %530 = vmatprep.subr.bf16.mxu0 0
      %531 = vmatpush1.bf16.msra.mxu0 0
      %532 = vmatprep.subr.bf16.mxu0 0
      %533 = vmatpush1.bf16.msra.mxu0 0
      %534 = vmatprep.subr.bf16.mxu0 0
      %535 = vmatpush1.bf16.msra.mxu0 0
      %536 = vmatprep.subr.bf16.mxu0 0
      %537 = vmatpush1.bf16.msra.mxu0 0
      %538 = vmatprep.subr.bf16.mxu0 0
      %539 = vmatpush1.bf16.msra.mxu0 0
      %540 = vmatprep.subr.bf16.mxu0 0
      %541 = vmatpush1.bf16.msra.mxu0 0
      %542 = vmatprep.mubr.bf16.mxu0 0
      %543 = vmatmul.mubr.bf16.gmra.mrb[0].mxu0 %v476
      %v544 = vpop.f32.mrb[0].mxu0
      %v545 = vadd.f32 0.0, %v544
      %v546 = vpop.f32.mrb[0].mxu0
      %v547 = vpop.f32.mrb[0].mxu0
      %v548 = vadd.f32 0.0, %v547
      %v549 = vpop.f32.mrb[0].mxu0
      %550 = vmatprep.mubr.bf16.mxu0 0
      %551 = vmatmul.mubr.bf16.gmra.mrb[0].mxu0 %v478
      %v552 = vpop.f32.mrb[0].mxu0
      %v553 = vadd.f32 0.0, %v552
      %v554 = vpop.f32.mrb[0].mxu0
      %v555 = vpop.f32.mrb[0].mxu0
      %v556 = vadd.f32 0.0, %v555
      %v557 = vpop.f32.mrb[0].mxu0
      %558 = vmatprep.mubr.bf16.mxu0 0
      %559 = vmatmul.mubr.bf16.gmra.mrb[0].mxu0 %v476
      %v560 = vpop.f32.mrb[0].mxu0
      %v561 = vadd.f32 0.0, %v560
      %v562 = vpop.f32.mrb[0].mxu0
      %v563 = vpop.f32.mrb[0].mxu0
      %v564 = vadd.f32 0.0, %v563
      %v565 = vpop.f32.mrb[0].mxu0
      %566 = vmatprep.mubr.bf16.mxu0 0
      %567 = vmatmul.mubr.bf16.gmra.mrb[0].mxu0 %v480
      %v568 = vpop.f32.mrb[0].mxu0
      %v569 = vadd.f32 0.0, %v568
      %v570 = vpop.f32.mrb[0].mxu0
      %v571 = vpop.f32.mrb[0].mxu0
      %v572 = vadd.f32 0.0, %v571
      %v573 = vpop.f32.mrb[0].mxu0
      %574 = vmatprep.mubr.bf16.mxu0 0
      %575 = vmatmul.mubr.bf16.gmra.mrb[0].mxu0 %v482
      %v576 = vpop.f32.mrb[0].mxu0
      %v577 = vadd.f32 0.0, %v576
      %v578 = vpop.f32.mrb[0].mxu0
      %v579 = vpop.f32.mrb[0].mxu0
      %v580 = vadd.f32 0.0, %v579
      %v581 = vpop.f32.mrb[0].mxu0
      %582 = vmatprep.mubr.bf16.mxu0 0
      %583 = vmatmul.mubr.bf16.gmra.mrb[0].mxu0 %v484
      %v584 = vpop.f32.mrb[0].mxu0
      %v585 = vadd.f32 0.0, %v584
      %v586 = vpop.f32.mrb[0].mxu0
      %v587 = vpop.f32.mrb[0].mxu0
      %v588 = vadd.f32 0.0, %v587
      %v589 = vpop.f32.mrb[0].mxu0
      %590 = vmatprep.mubr.bf16.mxu0 0
      %591 = vmatmul.mubr.bf16.gmra.mrb[0].mxu0 %v486
      %v592 = vpop.f32.mrb[0].mxu0
      %v593 = vadd.f32 0.0, %v592
      %v594 = vpop.f32.mrb[0].mxu0
      %v595 = vpop.f32.mrb[0].mxu0
      %v596 = vadd.f32 0.0, %v595
      %v597 = vpop.f32.mrb[0].mxu0
      %598 = vmatprep.mubr.bf16.mxu0 0
      %599 = vmatmul.mubr.bf16.gmra.mrb[0].mxu0 %v488
      %v600 = vpop.f32.mrb[0].mxu0
      %v601 = vadd.f32 0.0, %v600
      %v602 = vpop.f32.mrb[0].mxu0
      %v603 = vpop.f32.mrb[0].mxu0
      %v604 = vadd.f32 0.0, %v603
      %v605 = vpop.f32.mrb[0].mxu0
      %606 = vmatprep.mubr.bf16.mxu0 0
      %607 = vmatmul.mubr.bf16.gmra.mrb[0].mxu0 %v490
      %v608 = vpop.f32.mrb[0].mxu0
      %v609 = vadd.f32 0.0, %v608
      %v610 = vpop.f32.mrb[0].mxu0
      %v611 = vpop.f32.mrb[0].mxu0
      %v612 = vadd.f32 0.0, %v611
      %v613 = vpop.f32.mrb[0].mxu0
      %614 = vmatprep.mubr.bf16.mxu0 0
      %615 = vmatmul.mubr.bf16.gmra.mrb[0].mxu0 %v492
      %v616 = vpop.f32.mrb[0].mxu0
      %v617 = vadd.f32 0.0, %v616
      %v618 = vpop.f32.mrb[0].mxu0
      %v619 = vpop.f32.mrb[0].mxu0
      %v620 = vadd.f32 0.0, %v619
      %v621 = vpop.f32.mrb[0].mxu0
      %622 = vmatprep.mubr.bf16.mxu0 0
      %623 = vmatmul.mubr.bf16.gmra.mrb[0].mxu0 %v494
      %v624 = vpop.f32.mrb[0].mxu0
      %v625 = vadd.f32 0.0, %v624
      %v626 = vpop.f32.mrb[0].mxu0
      %v627 = vpop.f32.mrb[0].mxu0
      %v628 = vadd.f32 0.0, %v627
      %v629 = vpop.f32.mrb[0].mxu0
      %630 = vmatprep.mubr.bf16.mxu0 0
      %631 = vmatmul.mubr.bf16.gmra.mrb[0].mxu0 %v496
      %v632 = vpop.f32.mrb[0].mxu0
      %v633 = vadd.f32 0.0, %v632
      %v634 = vpop.f32.mrb[0].mxu0
      %v635 = vpop.f32.mrb[0].mxu0
      %v636 = vadd.f32 0.0, %v635
      %v637 = vpop.f32.mrb[0].mxu0
      %638 = vmatprep.mubr.bf16.mxu0 0
      %639 = vmatmul.mubr.bf16.gmra.mrb[0].mxu0 %v498
      %v640 = vpop.f32.mrb[0].mxu0
      %v641 = vadd.f32 0.0, %v640
      %v642 = vpop.f32.mrb[0].mxu0
      %v643 = vpop.f32.mrb[0].mxu0
      %v644 = vadd.f32 0.0, %v643
      %v645 = vpop.f32.mrb[0].mxu0
      %646 = vmatprep.mubr.bf16.mxu0 0
      %647 = vmatmul.mubr.bf16.gmra.mrb[0].mxu0 %v500
      %v648 = vpop.f32.mrb[0].mxu0
      %v649 = vadd.f32 0.0, %v648
      %v650 = vpop.f32.mrb[0].mxu0
      %v651 = vpop.f32.mrb[0].mxu0
      %v652 = vadd.f32 0.0, %v651
      %v653 = vpop.f32.mrb[0].mxu0
      %654 = vmatprep.mubr.bf16.mxu0 0
      %655 = vmatmul.mubr.bf16.gmra.mrb[0].mxu0 %v502
      %v656 = vpop.f32.mrb[0].mxu0
      %v657 = vadd.f32 0.0, %v656
      %v658 = vpop.f32.mrb[0].mxu0
      %v659 = vpop.f32.mrb[0].mxu0
      %v660 = vadd.f32 0.0, %v659
      %v661 = vpop.f32.mrb[0].mxu0
      %662 = vmatprep.mubr.bf16.mxu0 0
      %663 = vmatmul.mubr.bf16.gmra.mrb[0].mxu0 %v504
      %v664 = vpop.f32.mrb[0].mxu0
      %v665 = vadd.f32 0.0, %v664
      %v666 = vpop.f32.mrb[0].mxu0
      %v667 = vpop.f32.mrb[0].mxu0
      %v668 = vadd.f32 0.0, %v667
      %v669 = vpop.f32.mrb[0].mxu0
      %670 = vdwg.mxu0
      %v672 = vsel %vm475, %v376, 0
      %v675 = vsel %vm475, %v377, 0
      %v678 = vsel %vm475, %v378, 0
      %v681 = vsel %vm475, %v379, 0
      %v684 = vsel %vm475, %v380, 0
      %v687 = vsel %vm475, %v381, 0
      %v690 = vsel %vm475, %v382, 0
      %v693 = vsel %vm475, %v383, 0
      %v696 = vsel %vm475, %v384, 0
      %v699 = vsel %vm475, %v385, 0
      %v702 = vsel %vm475, %v386, 0
      %v705 = vsel %vm475, %v387, 0
      %v708 = vsel %vm475, %v388, 0
      %v711 = vsel %vm475, %v389, 0
      %v714 = vsel %vm475, %v390, 0
      %v717 = vsel %vm506, %v204, 0
      %719 = vmatprep.subr.bf16.mxu0 0
      %720 = vmatpush1.bf16.msra.mxu0 %v717
      %721 = vmatprep.subr.bf16.mxu0 0
      %722 = vmatpush1.bf16.msra.mxu0 0
      %723 = vmatprep.subr.bf16.mxu0 0
      %724 = vmatpush1.bf16.msra.mxu0 0
      %725 = vmatprep.subr.bf16.mxu0 0
      %726 = vmatpush1.bf16.msra.mxu0 0
      %727 = vmatprep.subr.bf16.mxu0 0
      %728 = vmatpush1.bf16.msra.mxu0 0
      %729 = vmatprep.subr.bf16.mxu0 0
      %730 = vmatpush1.bf16.msra.mxu0 0
      %731 = vmatprep.subr.bf16.mxu0 0
      %732 = vmatpush1.bf16.msra.mxu0 0
      %733 = vmatprep.subr.bf16.mxu0 0
      %734 = vmatpush1.bf16.msra.mxu0 0
      %735 = vmatprep.subr.bf16.mxu0 0
      %736 = vmatpush1.bf16.msra.mxu0 0
      %737 = vmatprep.subr.bf16.mxu0 0
      %738 = vmatpush1.bf16.msra.mxu0 0
      %739 = vmatprep.subr.bf16.mxu0 0
      %740 = vmatpush1.bf16.msra.mxu0 0
      %741 = vmatprep.subr.bf16.mxu0 0
      %742 = vmatpush1.bf16.msra.mxu0 0
      %743 = vmatprep.subr.bf16.mxu0 0
      %744 = vmatpush1.bf16.msra.mxu0 0
      %745 = vmatprep.subr.bf16.mxu0 0
      %746 = vmatpush1.bf16.msra.mxu0 0
      %747 = vmatprep.subr.bf16.mxu0 0
      %748 = vmatpush1.bf16.msra.mxu0 0
      %749 = vmatprep.subr.bf16.mxu0 0
      %750 = vmatpush1.bf16.msra.mxu0 0
      %751 = vmatprep.mubr.bf16.mxu0 0
      %752 = vmatmul.mubr.bf16.gmra.mrb[0].mxu0 %v672
      %v753 = vpop.f32.mrb[0].mxu0
      %v754 = vadd.f32 %v545, %v753
      %v755 = vpop.f32.mrb[0].mxu0
      %v756 = vpop.f32.mrb[0].mxu0
      %v757 = vadd.f32 %v548, %v756
      %v758 = vpop.f32.mrb[0].mxu0
      %759 = vmatprep.mubr.bf16.mxu0 0
      %760 = vmatmul.mubr.bf16.gmra.mrb[0].mxu0 %v675
      %v761 = vpop.f32.mrb[0].mxu0
      %v762 = vadd.f32 %v553, %v761
      %v763 = vpop.f32.mrb[0].mxu0
      %v764 = vpop.f32.mrb[0].mxu0
      %v765 = vadd.f32 %v556, %v764
      %v766 = vpop.f32.mrb[0].mxu0
      %767 = vmatprep.mubr.bf16.mxu0 0
      %768 = vmatmul.mubr.bf16.gmra.mrb[0].mxu0 %v672
      %v769 = vpop.f32.mrb[0].mxu0
      %v770 = vadd.f32 %v561, %v769
      %v771 = vpop.f32.mrb[0].mxu0
      %v772 = vpop.f32.mrb[0].mxu0
      %v773 = vadd.f32 %v564, %v772
      %v774 = vpop.f32.mrb[0].mxu0
      %775 = vmatprep.mubr.bf16.mxu0 0
      %776 = vmatmul.mubr.bf16.gmra.mrb[0].mxu0 %v678
      %v777 = vpop.f32.mrb[0].mxu0
      %v778 = vadd.f32 %v569, %v777
      %v779 = vpop.f32.mrb[0].mxu0
      %v780 = vpop.f32.mrb[0].mxu0
      %v781 = vadd.f32 %v572, %v780
      %v782 = vpop.f32.mrb[0].mxu0
      %783 = vmatprep.mubr.bf16.mxu0 0
      %784 = vmatmul.mubr.bf16.gmra.mrb[0].mxu0 %v681
      %v785 = vpop.f32.mrb[0].mxu0
      %v786 = vadd.f32 %v577, %v785
      %v787 = vpop.f32.mrb[0].mxu0
      %v788 = vpop.f32.mrb[0].mxu0
      %v789 = vadd.f32 %v580, %v788
      %v790 = vpop.f32.mrb[0].mxu0
      %791 = vmatprep.mubr.bf16.mxu0 0
      %792 = vmatmul.mubr.bf16.gmra.mrb[0].mxu0 %v684
      %v793 = vpop.f32.mrb[0].mxu0
      %v794 = vadd.f32 %v585, %v793
      %v795 = vpop.f32.mrb[0].mxu0
      %v796 = vpop.f32.mrb[0].mxu0
      %v797 = vadd.f32 %v588, %v796
      %v798 = vpop.f32.mrb[0].mxu0
      %799 = vmatprep.mubr.bf16.mxu0 0
      %800 = vmatmul.mubr.bf16.gmra.mrb[0].mxu0 %v687
      %v801 = vpop.f32.mrb[0].mxu0
      %v802 = vadd.f32 %v593, %v801
      %v803 = vpop.f32.mrb[0].mxu0
      %v804 = vpop.f32.mrb[0].mxu0
      %v805 = vadd.f32 %v596, %v804
      %v806 = vpop.f32.mrb[0].mxu0
      %807 = vmatprep.mubr.bf16.mxu0 0
      %808 = vmatmul.mubr.bf16.gmra.mrb[0].mxu0 %v690
      %v809 = vpop.f32.mrb[0].mxu0
      %v810 = vadd.f32 %v601, %v809
      %v811 = vpop.f32.mrb[0].mxu0
      %v812 = vpop.f32.mrb[0].mxu0
      %v813 = vadd.f32 %v604, %v812
      %v814 = vpop.f32.mrb[0].mxu0
      %815 = vmatprep.mubr.bf16.mxu0 0
      %816 = vmatmul.mubr.bf16.gmra.mrb[0].mxu0 %v693
      %v817 = vpop.f32.mrb[0].mxu0
      %v818 = vadd.f32 %v609, %v817
      %v819 = vpop.f32.mrb[0].mxu0
      %v820 = vpop.f32.mrb[0].mxu0
      %v821 = vadd.f32 %v612, %v820
      %v822 = vpop.f32.mrb[0].mxu0
      %823 = vmatprep.mubr.bf16.mxu0 0
      %824 = vmatmul.mubr.bf16.gmra.mrb[0].mxu0 %v696
      %v825 = vpop.f32.mrb[0].mxu0
      %v826 = vadd.f32 %v617, %v825
      %v827 = vpop.f32.mrb[0].mxu0
      %v828 = vpop.f32.mrb[0].mxu0
      %v829 = vadd.f32 %v620, %v828
      %v830 = vpop.f32.mrb[0].mxu0
      %831 = vmatprep.mubr.bf16.mxu0 0
      %832 = vmatmul.mubr.bf16.gmra.mrb[0].mxu0 %v699
      %v833 = vpop.f32.mrb[0].mxu0
      %v834 = vadd.f32 %v625, %v833
      %v835 = vpop.f32.mrb[0].mxu0
      %v836 = vpop.f32.mrb[0].mxu0
      %v837 = vadd.f32 %v628, %v836
      %v838 = vpop.f32.mrb[0].mxu0
      %839 = vmatprep.mubr.bf16.mxu0 0
      %840 = vmatmul.mubr.bf16.gmra.mrb[0].mxu0 %v702
      %v841 = vpop.f32.mrb[0].mxu0
      %v842 = vadd.f32 %v633, %v841
      %v843 = vpop.f32.mrb[0].mxu0
      %v844 = vpop.f32.mrb[0].mxu0
      %v845 = vadd.f32 %v636, %v844
      %v846 = vpop.f32.mrb[0].mxu0
      %847 = vmatprep.mubr.bf16.mxu0 0
      %848 = vmatmul.mubr.bf16.gmra.mrb[0].mxu0 %v705
      %v849 = vpop.f32.mrb[0].mxu0
      %v850 = vadd.f32 %v641, %v849
      %v851 = vpop.f32.mrb[0].mxu0
      %v852 = vpop.f32.mrb[0].mxu0
      %v853 = vadd.f32 %v644, %v852
      %v854 = vpop.f32.mrb[0].mxu0
      %855 = vmatprep.mubr.bf16.mxu0 0
      %856 = vmatmul.mubr.bf16.gmra.mrb[0].mxu0 %v708
      %v857 = vpop.f32.mrb[0].mxu0
      %v858 = vadd.f32 %v649, %v857
      %v859 = vpop.f32.mrb[0].mxu0
      %v860 = vpop.f32.mrb[0].mxu0
      %v861 = vadd.f32 %v652, %v860
      %v862 = vpop.f32.mrb[0].mxu0
      %863 = vmatprep.mubr.bf16.mxu0 0
      %864 = vmatmul.mubr.bf16.gmra.mrb[0].mxu0 %v711
      %v865 = vpop.f32.mrb[0].mxu0
      %v866 = vadd.f32 %v657, %v865
      %v867 = vpop.f32.mrb[0].mxu0
      %v868 = vpop.f32.mrb[0].mxu0
      %v869 = vadd.f32 %v660, %v868
      %v870 = vpop.f32.mrb[0].mxu0
      %871 = vmatprep.mubr.bf16.mxu0 0
      %872 = vmatmul.mubr.bf16.gmra.mrb[0].mxu0 %v714
      %v873 = vpop.f32.mrb[0].mxu0
      %v874 = vadd.f32 %v665, %v873
      %v875 = vpop.f32.mrb[0].mxu0
      %v876 = vpop.f32.mrb[0].mxu0
      %v877 = vadd.f32 %v668, %v876
      %v878 = vpop.f32.mrb[0].mxu0
      %879 = vdwg.mxu0
      %v881 = vsel %vm475, %v459, 0
      %v884 = vsel %vm475, %v460, 0
      %v887 = vsel %vm475, %v461, 0
      %v890 = vsel %vm475, %v462, 0
      %v893 = vsel %vm475, %v463, 0
      %v896 = vsel %vm475, %v464, 0
      %v899 = vsel %vm475, %v465, 0
      %v902 = vsel %vm475, %v466, 0
      %v905 = vsel %vm475, %v467, 0
      %v908 = vsel %vm475, %v468, 0
      %v911 = vsel %vm475, %v469, 0
      %v914 = vsel %vm475, %v470, 0
      %v917 = vsel %vm475, %v471, 0
      %v920 = vsel %vm475, %v472, 0
      %v923 = vsel %vm475, %v473, 0
      %v926 = vsel %vm506, %v206, 0
      %928 = vmatprep.subr.bf16.mxu0 0
      %929 = vmatpush1.bf16.msra.mxu0 %v926
      %930 = vmatprep.subr.bf16.mxu0 0
      %931 = vmatpush1.bf16.msra.mxu0 0
      %932 = vmatprep.subr.bf16.mxu0 0
      %933 = vmatpush1.bf16.msra.mxu0 0
      %934 = vmatprep.subr.bf16.mxu0 0
      %935 = vmatpush1.bf16.msra.mxu0 0
      %936 = vmatprep.subr.bf16.mxu0 0
      %937 = vmatpush1.bf16.msra.mxu0 0
      %938 = vmatprep.subr.bf16.mxu0 0
      %939 = vmatpush1.bf16.msra.mxu0 0
      %940 = vmatprep.subr.bf16.mxu0 0
      %941 = vmatpush1.bf16.msra.mxu0 0
      %942 = vmatprep.subr.bf16.mxu0 0
      %943 = vmatpush1.bf16.msra.mxu0 0
      %944 = vmatprep.subr.bf16.mxu0 0
      %945 = vmatpush1.bf16.msra.mxu0 0
      %946 = vmatprep.subr.bf16.mxu0 0
      %947 = vmatpush1.bf16.msra.mxu0 0
      %948 = vmatprep.subr.bf16.mxu0 0
      %949 = vmatpush1.bf16.msra.mxu0 0
      %950 = vmatprep.subr.bf16.mxu0 0
      %951 = vmatpush1.bf16.msra.mxu0 0
      %952 = vmatprep.subr.bf16.mxu0 0
      %953 = vmatpush1.bf16.msra.mxu0 0
      %954 = vmatprep.subr.bf16.mxu0 0
      %955 = vmatpush1.bf16.msra.mxu0 0
      %956 = vmatprep.subr.bf16.mxu0 0
      %957 = vmatpush1.bf16.msra.mxu0 0
      %958 = vmatprep.subr.bf16.mxu0 0
      %959 = vmatpush1.bf16.msra.mxu0 0
      %960 = vmatprep.mubr.bf16.mxu0 0
      %961 = vmatmul.mubr.bf16.gmra.mrb[0].mxu0 %v881
      %v962 = vpop.f32.mrb[0].mxu0
      %v963 = vadd.f32 0.0, %v962
      %v964 = vpop.f32.mrb[0].mxu0
      %v965 = vpop.f32.mrb[0].mxu0
      %v966 = vadd.f32 0.0, %v965
      %v967 = vpop.f32.mrb[0].mxu0
      %968 = vmatprep.mubr.bf16.mxu0 0
      %969 = vmatmul.mubr.bf16.gmra.mrb[0].mxu0 %v884
      %v970 = vpop.f32.mrb[0].mxu0
      %v971 = vadd.f32 0.0, %v970
      %v972 = vpop.f32.mrb[0].mxu0
      %v973 = vpop.f32.mrb[0].mxu0
      %v974 = vadd.f32 0.0, %v973
      %v975 = vpop.f32.mrb[0].mxu0
      %976 = vmatprep.mubr.bf16.mxu0 0
      %977 = vmatmul.mubr.bf16.gmra.mrb[0].mxu0 %v881
      %v978 = vpop.f32.mrb[0].mxu0
      %v979 = vadd.f32 0.0, %v978
      %v980 = vpop.f32.mrb[0].mxu0
      %v981 = vpop.f32.mrb[0].mxu0
      %v982 = vadd.f32 0.0, %v981
      %v983 = vpop.f32.mrb[0].mxu0
      %984 = vmatprep.mubr.bf16.mxu0 0
      %985 = vmatmul.mubr.bf16.gmra.mrb[0].mxu0 %v887
      %v986 = vpop.f32.mrb[0].mxu0
      %v987 = vadd.f32 0.0, %v986
      %v988 = vpop.f32.mrb[0].mxu0
      %v989 = vpop.f32.mrb[0].mxu0
      %v990 = vadd.f32 0.0, %v989
      %v991 = vpop.f32.mrb[0].mxu0
      %992 = vmatprep.mubr.bf16.mxu0 0
      %993 = vmatmul.mubr.bf16.gmra.mrb[0].mxu0 %v890
      %v994 = vpop.f32.mrb[0].mxu0
      %v995 = vadd.f32 0.0, %v994
      %v996 = vpop.f32.mrb[0].mxu0
      %v997 = vpop.f32.mrb[0].mxu0
      %v998 = vadd.f32 0.0, %v997
      %v999 = vpop.f32.mrb[0].mxu0
      %1000 = vmatprep.mubr.bf16.mxu0 0
      %1001 = vmatmul.mubr.bf16.gmra.mrb[0].mxu0 %v893
      %v1002 = vpop.f32.mrb[0].mxu0
      %v1003 = vadd.f32 0.0, %v1002
      %v1004 = vpop.f32.mrb[0].mxu0
      %v1005 = vpop.f32.mrb[0].mxu0
      %v1006 = vadd.f32 0.0, %v1005
      %v1007 = vpop.f32.mrb[0].mxu0
      %1008 = vmatprep.mubr.bf16.mxu0 0
      %1009 = vmatmul.mubr.bf16.gmra.mrb[0].mxu0 %v896
      %v1010 = vpop.f32.mrb[0].mxu0
      %v1011 = vadd.f32 0.0, %v1010
      %v1012 = vpop.f32.mrb[0].mxu0
      %v1013 = vpop.f32.mrb[0].mxu0
      %v1014 = vadd.f32 0.0, %v1013
      %v1015 = vpop.f32.mrb[0].mxu0
      %1016 = vmatprep.mubr.bf16.mxu0 0
      %1017 = vmatmul.mubr.bf16.gmra.mrb[0].mxu0 %v899
      %v1018 = vpop.f32.mrb[0].mxu0
      %v1019 = vadd.f32 0.0, %v1018
      %v1020 = vpop.f32.mrb[0].mxu0
      %v1021 = vpop.f32.mrb[0].mxu0
      %v1022 = vadd.f32 0.0, %v1021
      %v1023 = vpop.f32.mrb[0].mxu0
      %1024 = vmatprep.mubr.bf16.mxu0 0
      %1025 = vmatmul.mubr.bf16.gmra.mrb[0].mxu0 %v902
      %v1026 = vpop.f32.mrb[0].mxu0
      %v1027 = vadd.f32 0.0, %v1026
      %v1028 = vpop.f32.mrb[0].mxu0
      %v1029 = vpop.f32.mrb[0].mxu0
      %v1030 = vadd.f32 0.0, %v1029
      %v1031 = vpop.f32.mrb[0].mxu0
      %1032 = vmatprep.mubr.bf16.mxu0 0
      %1033 = vmatmul.mubr.bf16.gmra.mrb[0].mxu0 %v905
      %v1034 = vpop.f32.mrb[0].mxu0
      %v1035 = vadd.f32 0.0, %v1034
      %v1036 = vpop.f32.mrb[0].mxu0
      %v1037 = vpop.f32.mrb[0].mxu0
      %v1038 = vadd.f32 0.0, %v1037
      %v1039 = vpop.f32.mrb[0].mxu0
      %1040 = vmatprep.mubr.bf16.mxu0 0
      %1041 = vmatmul.mubr.bf16.gmra.mrb[0].mxu0 %v908
      %v1042 = vpop.f32.mrb[0].mxu0
      %v1043 = vadd.f32 0.0, %v1042
      %v1044 = vpop.f32.mrb[0].mxu0
      %v1045 = vpop.f32.mrb[0].mxu0
      %v1046 = vadd.f32 0.0, %v1045
      %v1047 = vpop.f32.mrb[0].mxu0
      %1048 = vmatprep.mubr.bf16.mxu0 0
      %1049 = vmatmul.mubr.bf16.gmra.mrb[0].mxu0 %v911
      %v1050 = vpop.f32.mrb[0].mxu0
      %v1051 = vadd.f32 0.0, %v1050
      %v1052 = vpop.f32.mrb[0].mxu0
      %v1053 = vpop.f32.mrb[0].mxu0
      %v1054 = vadd.f32 0.0, %v1053
      %v1055 = vpop.f32.mrb[0].mxu0
      %1056 = vmatprep.mubr.bf16.mxu0 0
      %1057 = vmatmul.mubr.bf16.gmra.mrb[0].mxu0 %v914
      %v1058 = vpop.f32.mrb[0].mxu0
      %v1059 = vadd.f32 0.0, %v1058
      %v1060 = vpop.f32.mrb[0].mxu0
      %v1061 = vpop.f32.mrb[0].mxu0
      %v1062 = vadd.f32 0.0, %v1061
      %v1063 = vpop.f32.mrb[0].mxu0
      %1064 = vmatprep.mubr.bf16.mxu0 0
      %1065 = vmatmul.mubr.bf16.gmra.mrb[0].mxu0 %v917
      %v1066 = vpop.f32.mrb[0].mxu0
      %v1067 = vadd.f32 0.0, %v1066
      %v1068 = vpop.f32.mrb[0].mxu0
      %v1069 = vpop.f32.mrb[0].mxu0
      %v1070 = vadd.f32 0.0, %v1069
      %v1071 = vpop.f32.mrb[0].mxu0
      %1072 = vmatprep.mubr.bf16.mxu0 0
      %1073 = vmatmul.mubr.bf16.gmra.mrb[0].mxu0 %v920
      %v1074 = vpop.f32.mrb[0].mxu0
      %v1075 = vadd.f32 0.0, %v1074
      %v1076 = vpop.f32.mrb[0].mxu0
      %v1077 = vpop.f32.mrb[0].mxu0
      %v1078 = vadd.f32 0.0, %v1077
      %v1079 = vpop.f32.mrb[0].mxu0
      %1080 = vmatprep.mubr.bf16.mxu0 0
      %1081 = vmatmul.mubr.bf16.gmra.mrb[0].mxu0 %v923
      %v1082 = vpop.f32.mrb[0].mxu0
      %v1083 = vadd.f32 0.0, %v1082
      %v1084 = vpop.f32.mrb[0].mxu0
      %v1085 = vpop.f32.mrb[0].mxu0
      %v1086 = vadd.f32 0.0, %v1085
      %v1087 = vpop.f32.mrb[0].mxu0
      %1088 = vdwg.mxu0
      %v1089 = vadd.f32 %v754, %v963
      %v1090 = vadd.f32 %v757, %v966
      %v1091 = vadd.f32 %v762, %v971
      %v1092 = vadd.f32 %v765, %v974
      %v1093 = vadd.f32 %v770, %v979
      %v1094 = vadd.f32 %v773, %v982
      %v1095 = vadd.f32 %v778, %v987
      %v1096 = vadd.f32 %v781, %v990
      %v1097 = vadd.f32 %v786, %v995
      %v1098 = vadd.f32 %v789, %v998
      %v1099 = vadd.f32 %v794, %v1003
      %v1100 = vadd.f32 %v797, %v1006
      %v1101 = vadd.f32 %v802, %v1011
      %v1102 = vadd.f32 %v805, %v1014
      %v1103 = vadd.f32 %v810, %v1019
      %v1104 = vadd.f32 %v813, %v1022
      %v1105 = vadd.f32 %v818, %v1027
      %v1106 = vadd.f32 %v821, %v1030
      %v1107 = vadd.f32 %v826, %v1035
      %v1108 = vadd.f32 %v829, %v1038
      %v1109 = vadd.f32 %v834, %v1043
      %v1110 = vadd.f32 %v837, %v1046
      %v1111 = vadd.f32 %v842, %v1051
      %v1112 = vadd.f32 %v845, %v1054
      %v1113 = vadd.f32 %v850, %v1059
      %v1114 = vadd.f32 %v853, %v1062
      %v1115 = vadd.f32 %v858, %v1067
      %v1116 = vadd.f32 %v861, %v1070
      %v1117 = vadd.f32 %v866, %v1075
      %v1118 = vadd.f32 %v869, %v1078
      %v1119 = vadd.f32 %v874, %v1083
      %v1120 = vadd.f32 %v877, %v1086
      %v1122 = vsel %vm475, %v391, 0
      %v1125 = vsel %vm506, %v207, 0
      %1127 = vmatprep.subr.bf16.mxu0 0
      %1128 = vmatpush1.bf16.msra.mxu0 %v1125
      %1129 = vmatprep.subr.bf16.mxu0 0
      %1130 = vmatpush1.bf16.msra.mxu0 0
      %1131 = vmatprep.subr.bf16.mxu0 0
      %1132 = vmatpush1.bf16.msra.mxu0 0
      %1133 = vmatprep.subr.bf16.mxu0 0
      %1134 = vmatpush1.bf16.msra.mxu0 0
      %1135 = vmatprep.subr.bf16.mxu0 0
      %1136 = vmatpush1.bf16.msra.mxu0 0
      %1137 = vmatprep.subr.bf16.mxu0 0
      %1138 = vmatpush1.bf16.msra.mxu0 0
      %1139 = vmatprep.subr.bf16.mxu0 0
      %1140 = vmatpush1.bf16.msra.mxu0 0
      %1141 = vmatprep.subr.bf16.mxu0 0
      %1142 = vmatpush1.bf16.msra.mxu0 0
      %1143 = vmatprep.subr.bf16.mxu0 0
      %1144 = vmatpush1.bf16.msra.mxu0 0
      %1145 = vmatprep.subr.bf16.mxu0 0
      %1146 = vmatpush1.bf16.msra.mxu0 0
      %1147 = vmatprep.subr.bf16.mxu0 0
      %1148 = vmatpush1.bf16.msra.mxu0 0
      %1149 = vmatprep.subr.bf16.mxu0 0
      %1150 = vmatpush1.bf16.msra.mxu0 0
      %1151 = vmatprep.subr.bf16.mxu0 0
      %1152 = vmatpush1.bf16.msra.mxu0 0
      %1153 = vmatprep.subr.bf16.mxu0 0
      %1154 = vmatpush1.bf16.msra.mxu0 0
      %1155 = vmatprep.subr.bf16.mxu0 0
      %1156 = vmatpush1.bf16.msra.mxu0 0
      %1157 = vmatprep.subr.bf16.mxu0 0
      %1158 = vmatpush1.bf16.msra.mxu0 0
      %1159 = vmatprep.mubr.bf16.mxu0 0
      %1160 = vmatmul.mubr.bf16.gmra.mrb[0].mxu0 %v675
      %v1161 = vpop.f32.mrb[0].mxu0
      %v1162 = vadd.f32 0.0, %v1161
      %v1163 = vpop.f32.mrb[0].mxu0
      %v1164 = vpop.f32.mrb[0].mxu0
      %v1165 = vadd.f32 0.0, %v1164
      %v1166 = vpop.f32.mrb[0].mxu0
      %1167 = vmatprep.mubr.bf16.mxu0 0
      %1168 = vmatmul.mubr.bf16.gmra.mrb[0].mxu0 %v672
      %v1169 = vpop.f32.mrb[0].mxu0
      %v1170 = vadd.f32 0.0, %v1169
      %v1171 = vpop.f32.mrb[0].mxu0
      %v1172 = vpop.f32.mrb[0].mxu0
      %v1173 = vadd.f32 0.0, %v1172
      %v1174 = vpop.f32.mrb[0].mxu0
      %1175 = vmatprep.mubr.bf16.mxu0 0
      %1176 = vmatmul.mubr.bf16.gmra.mrb[0].mxu0 %v678
      %v1177 = vpop.f32.mrb[0].mxu0
      %v1178 = vadd.f32 0.0, %v1177
      %v1179 = vpop.f32.mrb[0].mxu0
      %v1180 = vpop.f32.mrb[0].mxu0
      %v1181 = vadd.f32 0.0, %v1180
      %v1182 = vpop.f32.mrb[0].mxu0
      %1183 = vmatprep.mubr.bf16.mxu0 0
      %1184 = vmatmul.mubr.bf16.gmra.mrb[0].mxu0 %v681
      %v1185 = vpop.f32.mrb[0].mxu0
      %v1186 = vadd.f32 0.0, %v1185
      %v1187 = vpop.f32.mrb[0].mxu0
      %v1188 = vpop.f32.mrb[0].mxu0
      %v1189 = vadd.f32 0.0, %v1188
      %v1190 = vpop.f32.mrb[0].mxu0
      %1191 = vmatprep.mubr.bf16.mxu0 0
      %1192 = vmatmul.mubr.bf16.gmra.mrb[0].mxu0 %v684
      %v1193 = vpop.f32.mrb[0].mxu0
      %v1194 = vadd.f32 0.0, %v1193
      %v1195 = vpop.f32.mrb[0].mxu0
      %v1196 = vpop.f32.mrb[0].mxu0
      %v1197 = vadd.f32 0.0, %v1196
      %v1198 = vpop.f32.mrb[0].mxu0
      %1199 = vmatprep.mubr.bf16.mxu0 0
      %1200 = vmatmul.mubr.bf16.gmra.mrb[0].mxu0 %v687
      %v1201 = vpop.f32.mrb[0].mxu0
      %v1202 = vadd.f32 0.0, %v1201
      %v1203 = vpop.f32.mrb[0].mxu0
      %v1204 = vpop.f32.mrb[0].mxu0
      %v1205 = vadd.f32 0.0, %v1204
      %v1206 = vpop.f32.mrb[0].mxu0
      %1207 = vmatprep.mubr.bf16.mxu0 0
      %1208 = vmatmul.mubr.bf16.gmra.mrb[0].mxu0 %v690
      %v1209 = vpop.f32.mrb[0].mxu0
      %v1210 = vadd.f32 0.0, %v1209
      %v1211 = vpop.f32.mrb[0].mxu0
      %v1212 = vpop.f32.mrb[0].mxu0
      %v1213 = vadd.f32 0.0, %v1212
      %v1214 = vpop.f32.mrb[0].mxu0
      %1215 = vmatprep.mubr.bf16.mxu0 0
      %1216 = vmatmul.mubr.bf16.gmra.mrb[0].mxu0 %v693
      %v1217 = vpop.f32.mrb[0].mxu0
      %v1218 = vadd.f32 0.0, %v1217
      %v1219 = vpop.f32.mrb[0].mxu0
      %v1220 = vpop.f32.mrb[0].mxu0
      %v1221 = vadd.f32 0.0, %v1220
      %v1222 = vpop.f32.mrb[0].mxu0
      %1223 = vmatprep.mubr.bf16.mxu0 0
      %1224 = vmatmul.mubr.bf16.gmra.mrb[0].mxu0 %v696
      %v1225 = vpop.f32.mrb[0].mxu0
      %v1226 = vadd.f32 0.0, %v1225
      %v1227 = vpop.f32.mrb[0].mxu0
      %v1228 = vpop.f32.mrb[0].mxu0
      %v1229 = vadd.f32 0.0, %v1228
      %v1230 = vpop.f32.mrb[0].mxu0
      %1231 = vmatprep.mubr.bf16.mxu0 0
      %1232 = vmatmul.mubr.bf16.gmra.mrb[0].mxu0 %v699
      %v1233 = vpop.f32.mrb[0].mxu0
      %v1234 = vadd.f32 0.0, %v1233
      %v1235 = vpop.f32.mrb[0].mxu0
      %v1236 = vpop.f32.mrb[0].mxu0
      %v1237 = vadd.f32 0.0, %v1236
      %v1238 = vpop.f32.mrb[0].mxu0
      %1239 = vmatprep.mubr.bf16.mxu0 0
      %1240 = vmatmul.mubr.bf16.gmra.mrb[0].mxu0 %v702
      %v1241 = vpop.f32.mrb[0].mxu0
      %v1242 = vadd.f32 0.0, %v1241
      %v1243 = vpop.f32.mrb[0].mxu0
      %v1244 = vpop.f32.mrb[0].mxu0
      %v1245 = vadd.f32 0.0, %v1244
      %v1246 = vpop.f32.mrb[0].mxu0
      %1247 = vmatprep.mubr.bf16.mxu0 0
      %1248 = vmatmul.mubr.bf16.gmra.mrb[0].mxu0 %v705
      %v1249 = vpop.f32.mrb[0].mxu0
      %v1250 = vadd.f32 0.0, %v1249
      %v1251 = vpop.f32.mrb[0].mxu0
      %v1252 = vpop.f32.mrb[0].mxu0
      %v1253 = vadd.f32 0.0, %v1252
      %v1254 = vpop.f32.mrb[0].mxu0
      %1255 = vmatprep.mubr.bf16.mxu0 0
      %1256 = vmatmul.mubr.bf16.gmra.mrb[0].mxu0 %v708
      %v1257 = vpop.f32.mrb[0].mxu0
      %v1258 = vadd.f32 0.0, %v1257
      %v1259 = vpop.f32.mrb[0].mxu0
      %v1260 = vpop.f32.mrb[0].mxu0
      %v1261 = vadd.f32 0.0, %v1260
      %v1262 = vpop.f32.mrb[0].mxu0
      %1263 = vmatprep.mubr.bf16.mxu0 0
      %1264 = vmatmul.mubr.bf16.gmra.mrb[0].mxu0 %v711
      %v1265 = vpop.f32.mrb[0].mxu0
      %v1266 = vadd.f32 0.0, %v1265
      %v1267 = vpop.f32.mrb[0].mxu0
      %v1268 = vpop.f32.mrb[0].mxu0
      %v1269 = vadd.f32 0.0, %v1268
      %v1270 = vpop.f32.mrb[0].mxu0
      %1271 = vmatprep.mubr.bf16.mxu0 0
      %1272 = vmatmul.mubr.bf16.gmra.mrb[0].mxu0 %v714
      %v1273 = vpop.f32.mrb[0].mxu0
      %v1274 = vadd.f32 0.0, %v1273
      %v1275 = vpop.f32.mrb[0].mxu0
      %v1276 = vpop.f32.mrb[0].mxu0
      %v1277 = vadd.f32 0.0, %v1276
      %v1278 = vpop.f32.mrb[0].mxu0
      %1279 = vmatprep.mubr.bf16.mxu0 0
      %1280 = vmatmul.mubr.bf16.gmra.mrb[0].mxu0 %v1122
      %v1281 = vpop.f32.mrb[0].mxu0
      %v1282 = vadd.f32 0.0, %v1281
      %v1283 = vpop.f32.mrb[0].mxu0
      %v1284 = vpop.f32.mrb[0].mxu0
      %v1285 = vadd.f32 0.0, %v1284
      %v1286 = vpop.f32.mrb[0].mxu0
      %1287 = vdwg.mxu0
      %v1288 = vadd.f32 %v1089, %v1162
      %v1289 = vadd.f32 %v1090, %v1165
      %v1290 = vadd.f32 %v1091, %v1170
      %v1291 = vadd.f32 %v1092, %v1173
      %v1292 = vadd.f32 %v1093, %v1178
      %v1293 = vadd.f32 %v1094, %v1181
      %v1294 = vadd.f32 %v1095, %v1186
      %v1295 = vadd.f32 %v1096, %v1189
      %v1296 = vadd.f32 %v1097, %v1194
      %v1297 = vadd.f32 %v1098, %v1197
      %v1298 = vadd.f32 %v1099, %v1202
      %v1299 = vadd.f32 %v1100, %v1205
      %v1300 = vadd.f32 %v1101, %v1210
      %v1301 = vadd.f32 %v1102, %v1213
      %v1302 = vadd.f32 %v1103, %v1218
      %v1303 = vadd.f32 %v1104, %v1221
      %v1304 = vadd.f32 %v1105, %v1226
      %v1305 = vadd.f32 %v1106, %v1229
      %v1306 = vadd.f32 %v1107, %v1234
      %v1307 = vadd.f32 %v1108, %v1237
      %v1308 = vadd.f32 %v1109, %v1242
      %v1309 = vadd.f32 %v1110, %v1245
      %v1310 = vadd.f32 %v1111, %v1250
      %v1311 = vadd.f32 %v1112, %v1253
      %v1312 = vadd.f32 %v1113, %v1258
      %v1313 = vadd.f32 %v1114, %v1261
      %v1314 = vadd.f32 %v1115, %v1266
      %v1315 = vadd.f32 %v1116, %v1269
      %v1316 = vadd.f32 %v1117, %v1274
      %v1317 = vadd.f32 %v1118, %v1277
      %v1318 = vadd.f32 %v1119, %v1282
      %v1319 = vadd.f32 %v1120, %v1285
      %v1320 = vsel %vm475, %v228, 0
      %v1323 = vsel %vm506, %v208, 0
      %1325 = vmatprep.subr.bf16.mxu0 0
      %1326 = vmatpush1.bf16.msra.mxu0 %v1323
      %1327 = vmatprep.subr.bf16.mxu0 0
      %1328 = vmatpush1.bf16.msra.mxu0 0
      %1329 = vmatprep.subr.bf16.mxu0 0
      %1330 = vmatpush1.bf16.msra.mxu0 0
      %1331 = vmatprep.subr.bf16.mxu0 0
      %1332 = vmatpush1.bf16.msra.mxu0 0
      %1333 = vmatprep.subr.bf16.mxu0 0
      %1334 = vmatpush1.bf16.msra.mxu0 0
      %1335 = vmatprep.subr.bf16.mxu0 0
      %1336 = vmatpush1.bf16.msra.mxu0 0
      %1337 = vmatprep.subr.bf16.mxu0 0
      %1338 = vmatpush1.bf16.msra.mxu0 0
      %1339 = vmatprep.subr.bf16.mxu0 0
      %1340 = vmatpush1.bf16.msra.mxu0 0
      %1341 = vmatprep.subr.bf16.mxu0 0
      %1342 = vmatpush1.bf16.msra.mxu0 0
      %1343 = vmatprep.subr.bf16.mxu0 0
      %1344 = vmatpush1.bf16.msra.mxu0 0
      %1345 = vmatprep.subr.bf16.mxu0 0
      %1346 = vmatpush1.bf16.msra.mxu0 0
      %1347 = vmatprep.subr.bf16.mxu0 0
      %1348 = vmatpush1.bf16.msra.mxu0 0
      %1349 = vmatprep.subr.bf16.mxu0 0
      %1350 = vmatpush1.bf16.msra.mxu0 0
      %1351 = vmatprep.subr.bf16.mxu0 0
      %1352 = vmatpush1.bf16.msra.mxu0 0
      %1353 = vmatprep.subr.bf16.mxu0 0
      %1354 = vmatpush1.bf16.msra.mxu0 0
      %1355 = vmatprep.subr.bf16.mxu0 0
      %1356 = vmatpush1.bf16.msra.mxu0 0
      %1357 = vmatprep.mubr.bf16.mxu0 0
      %1358 = vmatmul.mubr.bf16.gmra.mrb[0].mxu0 %v478
      %v1359 = vpop.f32.mrb[0].mxu0
      %v1360 = vadd.f32 0.0, %v1359
      %v1361 = vpop.f32.mrb[0].mxu0
      %v1362 = vpop.f32.mrb[0].mxu0
      %v1363 = vadd.f32 0.0, %v1362
      %v1364 = vpop.f32.mrb[0].mxu0
      %1365 = vmatprep.mubr.bf16.mxu0 0
      %1366 = vmatmul.mubr.bf16.gmra.mrb[0].mxu0 %v476
      %v1367 = vpop.f32.mrb[0].mxu0
      %v1368 = vadd.f32 0.0, %v1367
      %v1369 = vpop.f32.mrb[0].mxu0
      %v1370 = vpop.f32.mrb[0].mxu0
      %v1371 = vadd.f32 0.0, %v1370
      %v1372 = vpop.f32.mrb[0].mxu0
      %1373 = vmatprep.mubr.bf16.mxu0 0
      %1374 = vmatmul.mubr.bf16.gmra.mrb[0].mxu0 %v480
      %v1375 = vpop.f32.mrb[0].mxu0
      %v1376 = vadd.f32 0.0, %v1375
      %v1377 = vpop.f32.mrb[0].mxu0
      %v1378 = vpop.f32.mrb[0].mxu0
      %v1379 = vadd.f32 0.0, %v1378
      %v1380 = vpop.f32.mrb[0].mxu0
      %1381 = vmatprep.mubr.bf16.mxu0 0
      %1382 = vmatmul.mubr.bf16.gmra.mrb[0].mxu0 %v482
      %v1383 = vpop.f32.mrb[0].mxu0
      %v1384 = vadd.f32 0.0, %v1383
      %v1385 = vpop.f32.mrb[0].mxu0
      %v1386 = vpop.f32.mrb[0].mxu0
      %v1387 = vadd.f32 0.0, %v1386
      %v1388 = vpop.f32.mrb[0].mxu0
      %1389 = vmatprep.mubr.bf16.mxu0 0
      %1390 = vmatmul.mubr.bf16.gmra.mrb[0].mxu0 %v484
      %v1391 = vpop.f32.mrb[0].mxu0
      %v1392 = vadd.f32 0.0, %v1391
      %v1393 = vpop.f32.mrb[0].mxu0
      %v1394 = vpop.f32.mrb[0].mxu0
      %v1395 = vadd.f32 0.0, %v1394
      %v1396 = vpop.f32.mrb[0].mxu0
      %1397 = vmatprep.mubr.bf16.mxu0 0
      %1398 = vmatmul.mubr.bf16.gmra.mrb[0].mxu0 %v486
      %v1399 = vpop.f32.mrb[0].mxu0
      %v1400 = vadd.f32 0.0, %v1399
      %v1401 = vpop.f32.mrb[0].mxu0
      %v1402 = vpop.f32.mrb[0].mxu0
      %v1403 = vadd.f32 0.0, %v1402
      %v1404 = vpop.f32.mrb[0].mxu0
      %1405 = vmatprep.mubr.bf16.mxu0 0
      %1406 = vmatmul.mubr.bf16.gmra.mrb[0].mxu0 %v488
      %v1407 = vpop.f32.mrb[0].mxu0
      %v1408 = vadd.f32 0.0, %v1407
      %v1409 = vpop.f32.mrb[0].mxu0
      %v1410 = vpop.f32.mrb[0].mxu0
      %v1411 = vadd.f32 0.0, %v1410
      %v1412 = vpop.f32.mrb[0].mxu0
      %1413 = vmatprep.mubr.bf16.mxu0 0
      %1414 = vmatmul.mubr.bf16.gmra.mrb[0].mxu0 %v490
      %v1415 = vpop.f32.mrb[0].mxu0
      %v1416 = vadd.f32 0.0, %v1415
      %v1417 = vpop.f32.mrb[0].mxu0
      %v1418 = vpop.f32.mrb[0].mxu0
      %v1419 = vadd.f32 0.0, %v1418
      %v1420 = vpop.f32.mrb[0].mxu0
      %1421 = vmatprep.mubr.bf16.mxu0 0
      %1422 = vmatmul.mubr.bf16.gmra.mrb[0].mxu0 %v492
      %v1423 = vpop.f32.mrb[0].mxu0
      %v1424 = vadd.f32 0.0, %v1423
      %v1425 = vpop.f32.mrb[0].mxu0
      %v1426 = vpop.f32.mrb[0].mxu0
      %v1427 = vadd.f32 0.0, %v1426
      %v1428 = vpop.f32.mrb[0].mxu0
      %1429 = vmatprep.mubr.bf16.mxu0 0
      %1430 = vmatmul.mubr.bf16.gmra.mrb[0].mxu0 %v494
      %v1431 = vpop.f32.mrb[0].mxu0
      %v1432 = vadd.f32 0.0, %v1431
      %v1433 = vpop.f32.mrb[0].mxu0
      %v1434 = vpop.f32.mrb[0].mxu0
      %v1435 = vadd.f32 0.0, %v1434
      %v1436 = vpop.f32.mrb[0].mxu0
      %1437 = vmatprep.mubr.bf16.mxu0 0
      %1438 = vmatmul.mubr.bf16.gmra.mrb[0].mxu0 %v496
      %v1439 = vpop.f32.mrb[0].mxu0
      %v1440 = vadd.f32 0.0, %v1439
      %v1441 = vpop.f32.mrb[0].mxu0
      %v1442 = vpop.f32.mrb[0].mxu0
      %v1443 = vadd.f32 0.0, %v1442
      %v1444 = vpop.f32.mrb[0].mxu0
      %1445 = vmatprep.mubr.bf16.mxu0 0
      %1446 = vmatmul.mubr.bf16.gmra.mrb[0].mxu0 %v498
      %v1447 = vpop.f32.mrb[0].mxu0
      %v1448 = vadd.f32 0.0, %v1447
      %v1449 = vpop.f32.mrb[0].mxu0
      %v1450 = vpop.f32.mrb[0].mxu0
      %v1451 = vadd.f32 0.0, %v1450
      %v1452 = vpop.f32.mrb[0].mxu0
      %1453 = vmatprep.mubr.bf16.mxu0 0
      %1454 = vmatmul.mubr.bf16.gmra.mrb[0].mxu0 %v500
      %v1455 = vpop.f32.mrb[0].mxu0
      %v1456 = vadd.f32 0.0, %v1455
      %v1457 = vpop.f32.mrb[0].mxu0
      %v1458 = vpop.f32.mrb[0].mxu0
      %v1459 = vadd.f32 0.0, %v1458
      %v1460 = vpop.f32.mrb[0].mxu0
      %1461 = vmatprep.mubr.bf16.mxu0 0
      %1462 = vmatmul.mubr.bf16.gmra.mrb[0].mxu0 %v502
      %v1463 = vpop.f32.mrb[0].mxu0
      %v1464 = vadd.f32 0.0, %v1463
      %v1465 = vpop.f32.mrb[0].mxu0
      %v1466 = vpop.f32.mrb[0].mxu0
      %v1467 = vadd.f32 0.0, %v1466
      %v1468 = vpop.f32.mrb[0].mxu0
      %1469 = vmatprep.mubr.bf16.mxu0 0
      %1470 = vmatmul.mubr.bf16.gmra.mrb[0].mxu0 %v504
      %v1471 = vpop.f32.mrb[0].mxu0
      %v1472 = vadd.f32 0.0, %v1471
      %v1473 = vpop.f32.mrb[0].mxu0
      %v1474 = vpop.f32.mrb[0].mxu0
      %v1475 = vadd.f32 0.0, %v1474
      %v1476 = vpop.f32.mrb[0].mxu0
      %1477 = vmatprep.mubr.bf16.mxu0 0
      %1478 = vmatmul.mubr.bf16.gmra.mrb[0].mxu0 %v1320
      %v1479 = vpop.f32.mrb[0].mxu0
      %v1480 = vadd.f32 0.0, %v1479
      %v1481 = vpop.f32.mrb[0].mxu0
      %v1482 = vpop.f32.mrb[0].mxu0
      %v1483 = vadd.f32 0.0, %v1482
      %v1484 = vpop.f32.mrb[0].mxu0
      %1485 = vdwg.mxu0
      %v1486 = vadd.f32 %v1288, %v1360
      %v1487 = vadd.f32 %v1289, %v1363
      %v1488 = vadd.f32 %v1290, %v1368
      %v1489 = vadd.f32 %v1291, %v1371
      %v1490 = vadd.f32 %v1292, %v1376
      %v1491 = vadd.f32 %v1293, %v1379
      %v1492 = vadd.f32 %v1294, %v1384
      %v1493 = vadd.f32 %v1295, %v1387
      %v1494 = vadd.f32 %v1296, %v1392
      %v1495 = vadd.f32 %v1297, %v1395
      %v1496 = vadd.f32 %v1298, %v1400
      %v1497 = vadd.f32 %v1299, %v1403
      %v1498 = vadd.f32 %v1300, %v1408
      %v1499 = vadd.f32 %v1301, %v1411
      %v1500 = vadd.f32 %v1302, %v1416
      %v1501 = vadd.f32 %v1303, %v1419
      %v1502 = vadd.f32 %v1304, %v1424
      %v1503 = vadd.f32 %v1305, %v1427
      %v1504 = vadd.f32 %v1306, %v1432
      %v1505 = vadd.f32 %v1307, %v1435
      %v1506 = vadd.f32 %v1308, %v1440
      %v1507 = vadd.f32 %v1309, %v1443
      %v1508 = vadd.f32 %v1310, %v1448
      %v1509 = vadd.f32 %v1311, %v1451
      %v1510 = vadd.f32 %v1312, %v1456
      %v1511 = vadd.f32 %v1313, %v1459
      %v1512 = vadd.f32 %v1314, %v1464
      %v1513 = vadd.f32 %v1315, %v1467
      %v1514 = vadd.f32 %v1316, %v1472
      %v1515 = vadd.f32 %v1317, %v1475
      %v1516 = vadd.f32 %v1318, %v1480
      %v1517 = vadd.f32 %v1319, %v1483
      %v1519 = vsel %vm475, %v474, 0
      %v1522 = vsel %vm506, %v209, 0
      %1524 = vmatprep.subr.bf16.mxu0 0
      %1525 = vmatpush1.bf16.msra.mxu0 %v1522
      %1526 = vmatprep.subr.bf16.mxu0 0
      %1527 = vmatpush1.bf16.msra.mxu0 0
      %1528 = vmatprep.subr.bf16.mxu0 0
      %1529 = vmatpush1.bf16.msra.mxu0 0
      %1530 = vmatprep.subr.bf16.mxu0 0
      %1531 = vmatpush1.bf16.msra.mxu0 0
      %1532 = vmatprep.subr.bf16.mxu0 0
      %1533 = vmatpush1.bf16.msra.mxu0 0
      %1534 = vmatprep.subr.bf16.mxu0 0
      %1535 = vmatpush1.bf16.msra.mxu0 0
      %1536 = vmatprep.subr.bf16.mxu0 0
      %1537 = vmatpush1.bf16.msra.mxu0 0
      %1538 = vmatprep.subr.bf16.mxu0 0
      %1539 = vmatpush1.bf16.msra.mxu0 0
      %1540 = vmatprep.subr.bf16.mxu0 0
      %1541 = vmatpush1.bf16.msra.mxu0 0
      %1542 = vmatprep.subr.bf16.mxu0 0
      %1543 = vmatpush1.bf16.msra.mxu0 0
      %1544 = vmatprep.subr.bf16.mxu0 0
      %1545 = vmatpush1.bf16.msra.mxu0 0
      %1546 = vmatprep.subr.bf16.mxu0 0
      %1547 = vmatpush1.bf16.msra.mxu0 0
      %1548 = vmatprep.subr.bf16.mxu0 0
      %1549 = vmatpush1.bf16.msra.mxu0 0
      %1550 = vmatprep.subr.bf16.mxu0 0
      %1551 = vmatpush1.bf16.msra.mxu0 0
      %1552 = vmatprep.subr.bf16.mxu0 0
      %1553 = vmatpush1.bf16.msra.mxu0 0
      %1554 = vmatprep.subr.bf16.mxu0 0
      %1555 = vmatpush1.bf16.msra.mxu0 0
      %1556 = vmatprep.mubr.bf16.mxu0 0
      %1557 = vmatmul.mubr.bf16.gmra.mrb[0].mxu0 %v884
      %v1558 = vpop.f32.mrb[0].mxu0
      %v1559 = vadd.f32 0.0, %v1558
      %v1560 = vpop.f32.mrb[0].mxu0
      %v1561 = vpop.f32.mrb[0].mxu0
      %v1562 = vadd.f32 0.0, %v1561
      %v1563 = vpop.f32.mrb[0].mxu0
      %1564 = vmatprep.mubr.bf16.mxu0 0
      %1565 = vmatmul.mubr.bf16.gmra.mrb[0].mxu0 %v881
      %v1566 = vpop.f32.mrb[0].mxu0
      %v1567 = vadd.f32 0.0, %v1566
      %v1568 = vpop.f32.mrb[0].mxu0
      %v1569 = vpop.f32.mrb[0].mxu0
      %v1570 = vadd.f32 0.0, %v1569
      %v1571 = vpop.f32.mrb[0].mxu0
      %1572 = vmatprep.mubr.bf16.mxu0 0
      %1573 = vmatmul.mubr.bf16.gmra.mrb[0].mxu0 %v887
      %v1574 = vpop.f32.mrb[0].mxu0
      %v1575 = vadd.f32 0.0, %v1574
      %v1576 = vpop.f32.mrb[0].mxu0
      %v1577 = vpop.f32.mrb[0].mxu0
      %v1578 = vadd.f32 0.0, %v1577
      %v1579 = vpop.f32.mrb[0].mxu0
      %1580 = vmatprep.mubr.bf16.mxu0 0
      %1581 = vmatmul.mubr.bf16.gmra.mrb[0].mxu0 %v890
      %v1582 = vpop.f32.mrb[0].mxu0
      %v1583 = vadd.f32 0.0, %v1582
      %v1584 = vpop.f32.mrb[0].mxu0
      %v1585 = vpop.f32.mrb[0].mxu0
      %v1586 = vadd.f32 0.0, %v1585
      %v1587 = vpop.f32.mrb[0].mxu0
      %1588 = vmatprep.mubr.bf16.mxu0 0
      %1589 = vmatmul.mubr.bf16.gmra.mrb[0].mxu0 %v893
      %v1590 = vpop.f32.mrb[0].mxu0
      %v1591 = vadd.f32 0.0, %v1590
      %v1592 = vpop.f32.mrb[0].mxu0
      %v1593 = vpop.f32.mrb[0].mxu0
      %v1594 = vadd.f32 0.0, %v1593
      %v1595 = vpop.f32.mrb[0].mxu0
      %1596 = vmatprep.mubr.bf16.mxu0 0
      %1597 = vmatmul.mubr.bf16.gmra.mrb[0].mxu0 %v896
      %v1598 = vpop.f32.mrb[0].mxu0
      %v1599 = vadd.f32 0.0, %v1598
      %v1600 = vpop.f32.mrb[0].mxu0
      %v1601 = vpop.f32.mrb[0].mxu0
      %v1602 = vadd.f32 0.0, %v1601
      %v1603 = vpop.f32.mrb[0].mxu0
      %1604 = vmatprep.mubr.bf16.mxu0 0
      %1605 = vmatmul.mubr.bf16.gmra.mrb[0].mxu0 %v899
      %v1606 = vpop.f32.mrb[0].mxu0
      %v1607 = vadd.f32 0.0, %v1606
      %v1608 = vpop.f32.mrb[0].mxu0
      %v1609 = vpop.f32.mrb[0].mxu0
      %v1610 = vadd.f32 0.0, %v1609
      %v1611 = vpop.f32.mrb[0].mxu0
      %1612 = vmatprep.mubr.bf16.mxu0 0
      %1613 = vmatmul.mubr.bf16.gmra.mrb[0].mxu0 %v902
      %v1614 = vpop.f32.mrb[0].mxu0
      %v1615 = vadd.f32 0.0, %v1614
      %v1616 = vpop.f32.mrb[0].mxu0
      %v1617 = vpop.f32.mrb[0].mxu0
      %v1618 = vadd.f32 0.0, %v1617
      %v1619 = vpop.f32.mrb[0].mxu0
      %1620 = vmatprep.mubr.bf16.mxu0 0
      %1621 = vmatmul.mubr.bf16.gmra.mrb[0].mxu0 %v905
      %v1622 = vpop.f32.mrb[0].mxu0
      %v1623 = vadd.f32 0.0, %v1622
      %v1624 = vpop.f32.mrb[0].mxu0
      %v1625 = vpop.f32.mrb[0].mxu0
      %v1626 = vadd.f32 0.0, %v1625
      %v1627 = vpop.f32.mrb[0].mxu0
      %1628 = vmatprep.mubr.bf16.mxu0 0
      %1629 = vmatmul.mubr.bf16.gmra.mrb[0].mxu0 %v908
      %v1630 = vpop.f32.mrb[0].mxu0
      %v1631 = vadd.f32 0.0, %v1630
      %v1632 = vpop.f32.mrb[0].mxu0
      %v1633 = vpop.f32.mrb[0].mxu0
      %v1634 = vadd.f32 0.0, %v1633
      %v1635 = vpop.f32.mrb[0].mxu0
      %1636 = vmatprep.mubr.bf16.mxu0 0
      %1637 = vmatmul.mubr.bf16.gmra.mrb[0].mxu0 %v911
      %v1638 = vpop.f32.mrb[0].mxu0
      %v1639 = vadd.f32 0.0, %v1638
      %v1640 = vpop.f32.mrb[0].mxu0
      %v1641 = vpop.f32.mrb[0].mxu0
      %v1642 = vadd.f32 0.0, %v1641
      %v1643 = vpop.f32.mrb[0].mxu0
      %1644 = vmatprep.mubr.bf16.mxu0 0
      %1645 = vmatmul.mubr.bf16.gmra.mrb[0].mxu0 %v914
      %v1646 = vpop.f32.mrb[0].mxu0
      %v1647 = vadd.f32 0.0, %v1646
      %v1648 = vpop.f32.mrb[0].mxu0
      %v1649 = vpop.f32.mrb[0].mxu0
      %v1650 = vadd.f32 0.0, %v1649
      %v1651 = vpop.f32.mrb[0].mxu0
      %1652 = vmatprep.mubr.bf16.mxu0 0
      %1653 = vmatmul.mubr.bf16.gmra.mrb[0].mxu0 %v917
      %v1654 = vpop.f32.mrb[0].mxu0
      %v1655 = vadd.f32 0.0, %v1654
      %v1656 = vpop.f32.mrb[0].mxu0
      %v1657 = vpop.f32.mrb[0].mxu0
      %v1658 = vadd.f32 0.0, %v1657
      %v1659 = vpop.f32.mrb[0].mxu0
      %1660 = vmatprep.mubr.bf16.mxu0 0
      %1661 = vmatmul.mubr.bf16.gmra.mrb[0].mxu0 %v920
      %v1662 = vpop.f32.mrb[0].mxu0
      %v1663 = vadd.f32 0.0, %v1662
      %v1664 = vpop.f32.mrb[0].mxu0
      %v1665 = vpop.f32.mrb[0].mxu0
      %v1666 = vadd.f32 0.0, %v1665
      %v1667 = vpop.f32.mrb[0].mxu0
      %1668 = vmatprep.mubr.bf16.mxu0 0
      %1669 = vmatmul.mubr.bf16.gmra.mrb[0].mxu0 %v923
      %v1670 = vpop.f32.mrb[0].mxu0
      %v1671 = vadd.f32 0.0, %v1670
      %v1672 = vpop.f32.mrb[0].mxu0
      %v1673 = vpop.f32.mrb[0].mxu0
      %v1674 = vadd.f32 0.0, %v1673
      %v1675 = vpop.f32.mrb[0].mxu0
      %1676 = vmatprep.mubr.bf16.mxu0 0
      %1677 = vmatmul.mubr.bf16.gmra.mrb[0].mxu0 %v1519
      %v1678 = vpop.f32.mrb[0].mxu0
      %v1679 = vadd.f32 0.0, %v1678
      %v1680 = vpop.f32.mrb[0].mxu0
      %v1681 = vpop.f32.mrb[0].mxu0
      %v1682 = vadd.f32 0.0, %v1681
      %v1683 = vpop.f32.mrb[0].mxu0
      %1684 = vdwg.mxu0
      %v1685 = vadd.f32 %v1486, %v1559
      %v1686 = vadd.f32 %v1487, %v1562
      %v1687 = vadd.f32 %v1488, %v1567
      %v1688 = vadd.f32 %v1489, %v1570
      %v1689 = vadd.f32 %v1490, %v1575
      %v1690 = vadd.f32 %v1491, %v1578
      %v1691 = vadd.f32 %v1492, %v1583
      %v1692 = vadd.f32 %v1493, %v1586
      %v1693 = vadd.f32 %v1494, %v1591
      %v1694 = vadd.f32 %v1495, %v1594
      %v1695 = vadd.f32 %v1496, %v1599
      %v1696 = vadd.f32 %v1497, %v1602
      %v1697 = vadd.f32 %v1498, %v1607
      %v1698 = vadd.f32 %v1499, %v1610
      %v1699 = vadd.f32 %v1500, %v1615
      %v1700 = vadd.f32 %v1501, %v1618
      %v1701 = vadd.f32 %v1502, %v1623
      %v1702 = vadd.f32 %v1503, %v1626
      %v1703 = vadd.f32 %v1504, %v1631
      %v1704 = vadd.f32 %v1505, %v1634
      %v1705 = vadd.f32 %v1506, %v1639
      %v1706 = vadd.f32 %v1507, %v1642
      %v1707 = vadd.f32 %v1508, %v1647
      %v1708 = vadd.f32 %v1509, %v1650
      %v1709 = vadd.f32 %v1510, %v1655
      %v1710 = vadd.f32 %v1511, %v1658
      %v1711 = vadd.f32 %v1512, %v1663
      %v1712 = vadd.f32 %v1513, %v1666
      %v1713 = vadd.f32 %v1514, %v1671
      %v1714 = vadd.f32 %v1515, %v1674
      %v1715 = vadd.f32 %v1516, %v1679
      %v1716 = vadd.f32 %v1517, %v1682
      %v1718 = vsel %vm506, %v210, 0
      %1720 = vmatprep.subr.bf16.mxu0 0
      %1721 = vmatpush1.bf16.msra.mxu0 %v1718
      %1722 = vmatprep.subr.bf16.mxu0 0
      %1723 = vmatpush1.bf16.msra.mxu0 0
      %1724 = vmatprep.subr.bf16.mxu0 0
      %1725 = vmatpush1.bf16.msra.mxu0 0
      %1726 = vmatprep.subr.bf16.mxu0 0
      %1727 = vmatpush1.bf16.msra.mxu0 0
      %1728 = vmatprep.subr.bf16.mxu0 0
      %1729 = vmatpush1.bf16.msra.mxu0 0
      %1730 = vmatprep.subr.bf16.mxu0 0
      %1731 = vmatpush1.bf16.msra.mxu0 0
      %1732 = vmatprep.subr.bf16.mxu0 0
      %1733 = vmatpush1.bf16.msra.mxu0 0
      %1734 = vmatprep.subr.bf16.mxu0 0
      %1735 = vmatpush1.bf16.msra.mxu0 0
      %1736 = vmatprep.subr.bf16.mxu0 0
      %1737 = vmatpush1.bf16.msra.mxu0 0
      %1738 = vmatprep.subr.bf16.mxu0 0
      %1739 = vmatpush1.bf16.msra.mxu0 0
      %1740 = vmatprep.subr.bf16.mxu0 0
      %1741 = vmatpush1.bf16.msra.mxu0 0
      %1742 = vmatprep.subr.bf16.mxu0 0
      %1743 = vmatpush1.bf16.msra.mxu0 0
      %1744 = vmatprep.subr.bf16.mxu0 0
      %1745 = vmatpush1.bf16.msra.mxu0 0
      %1746 = vmatprep.subr.bf16.mxu0 0
      %1747 = vmatpush1.bf16.msra.mxu0 0
      %1748 = vmatprep.subr.bf16.mxu0 0
      %1749 = vmatpush1.bf16.msra.mxu0 0
      %1750 = vmatprep.subr.bf16.mxu0 0
      %1751 = vmatpush1.bf16.msra.mxu0 0
      %1752 = vmatprep.mubr.bf16.mxu0 0
      %1753 = vmatmul.mubr.bf16.gmra.mrb[0].mxu0 %v672
      %v1754 = vpop.f32.mrb[0].mxu0
      %v1755 = vadd.f32 0.0, %v1754
      %v1756 = vpop.f32.mrb[0].mxu0
      %v1757 = vpop.f32.mrb[0].mxu0
      %v1758 = vadd.f32 0.0, %v1757
      %v1759 = vpop.f32.mrb[0].mxu0
      %1760 = vmatprep.mubr.bf16.mxu0 0
      %1761 = vmatmul.mubr.bf16.gmra.mrb[0].mxu0 %v678
      %v1762 = vpop.f32.mrb[0].mxu0
      %v1763 = vadd.f32 0.0, %v1762
      %v1764 = vpop.f32.mrb[0].mxu0
      %v1765 = vpop.f32.mrb[0].mxu0
      %v1766 = vadd.f32 0.0, %v1765
      %v1767 = vpop.f32.mrb[0].mxu0
      %1768 = vmatprep.mubr.bf16.mxu0 0
      %1769 = vmatmul.mubr.bf16.gmra.mrb[0].mxu0 %v681
      %v1770 = vpop.f32.mrb[0].mxu0
      %v1771 = vadd.f32 0.0, %v1770
      %v1772 = vpop.f32.mrb[0].mxu0
      %v1773 = vpop.f32.mrb[0].mxu0
      %v1774 = vadd.f32 0.0, %v1773
      %v1775 = vpop.f32.mrb[0].mxu0
      %1776 = vmatprep.mubr.bf16.mxu0 0
      %1777 = vmatmul.mubr.bf16.gmra.mrb[0].mxu0 %v684
      %v1778 = vpop.f32.mrb[0].mxu0
      %v1779 = vadd.f32 0.0, %v1778
      %v1780 = vpop.f32.mrb[0].mxu0
      %v1781 = vpop.f32.mrb[0].mxu0
      %v1782 = vadd.f32 0.0, %v1781
      %v1783 = vpop.f32.mrb[0].mxu0
      %1784 = vmatprep.mubr.bf16.mxu0 0
      %1785 = vmatmul.mubr.bf16.gmra.mrb[0].mxu0 %v687
      %v1786 = vpop.f32.mrb[0].mxu0
      %v1787 = vadd.f32 0.0, %v1786
      %v1788 = vpop.f32.mrb[0].mxu0
      %v1789 = vpop.f32.mrb[0].mxu0
      %v1790 = vadd.f32 0.0, %v1789
      %v1791 = vpop.f32.mrb[0].mxu0
      %1792 = vmatprep.mubr.bf16.mxu0 0
      %1793 = vmatmul.mubr.bf16.gmra.mrb[0].mxu0 %v690
      %v1794 = vpop.f32.mrb[0].mxu0
      %v1795 = vadd.f32 0.0, %v1794
      %v1796 = vpop.f32.mrb[0].mxu0
      %v1797 = vpop.f32.mrb[0].mxu0
      %v1798 = vadd.f32 0.0, %v1797
      %v1799 = vpop.f32.mrb[0].mxu0
      %1800 = vmatprep.mubr.bf16.mxu0 0
      %1801 = vmatmul.mubr.bf16.gmra.mrb[0].mxu0 %v693
      %v1802 = vpop.f32.mrb[0].mxu0
      %v1803 = vadd.f32 0.0, %v1802
      %v1804 = vpop.f32.mrb[0].mxu0
      %v1805 = vpop.f32.mrb[0].mxu0
      %v1806 = vadd.f32 0.0, %v1805
      %v1807 = vpop.f32.mrb[0].mxu0
      %1808 = vmatprep.mubr.bf16.mxu0 0
      %1809 = vmatmul.mubr.bf16.gmra.mrb[0].mxu0 %v696
      %v1810 = vpop.f32.mrb[0].mxu0
      %v1811 = vadd.f32 0.0, %v1810
      %v1812 = vpop.f32.mrb[0].mxu0
      %v1813 = vpop.f32.mrb[0].mxu0
      %v1814 = vadd.f32 0.0, %v1813
      %v1815 = vpop.f32.mrb[0].mxu0
      %1816 = vmatprep.mubr.bf16.mxu0 0
      %1817 = vmatmul.mubr.bf16.gmra.mrb[0].mxu0 %v699
      %v1818 = vpop.f32.mrb[0].mxu0
      %v1819 = vadd.f32 0.0, %v1818
      %v1820 = vpop.f32.mrb[0].mxu0
      %v1821 = vpop.f32.mrb[0].mxu0
      %v1822 = vadd.f32 0.0, %v1821
      %v1823 = vpop.f32.mrb[0].mxu0
      %1824 = vmatprep.mubr.bf16.mxu0 0
      %1825 = vmatmul.mubr.bf16.gmra.mrb[0].mxu0 %v702
      %v1826 = vpop.f32.mrb[0].mxu0
      %v1827 = vadd.f32 0.0, %v1826
      %v1828 = vpop.f32.mrb[0].mxu0
      %v1829 = vpop.f32.mrb[0].mxu0
      %v1830 = vadd.f32 0.0, %v1829
      %v1831 = vpop.f32.mrb[0].mxu0
      %1832 = vmatprep.mubr.bf16.mxu0 0
      %1833 = vmatmul.mubr.bf16.gmra.mrb[0].mxu0 %v705
      %v1834 = vpop.f32.mrb[0].mxu0
      %v1835 = vadd.f32 0.0, %v1834
      %v1836 = vpop.f32.mrb[0].mxu0
      %v1837 = vpop.f32.mrb[0].mxu0
      %v1838 = vadd.f32 0.0, %v1837
      %v1839 = vpop.f32.mrb[0].mxu0
      %1840 = vmatprep.mubr.bf16.mxu0 0
      %1841 = vmatmul.mubr.bf16.gmra.mrb[0].mxu0 %v708
      %v1842 = vpop.f32.mrb[0].mxu0
      %v1843 = vadd.f32 0.0, %v1842
      %v1844 = vpop.f32.mrb[0].mxu0
      %v1845 = vpop.f32.mrb[0].mxu0
      %v1846 = vadd.f32 0.0, %v1845
      %v1847 = vpop.f32.mrb[0].mxu0
      %1848 = vmatprep.mubr.bf16.mxu0 0
      %1849 = vmatmul.mubr.bf16.gmra.mrb[0].mxu0 %v711
      %v1850 = vpop.f32.mrb[0].mxu0
      %v1851 = vadd.f32 0.0, %v1850
      %v1852 = vpop.f32.mrb[0].mxu0
      %v1853 = vpop.f32.mrb[0].mxu0
      %v1854 = vadd.f32 0.0, %v1853
      %v1855 = vpop.f32.mrb[0].mxu0
      %1856 = vmatprep.mubr.bf16.mxu0 0
      %1857 = vmatmul.mubr.bf16.gmra.mrb[0].mxu0 %v714
      %v1858 = vpop.f32.mrb[0].mxu0
      %v1859 = vadd.f32 0.0, %v1858
      %v1860 = vpop.f32.mrb[0].mxu0
      %v1861 = vpop.f32.mrb[0].mxu0
      %v1862 = vadd.f32 0.0, %v1861
      %v1863 = vpop.f32.mrb[0].mxu0
      %1864 = vmatprep.mubr.bf16.mxu0 0
      %1865 = vmatmul.mubr.bf16.gmra.mrb[0].mxu0 %v1122
      %v1866 = vpop.f32.mrb[0].mxu0
      %v1867 = vadd.f32 0.0, %v1866
      %v1868 = vpop.f32.mrb[0].mxu0
      %v1869 = vpop.f32.mrb[0].mxu0
      %v1870 = vadd.f32 0.0, %v1869
      %v1871 = vpop.f32.mrb[0].mxu0
      %1872 = vmatprep.mubr.bf16.mxu0 0
      %1873 = vmatmul.mubr.bf16.gmra.mrb[0].mxu0 %v714
      %v1874 = vpop.f32.mrb[0].mxu0
      %v1875 = vadd.f32 0.0, %v1874
      %v1876 = vpop.f32.mrb[0].mxu0
      %v1877 = vpop.f32.mrb[0].mxu0
      %v1878 = vadd.f32 0.0, %v1877
      %v1879 = vpop.f32.mrb[0].mxu0
      %1880 = vdwg.mxu0
      %v1881 = vadd.f32 %v1685, %v1755
      %v1882 = vadd.f32 %v1686, %v1758
      %v1883 = vadd.f32 %v1687, %v1763
      %v1884 = vadd.f32 %v1688, %v1766
      %v1885 = vadd.f32 %v1689, %v1771
      %v1886 = vadd.f32 %v1690, %v1774
      %v1887 = vadd.f32 %v1691, %v1779
      %v1888 = vadd.f32 %v1692, %v1782
      %v1889 = vadd.f32 %v1693, %v1787
      %v1890 = vadd.f32 %v1694, %v1790
      %v1891 = vadd.f32 %v1695, %v1795
      %v1892 = vadd.f32 %v1696, %v1798
      %v1893 = vadd.f32 %v1697, %v1803
      %v1894 = vadd.f32 %v1698, %v1806
      %v1895 = vadd.f32 %v1699, %v1811
      %v1896 = vadd.f32 %v1700, %v1814
      %v1897 = vadd.f32 %v1701, %v1819
      %v1898 = vadd.f32 %v1702, %v1822
      %v1899 = vadd.f32 %v1703, %v1827
      %v1900 = vadd.f32 %v1704, %v1830
      %v1901 = vadd.f32 %v1705, %v1835
      %v1902 = vadd.f32 %v1706, %v1838
      %v1903 = vadd.f32 %v1707, %v1843
      %v1904 = vadd.f32 %v1708, %v1846
      %v1905 = vadd.f32 %v1709, %v1851
      %v1906 = vadd.f32 %v1710, %v1854
      %v1907 = vadd.f32 %v1711, %v1859
      %v1908 = vadd.f32 %v1712, %v1862
      %v1909 = vadd.f32 %v1713, %v1867
      %v1910 = vadd.f32 %v1714, %v1870
      %v1911 = vadd.f32 %v1715, %v1875
      %v1912 = vadd.f32 %v1716, %v1878
      %v1914 = vsel %vm506, %v211, 0
      %1916 = vmatprep.subr.bf16.mxu0 0
      %1917 = vmatpush1.bf16.msra.mxu0 %v1914
      %1918 = vmatprep.subr.bf16.mxu0 0
      %1919 = vmatpush1.bf16.msra.mxu0 0
      %1920 = vmatprep.subr.bf16.mxu0 0
      %1921 = vmatpush1.bf16.msra.mxu0 0
      %1922 = vmatprep.subr.bf16.mxu0 0
      %1923 = vmatpush1.bf16.msra.mxu0 0
      %1924 = vmatprep.subr.bf16.mxu0 0
      %1925 = vmatpush1.bf16.msra.mxu0 0
      %1926 = vmatprep.subr.bf16.mxu0 0
      %1927 = vmatpush1.bf16.msra.mxu0 0
      %1928 = vmatprep.subr.bf16.mxu0 0
      %1929 = vmatpush1.bf16.msra.mxu0 0
      %1930 = vmatprep.subr.bf16.mxu0 0
      %1931 = vmatpush1.bf16.msra.mxu0 0
      %1932 = vmatprep.subr.bf16.mxu0 0
      %1933 = vmatpush1.bf16.msra.mxu0 0
      %1934 = vmatprep.subr.bf16.mxu0 0
      %1935 = vmatpush1.bf16.msra.mxu0 0
      %1936 = vmatprep.subr.bf16.mxu0 0
      %1937 = vmatpush1.bf16.msra.mxu0 0
      %1938 = vmatprep.subr.bf16.mxu0 0
      %1939 = vmatpush1.bf16.msra.mxu0 0
      %1940 = vmatprep.subr.bf16.mxu0 0
      %1941 = vmatpush1.bf16.msra.mxu0 0
      %1942 = vmatprep.subr.bf16.mxu0 0
      %1943 = vmatpush1.bf16.msra.mxu0 0
      %1944 = vmatprep.subr.bf16.mxu0 0
      %1945 = vmatpush1.bf16.msra.mxu0 0
      %1946 = vmatprep.subr.bf16.mxu0 0
      %1947 = vmatpush1.bf16.msra.mxu0 0
      %1948 = vmatprep.mubr.bf16.mxu0 0
      %1949 = vmatmul.mubr.bf16.gmra.mrb[0].mxu0 %v476
      %v1950 = vpop.f32.mrb[0].mxu0
      %v1951 = vadd.f32 0.0, %v1950
      %v1952 = vpop.f32.mrb[0].mxu0
      %v1953 = vpop.f32.mrb[0].mxu0
      %v1954 = vadd.f32 0.0, %v1953
      %v1955 = vpop.f32.mrb[0].mxu0
      %1956 = vmatprep.mubr.bf16.mxu0 0
      %1957 = vmatmul.mubr.bf16.gmra.mrb[0].mxu0 %v480
      %v1958 = vpop.f32.mrb[0].mxu0
      %v1959 = vadd.f32 0.0, %v1958
      %v1960 = vpop.f32.mrb[0].mxu0
      %v1961 = vpop.f32.mrb[0].mxu0
      %v1962 = vadd.f32 0.0, %v1961
      %v1963 = vpop.f32.mrb[0].mxu0
      %1964 = vmatprep.mubr.bf16.mxu0 0
      %1965 = vmatmul.mubr.bf16.gmra.mrb[0].mxu0 %v482
      %v1966 = vpop.f32.mrb[0].mxu0
      %v1967 = vadd.f32 0.0, %v1966
      %v1968 = vpop.f32.mrb[0].mxu0
      %v1969 = vpop.f32.mrb[0].mxu0
      %v1970 = vadd.f32 0.0, %v1969
      %v1971 = vpop.f32.mrb[0].mxu0
      %1972 = vmatprep.mubr.bf16.mxu0 0
      %1973 = vmatmul.mubr.bf16.gmra.mrb[0].mxu0 %v484
      %v1974 = vpop.f32.mrb[0].mxu0
      %v1975 = vadd.f32 0.0, %v1974
      %v1976 = vpop.f32.mrb[0].mxu0
      %v1977 = vpop.f32.mrb[0].mxu0
      %v1978 = vadd.f32 0.0, %v1977
      %v1979 = vpop.f32.mrb[0].mxu0
      %1980 = vmatprep.mubr.bf16.mxu0 0
      %1981 = vmatmul.mubr.bf16.gmra.mrb[0].mxu0 %v486
      %v1982 = vpop.f32.mrb[0].mxu0
      %v1983 = vadd.f32 0.0, %v1982
      %v1984 = vpop.f32.mrb[0].mxu0
      %v1985 = vpop.f32.mrb[0].mxu0
      %v1986 = vadd.f32 0.0, %v1985
      %v1987 = vpop.f32.mrb[0].mxu0
      %1988 = vmatprep.mubr.bf16.mxu0 0
      %1989 = vmatmul.mubr.bf16.gmra.mrb[0].mxu0 %v488
      %v1990 = vpop.f32.mrb[0].mxu0
      %v1991 = vadd.f32 0.0, %v1990
      %v1992 = vpop.f32.mrb[0].mxu0
      %v1993 = vpop.f32.mrb[0].mxu0
      %v1994 = vadd.f32 0.0, %v1993
      %v1995 = vpop.f32.mrb[0].mxu0
      %1996 = vmatprep.mubr.bf16.mxu0 0
      %1997 = vmatmul.mubr.bf16.gmra.mrb[0].mxu0 %v490
      %v1998 = vpop.f32.mrb[0].mxu0
      %v1999 = vadd.f32 0.0, %v1998
      %v2000 = vpop.f32.mrb[0].mxu0
      %v2001 = vpop.f32.mrb[0].mxu0
      %v2002 = vadd.f32 0.0, %v2001
      %v2003 = vpop.f32.mrb[0].mxu0
      %2004 = vmatprep.mubr.bf16.mxu0 0
      %2005 = vmatmul.mubr.bf16.gmra.mrb[0].mxu0 %v492
      %v2006 = vpop.f32.mrb[0].mxu0
      %v2007 = vadd.f32 0.0, %v2006
      %v2008 = vpop.f32.mrb[0].mxu0
      %v2009 = vpop.f32.mrb[0].mxu0
      %v2010 = vadd.f32 0.0, %v2009
      %v2011 = vpop.f32.mrb[0].mxu0
      %2012 = vmatprep.mubr.bf16.mxu0 0
      %2013 = vmatmul.mubr.bf16.gmra.mrb[0].mxu0 %v494
      %v2014 = vpop.f32.mrb[0].mxu0
      %v2015 = vadd.f32 0.0, %v2014
      %v2016 = vpop.f32.mrb[0].mxu0
      %v2017 = vpop.f32.mrb[0].mxu0
      %v2018 = vadd.f32 0.0, %v2017
      %v2019 = vpop.f32.mrb[0].mxu0
      %2020 = vmatprep.mubr.bf16.mxu0 0
      %2021 = vmatmul.mubr.bf16.gmra.mrb[0].mxu0 %v496
      %v2022 = vpop.f32.mrb[0].mxu0
      %v2023 = vadd.f32 0.0, %v2022
      %v2024 = vpop.f32.mrb[0].mxu0
      %v2025 = vpop.f32.mrb[0].mxu0
      %v2026 = vadd.f32 0.0, %v2025
      %v2027 = vpop.f32.mrb[0].mxu0
      %2028 = vmatprep.mubr.bf16.mxu0 0
      %2029 = vmatmul.mubr.bf16.gmra.mrb[0].mxu0 %v498
      %v2030 = vpop.f32.mrb[0].mxu0
      %v2031 = vadd.f32 0.0, %v2030
      %v2032 = vpop.f32.mrb[0].mxu0
      %v2033 = vpop.f32.mrb[0].mxu0
      %v2034 = vadd.f32 0.0, %v2033
      %v2035 = vpop.f32.mrb[0].mxu0
      %2036 = vmatprep.mubr.bf16.mxu0 0
      %2037 = vmatmul.mubr.bf16.gmra.mrb[0].mxu0 %v500
      %v2038 = vpop.f32.mrb[0].mxu0
      %v2039 = vadd.f32 0.0, %v2038
      %v2040 = vpop.f32.mrb[0].mxu0
      %v2041 = vpop.f32.mrb[0].mxu0
      %v2042 = vadd.f32 0.0, %v2041
      %v2043 = vpop.f32.mrb[0].mxu0
      %2044 = vmatprep.mubr.bf16.mxu0 0
      %2045 = vmatmul.mubr.bf16.gmra.mrb[0].mxu0 %v502
      %v2046 = vpop.f32.mrb[0].mxu0
      %v2047 = vadd.f32 0.0, %v2046
      %v2048 = vpop.f32.mrb[0].mxu0
      %v2049 = vpop.f32.mrb[0].mxu0
      %v2050 = vadd.f32 0.0, %v2049
      %v2051 = vpop.f32.mrb[0].mxu0
      %2052 = vmatprep.mubr.bf16.mxu0 0
      %2053 = vmatmul.mubr.bf16.gmra.mrb[0].mxu0 %v504
      %v2054 = vpop.f32.mrb[0].mxu0
      %v2055 = vadd.f32 0.0, %v2054
      %v2056 = vpop.f32.mrb[0].mxu0
      %v2057 = vpop.f32.mrb[0].mxu0
      %v2058 = vadd.f32 0.0, %v2057
      %v2059 = vpop.f32.mrb[0].mxu0
      %2060 = vmatprep.mubr.bf16.mxu0 0
      %2061 = vmatmul.mubr.bf16.gmra.mrb[0].mxu0 %v1320
      %v2062 = vpop.f32.mrb[0].mxu0
      %v2063 = vadd.f32 0.0, %v2062
      %v2064 = vpop.f32.mrb[0].mxu0
      %v2065 = vpop.f32.mrb[0].mxu0
      %v2066 = vadd.f32 0.0, %v2065
      %v2067 = vpop.f32.mrb[0].mxu0
      %2068 = vmatprep.mubr.bf16.mxu0 0
      %2069 = vmatmul.mubr.bf16.gmra.mrb[0].mxu0 %v504
      %v2070 = vpop.f32.mrb[0].mxu0
      %v2071 = vadd.f32 0.0, %v2070
      %v2072 = vpop.f32.mrb[0].mxu0
      %v2073 = vpop.f32.mrb[0].mxu0
      %v2074 = vadd.f32 0.0, %v2073
      %v2075 = vpop.f32.mrb[0].mxu0
      %2076 = vdwg.mxu0
      %v2077 = vadd.f32 %v1881, %v1951
      %v2078 = vadd.f32 %v1882, %v1954
      %v2079 = vadd.f32 %v1883, %v1959
      %v2080 = vadd.f32 %v1884, %v1962
      %v2081 = vadd.f32 %v1885, %v1967
      %v2082 = vadd.f32 %v1886, %v1970
      %v2083 = vadd.f32 %v1887, %v1975
      %v2084 = vadd.f32 %v1888, %v1978
      %v2085 = vadd.f32 %v1889, %v1983
      %v2086 = vadd.f32 %v1890, %v1986
      %v2087 = vadd.f32 %v1891, %v1991
      %v2088 = vadd.f32 %v1892, %v1994
      %v2089 = vadd.f32 %v1893, %v1999
      %v2090 = vadd.f32 %v1894, %v2002
      %v2091 = vadd.f32 %v1895, %v2007
      %v2092 = vadd.f32 %v1896, %v2010
      %v2093 = vadd.f32 %v1897, %v2015
      %v2094 = vadd.f32 %v1898, %v2018
      %v2095 = vadd.f32 %v1899, %v2023
      %v2096 = vadd.f32 %v1900, %v2026
      %v2097 = vadd.f32 %v1901, %v2031
      %v2098 = vadd.f32 %v1902, %v2034
      %v2099 = vadd.f32 %v1903, %v2039
      %v2100 = vadd.f32 %v1904, %v2042
      %v2101 = vadd.f32 %v1905, %v2047
      %v2102 = vadd.f32 %v1906, %v2050
      %v2103 = vadd.f32 %v1907, %v2055
      %v2104 = vadd.f32 %v1908, %v2058
      %v2105 = vadd.f32 %v1909, %v2063
      %v2106 = vadd.f32 %v1910, %v2066
      %v2107 = vadd.f32 %v1911, %v2071
      %v2108 = vadd.f32 %v1912, %v2074
      %v2110 = vsel %vm506, %v212, 0
      %2112 = vmatprep.subr.bf16.mxu0 0
      %2113 = vmatpush1.bf16.msra.mxu0 %v2110
      %2114 = vmatprep.subr.bf16.mxu0 0
      %2115 = vmatpush1.bf16.msra.mxu0 0
      %2116 = vmatprep.subr.bf16.mxu0 0
      %2117 = vmatpush1.bf16.msra.mxu0 0
      %2118 = vmatprep.subr.bf16.mxu0 0
      %2119 = vmatpush1.bf16.msra.mxu0 0
      %2120 = vmatprep.subr.bf16.mxu0 0
      %2121 = vmatpush1.bf16.msra.mxu0 0
      %2122 = vmatprep.subr.bf16.mxu0 0
      %2123 = vmatpush1.bf16.msra.mxu0 0
      %2124 = vmatprep.subr.bf16.mxu0 0
      %2125 = vmatpush1.bf16.msra.mxu0 0
      %2126 = vmatprep.subr.bf16.mxu0 0
      %2127 = vmatpush1.bf16.msra.mxu0 0
      %2128 = vmatprep.subr.bf16.mxu0 0
      %2129 = vmatpush1.bf16.msra.mxu0 0
      %2130 = vmatprep.subr.bf16.mxu0 0
      %2131 = vmatpush1.bf16.msra.mxu0 0
      %2132 = vmatprep.subr.bf16.mxu0 0
      %2133 = vmatpush1.bf16.msra.mxu0 0
      %2134 = vmatprep.subr.bf16.mxu0 0
      %2135 = vmatpush1.bf16.msra.mxu0 0
      %2136 = vmatprep.subr.bf16.mxu0 0
      %2137 = vmatpush1.bf16.msra.mxu0 0
      %2138 = vmatprep.subr.bf16.mxu0 0
      %2139 = vmatpush1.bf16.msra.mxu0 0
      %2140 = vmatprep.subr.bf16.mxu0 0
      %2141 = vmatpush1.bf16.msra.mxu0 0
      %2142 = vmatprep.subr.bf16.mxu0 0
      %2143 = vmatpush1.bf16.msra.mxu0 0
      %2144 = vmatprep.mubr.bf16.mxu0 0
      %2145 = vmatmul.mubr.bf16.gmra.mrb[0].mxu0 %v881
      %v2146 = vpop.f32.mrb[0].mxu0
      %v2147 = vadd.f32 0.0, %v2146
      %v2148 = vpop.f32.mrb[0].mxu0
      %v2149 = vpop.f32.mrb[0].mxu0
      %v2150 = vadd.f32 0.0, %v2149
      %v2151 = vpop.f32.mrb[0].mxu0
      %2152 = vmatprep.mubr.bf16.mxu0 0
      %2153 = vmatmul.mubr.bf16.gmra.mrb[0].mxu0 %v887
      %v2154 = vpop.f32.mrb[0].mxu0
      %v2155 = vadd.f32 0.0, %v2154
      %v2156 = vpop.f32.mrb[0].mxu0
      %v2157 = vpop.f32.mrb[0].mxu0
      %v2158 = vadd.f32 0.0, %v2157
      %v2159 = vpop.f32.mrb[0].mxu0
      %2160 = vmatprep.mubr.bf16.mxu0 0
      %2161 = vmatmul.mubr.bf16.gmra.mrb[0].mxu0 %v890
      %v2162 = vpop.f32.mrb[0].mxu0
      %v2163 = vadd.f32 0.0, %v2162
      %v2164 = vpop.f32.mrb[0].mxu0
      %v2165 = vpop.f32.mrb[0].mxu0
      %v2166 = vadd.f32 0.0, %v2165
      %v2167 = vpop.f32.mrb[0].mxu0
      %2168 = vmatprep.mubr.bf16.mxu0 0
      %2169 = vmatmul.mubr.bf16.gmra.mrb[0].mxu0 %v893
      %v2170 = vpop.f32.mrb[0].mxu0
      %v2171 = vadd.f32 0.0, %v2170
      %v2172 = vpop.f32.mrb[0].mxu0
      %v2173 = vpop.f32.mrb[0].mxu0
      %v2174 = vadd.f32 0.0, %v2173
      %v2175 = vpop.f32.mrb[0].mxu0
      %2176 = vmatprep.mubr.bf16.mxu0 0
      %2177 = vmatmul.mubr.bf16.gmra.mrb[0].mxu0 %v896
      %v2178 = vpop.f32.mrb[0].mxu0
      %v2179 = vadd.f32 0.0, %v2178
      %v2180 = vpop.f32.mrb[0].mxu0
      %v2181 = vpop.f32.mrb[0].mxu0
      %v2182 = vadd.f32 0.0, %v2181
      %v2183 = vpop.f32.mrb[0].mxu0
      %2184 = vmatprep.mubr.bf16.mxu0 0
      %2185 = vmatmul.mubr.bf16.gmra.mrb[0].mxu0 %v899
      %v2186 = vpop.f32.mrb[0].mxu0
      %v2187 = vadd.f32 0.0, %v2186
      %v2188 = vpop.f32.mrb[0].mxu0
      %v2189 = vpop.f32.mrb[0].mxu0
      %v2190 = vadd.f32 0.0, %v2189
      %v2191 = vpop.f32.mrb[0].mxu0
      %2192 = vmatprep.mubr.bf16.mxu0 0
      %2193 = vmatmul.mubr.bf16.gmra.mrb[0].mxu0 %v902
      %v2194 = vpop.f32.mrb[0].mxu0
      %v2195 = vadd.f32 0.0, %v2194
      %v2196 = vpop.f32.mrb[0].mxu0
      %v2197 = vpop.f32.mrb[0].mxu0
      %v2198 = vadd.f32 0.0, %v2197
      %v2199 = vpop.f32.mrb[0].mxu0
      %2200 = vmatprep.mubr.bf16.mxu0 0
      %2201 = vmatmul.mubr.bf16.gmra.mrb[0].mxu0 %v905
      %v2202 = vpop.f32.mrb[0].mxu0
      %v2203 = vadd.f32 0.0, %v2202
      %v2204 = vpop.f32.mrb[0].mxu0
      %v2205 = vpop.f32.mrb[0].mxu0
      %v2206 = vadd.f32 0.0, %v2205
      %v2207 = vpop.f32.mrb[0].mxu0
      %2208 = vmatprep.mubr.bf16.mxu0 0
      %2209 = vmatmul.mubr.bf16.gmra.mrb[0].mxu0 %v908
      %v2210 = vpop.f32.mrb[0].mxu0
      %v2211 = vadd.f32 0.0, %v2210
      %v2212 = vpop.f32.mrb[0].mxu0
      %v2213 = vpop.f32.mrb[0].mxu0
      %v2214 = vadd.f32 0.0, %v2213
      %v2215 = vpop.f32.mrb[0].mxu0
      %2216 = vmatprep.mubr.bf16.mxu0 0
      %2217 = vmatmul.mubr.bf16.gmra.mrb[0].mxu0 %v911
      %v2218 = vpop.f32.mrb[0].mxu0
      %v2219 = vadd.f32 0.0, %v2218
      %v2220 = vpop.f32.mrb[0].mxu0
      %v2221 = vpop.f32.mrb[0].mxu0
      %v2222 = vadd.f32 0.0, %v2221
      %v2223 = vpop.f32.mrb[0].mxu0
      %2224 = vmatprep.mubr.bf16.mxu0 0
      %2225 = vmatmul.mubr.bf16.gmra.mrb[0].mxu0 %v914
      %v2226 = vpop.f32.mrb[0].mxu0
      %v2227 = vadd.f32 0.0, %v2226
      %v2228 = vpop.f32.mrb[0].mxu0
      %v2229 = vpop.f32.mrb[0].mxu0
      %v2230 = vadd.f32 0.0, %v2229
      %v2231 = vpop.f32.mrb[0].mxu0
      %2232 = vmatprep.mubr.bf16.mxu0 0
      %2233 = vmatmul.mubr.bf16.gmra.mrb[0].mxu0 %v917
      %v2234 = vpop.f32.mrb[0].mxu0
      %v2235 = vadd.f32 0.0, %v2234
      %v2236 = vpop.f32.mrb[0].mxu0
      %v2237 = vpop.f32.mrb[0].mxu0
      %v2238 = vadd.f32 0.0, %v2237
      %v2239 = vpop.f32.mrb[0].mxu0
      %2240 = vmatprep.mubr.bf16.mxu0 0
      %2241 = vmatmul.mubr.bf16.gmra.mrb[0].mxu0 %v920
      %v2242 = vpop.f32.mrb[0].mxu0
      %v2243 = vadd.f32 0.0, %v2242
      %v2244 = vpop.f32.mrb[0].mxu0
      %v2245 = vpop.f32.mrb[0].mxu0
      %v2246 = vadd.f32 0.0, %v2245
      %v2247 = vpop.f32.mrb[0].mxu0
      %2248 = vmatprep.mubr.bf16.mxu0 0
      %2249 = vmatmul.mubr.bf16.gmra.mrb[0].mxu0 %v923
      %v2250 = vpop.f32.mrb[0].mxu0
      %v2251 = vadd.f32 0.0, %v2250
      %v2252 = vpop.f32.mrb[0].mxu0
      %v2253 = vpop.f32.mrb[0].mxu0
      %v2254 = vadd.f32 0.0, %v2253
      %v2255 = vpop.f32.mrb[0].mxu0
      %2256 = vmatprep.mubr.bf16.mxu0 0
      %2257 = vmatmul.mubr.bf16.gmra.mrb[0].mxu0 %v1519
      %v2258 = vpop.f32.mrb[0].mxu0
      %v2259 = vadd.f32 0.0, %v2258
      %v2260 = vpop.f32.mrb[0].mxu0
      %v2261 = vpop.f32.mrb[0].mxu0
      %v2262 = vadd.f32 0.0, %v2261
      %v2263 = vpop.f32.mrb[0].mxu0
      %2264 = vmatprep.mubr.bf16.mxu0 0
      %2265 = vmatmul.mubr.bf16.gmra.mrb[0].mxu0 %v923
      %v2266 = vpop.f32.mrb[0].mxu0
      %v2267 = vadd.f32 0.0, %v2266
      %v2268 = vpop.f32.mrb[0].mxu0
      %v2269 = vpop.f32.mrb[0].mxu0
      %v2270 = vadd.f32 0.0, %v2269
      %v2271 = vpop.f32.mrb[0].mxu0
      %2272 = vdwg.mxu0
      %v2273 = vadd.f32 %v2077, %v2147
      %v2274 = vadd.f32 %v2078, %v2150
      %v2275 = vadd.f32 %v2079, %v2155
      %v2276 = vadd.f32 %v2080, %v2158
      %v2277 = vadd.f32 %v2081, %v2163
      %v2278 = vadd.f32 %v2082, %v2166
      %v2279 = vadd.f32 %v2083, %v2171
      %v2280 = vadd.f32 %v2084, %v2174
      %v2281 = vadd.f32 %v2085, %v2179
      %v2282 = vadd.f32 %v2086, %v2182
      %v2283 = vadd.f32 %v2087, %v2187
      %v2284 = vadd.f32 %v2088, %v2190
      %v2285 = vadd.f32 %v2089, %v2195
      %v2286 = vadd.f32 %v2090, %v2198
      %v2287 = vadd.f32 %v2091, %v2203
      %v2288 = vadd.f32 %v2092, %v2206
      %v2289 = vadd.f32 %v2093, %v2211
      %v2290 = vadd.f32 %v2094, %v2214
      %v2291 = vadd.f32 %v2095, %v2219
      %v2292 = vadd.f32 %v2096, %v2222
      %v2293 = vadd.f32 %v2097, %v2227
      %v2294 = vadd.f32 %v2098, %v2230
      %v2295 = vadd.f32 %v2099, %v2235
      %v2296 = vadd.f32 %v2100, %v2238
      %v2297 = vadd.f32 %v2101, %v2243
      %v2298 = vadd.f32 %v2102, %v2246
      %v2299 = vadd.f32 %v2103, %v2251
      %v2300 = vadd.f32 %v2104, %v2254
      %v2301 = vadd.f32 %v2105, %v2259
      %v2302 = vadd.f32 %v2106, %v2262
      %v2303 = vadd.f32 %v2107, %v2267
      %v2304 = vadd.f32 %v2108, %v2270
      %v2305 = vsel %vm475, %v2273, 0.0
      %v2306 = vsel %vm475, %v2274, 0.0
      %v2307 = vadd.f32 %v2305, %v2306
      %v2308 = vsel %vm475, %v2275, 0.0
      %v2309 = vadd.f32 %v2307, %v2308
      %v2310 = vsel %vm475, %v2276, 0.0
      %v2311 = vadd.f32 %v2309, %v2310
      %v2312 = vsel %vm475, %v2277, 0.0
      %v2313 = vadd.f32 %v2311, %v2312
      %v2314 = vsel %vm475, %v2278, 0.0
      %v2315 = vadd.f32 %v2313, %v2314
      %v2316 = vsel %vm475, %v2279, 0.0
      %v2317 = vadd.f32 %v2315, %v2316
      %v2318 = vsel %vm475, %v2280, 0.0
      %v2319 = vadd.f32 %v2317, %v2318
      %v2320 = vsel %vm475, %v2281, 0.0
      %v2321 = vadd.f32 %v2319, %v2320
      %v2322 = vsel %vm475, %v2282, 0.0
      %v2323 = vadd.f32 %v2321, %v2322
      %v2324 = vsel %vm475, %v2283, 0.0
      %v2325 = vadd.f32 %v2323, %v2324
      %v2326 = vsel %vm475, %v2284, 0.0
      %v2327 = vadd.f32 %v2325, %v2326
      %v2328 = vsel %vm475, %v2285, 0.0
      %v2329 = vadd.f32 %v2327, %v2328
      %v2330 = vsel %vm475, %v2286, 0.0
      %v2331 = vadd.f32 %v2329, %v2330
      %v2332 = vsel %vm475, %v2287, 0.0
      %v2333 = vadd.f32 %v2331, %v2332
      %v2334 = vsel %vm475, %v2288, 0.0
      %v2335 = vadd.f32 %v2333, %v2334
      %v2336 = vsel %vm475, %v2289, 0.0
      %v2337 = vadd.f32 %v2335, %v2336
      %v2338 = vsel %vm475, %v2290, 0.0
      %v2339 = vadd.f32 %v2337, %v2338
      %v2340 = vsel %vm475, %v2291, 0.0
      %v2341 = vadd.f32 %v2339, %v2340
      %v2342 = vsel %vm475, %v2292, 0.0
      %v2343 = vadd.f32 %v2341, %v2342
      %v2344 = vsel %vm475, %v2293, 0.0
      %v2345 = vadd.f32 %v2343, %v2344
      %v2346 = vsel %vm475, %v2294, 0.0
      %v2347 = vadd.f32 %v2345, %v2346
      %v2348 = vsel %vm475, %v2295, 0.0
      %v2349 = vadd.f32 %v2347, %v2348
      %v2350 = vsel %vm475, %v2296, 0.0
      %v2351 = vadd.f32 %v2349, %v2350
      %v2352 = vsel %vm475, %v2297, 0.0
      %v2353 = vadd.f32 %v2351, %v2352
      %v2354 = vsel %vm475, %v2298, 0.0
      %v2355 = vadd.f32 %v2353, %v2354
      %v2356 = vsel %vm475, %v2299, 0.0
      %v2357 = vadd.f32 %v2355, %v2356
      %v2358 = vsel %vm475, %v2300, 0.0
      %v2359 = vadd.f32 %v2357, %v2358
      %v2360 = vsel %vm475, %v2301, 0.0
      %v2361 = vadd.f32 %v2359, %v2360
      %v2362 = vsel %vm475, %v2302, 0.0
      %v2363 = vadd.f32 %v2361, %v2362
      %v2364 = vsel %vm475, %v2303, 0.0
      %v2365 = vadd.f32 %v2363, %v2364
      %v2366 = vsel %vm475, %v2304, 0.0
      %v2367 = vadd.f32 %v2365, %v2366
      %v2368 = vrot.slane %v2367, 4
      %v2369 = vadd.f32 %v2367, %v2368
      %v2370 = vrot.slane %v2369, 2
      %v2371 = vadd.f32 %v2369, %v2370
      %v2372 = vrot.slane %v2371, 1
      %v2373 = vadd.f32 %v2371, %v2372
      %v2374 = vmul.f32 %v2373, 0.00390625
      %v2375 = vmul.f32 %v2273, %v2273
      %v2376 = vmul.f32 %v2274, %v2274
      %v2377 = vmul.f32 %v2275, %v2275
      %v2378 = vmul.f32 %v2276, %v2276
      %v2379 = vmul.f32 %v2277, %v2277
      %v2380 = vmul.f32 %v2278, %v2278
      %v2381 = vmul.f32 %v2279, %v2279
      %v2382 = vmul.f32 %v2280, %v2280
      %v2383 = vmul.f32 %v2281, %v2281
      %v2384 = vmul.f32 %v2282, %v2282
      %v2385 = vmul.f32 %v2283, %v2283
      %v2386 = vmul.f32 %v2284, %v2284
      %v2387 = vmul.f32 %v2285, %v2285
      %v2388 = vmul.f32 %v2286, %v2286
      %v2389 = vmul.f32 %v2287, %v2287
      %v2390 = vmul.f32 %v2288, %v2288
      %v2391 = vmul.f32 %v2289, %v2289
      %v2392 = vmul.f32 %v2290, %v2290
      %v2393 = vmul.f32 %v2291, %v2291
      %v2394 = vmul.f32 %v2292, %v2292
      %v2395 = vmul.f32 %v2293, %v2293
      %v2396 = vmul.f32 %v2294, %v2294
      %v2397 = vmul.f32 %v2295, %v2295
      %v2398 = vmul.f32 %v2296, %v2296
      %v2399 = vmul.f32 %v2297, %v2297
      %v2400 = vmul.f32 %v2298, %v2298
      %v2401 = vmul.f32 %v2299, %v2299
      %v2402 = vmul.f32 %v2300, %v2300
      %v2403 = vmul.f32 %v2301, %v2301
      %v2404 = vmul.f32 %v2302, %v2302
      %v2405 = vmul.f32 %v2303, %v2303
      %v2406 = vmul.f32 %v2304, %v2304
      %v2407 = vsel %vm475, %v2375, 0.0
      %v2408 = vsel %vm475, %v2376, 0.0
      %v2409 = vadd.f32 %v2407, %v2408
      %v2410 = vsel %vm475, %v2377, 0.0
      %v2411 = vadd.f32 %v2409, %v2410
      %v2412 = vsel %vm475, %v2378, 0.0
      %v2413 = vadd.f32 %v2411, %v2412
      %v2414 = vsel %vm475, %v2379, 0.0
      %v2415 = vadd.f32 %v2413, %v2414
      %v2416 = vsel %vm475, %v2380, 0.0
      %v2417 = vadd.f32 %v2415, %v2416
      %v2418 = vsel %vm475, %v2381, 0.0
      %v2419 = vadd.f32 %v2417, %v2418
      %v2420 = vsel %vm475, %v2382, 0.0
      %v2421 = vadd.f32 %v2419, %v2420
      %v2422 = vsel %vm475, %v2383, 0.0
      %v2423 = vadd.f32 %v2421, %v2422
      %v2424 = vsel %vm475, %v2384, 0.0
      %v2425 = vadd.f32 %v2423, %v2424
      %v2426 = vsel %vm475, %v2385, 0.0
      %v2427 = vadd.f32 %v2425, %v2426
      %v2428 = vsel %vm475, %v2386, 0.0
      %v2429 = vadd.f32 %v2427, %v2428
      %v2430 = vsel %vm475, %v2387, 0.0
      %v2431 = vadd.f32 %v2429, %v2430
      %v2432 = vsel %vm475, %v2388, 0.0
      %v2433 = vadd.f32 %v2431, %v2432
      %v2434 = vsel %vm475, %v2389, 0.0
      %v2435 = vadd.f32 %v2433, %v2434
      %v2436 = vsel %vm475, %v2390, 0.0
      %v2437 = vadd.f32 %v2435, %v2436
      %v2438 = vsel %vm475, %v2391, 0.0
      %v2439 = vadd.f32 %v2437, %v2438
      %v2440 = vsel %vm475, %v2392, 0.0
      %v2441 = vadd.f32 %v2439, %v2440
      %v2442 = vsel %vm475, %v2393, 0.0
      %v2443 = vadd.f32 %v2441, %v2442
      %v2444 = vsel %vm475, %v2394, 0.0
      %v2445 = vadd.f32 %v2443, %v2444
      %v2446 = vsel %vm475, %v2395, 0.0
      %v2447 = vadd.f32 %v2445, %v2446
      %v2448 = vsel %vm475, %v2396, 0.0
      %v2449 = vadd.f32 %v2447, %v2448
      %v2450 = vsel %vm475, %v2397, 0.0
      %v2451 = vadd.f32 %v2449, %v2450
      %v2452 = vsel %vm475, %v2398, 0.0
      %v2453 = vadd.f32 %v2451, %v2452
      %v2454 = vsel %vm475, %v2399, 0.0
      %v2455 = vadd.f32 %v2453, %v2454
      %v2456 = vsel %vm475, %v2400, 0.0
      %v2457 = vadd.f32 %v2455, %v2456
      %v2458 = vsel %vm475, %v2401, 0.0
      %v2459 = vadd.f32 %v2457, %v2458
      %v2460 = vsel %vm475, %v2402, 0.0
      %v2461 = vadd.f32 %v2459, %v2460
      %v2462 = vsel %vm475, %v2403, 0.0
      %v2463 = vadd.f32 %v2461, %v2462
      %v2464 = vsel %vm475, %v2404, 0.0
      %v2465 = vadd.f32 %v2463, %v2464
      %v2466 = vsel %vm475, %v2405, 0.0
      %v2467 = vadd.f32 %v2465, %v2466
      %v2468 = vsel %vm475, %v2406, 0.0
      %v2469 = vadd.f32 %v2467, %v2468
      %v2470 = vrot.slane %v2469, 4
      %v2471 = vadd.f32 %v2469, %v2470
      %v2472 = vrot.slane %v2471, 2
      %v2473 = vadd.f32 %v2471, %v2472
      %v2474 = vrot.slane %v2473, 1
      %v2475 = vadd.f32 %v2473, %v2474
      %v2476 = vmul.f32 %v2475, 0.00390625
      %v2477 = vmul.f32 %v2374, %v2374
      %v2478 = vsub.f32 %v2476, %v2477
      %v2479 = vmax.f32 %v2478, 0.0
      %v2480 = vsub.f32 %v2273, %v2374
      %v2481 = vsub.f32 %v2274, %v2374
      %v2482 = vsub.f32 %v2275, %v2374
      %v2483 = vsub.f32 %v2276, %v2374
      %v2484 = vsub.f32 %v2277, %v2374
      %v2485 = vsub.f32 %v2278, %v2374
      %v2486 = vsub.f32 %v2279, %v2374
      %v2487 = vsub.f32 %v2280, %v2374
      %v2488 = vsub.f32 %v2281, %v2374
      %v2489 = vsub.f32 %v2282, %v2374
      %v2490 = vsub.f32 %v2283, %v2374
      %v2491 = vsub.f32 %v2284, %v2374
      %v2492 = vsub.f32 %v2285, %v2374
      %v2493 = vsub.f32 %v2286, %v2374
      %v2494 = vsub.f32 %v2287, %v2374
      %v2495 = vsub.f32 %v2288, %v2374
      %v2496 = vsub.f32 %v2289, %v2374
      %v2497 = vsub.f32 %v2290, %v2374
      %v2498 = vsub.f32 %v2291, %v2374
      %v2499 = vsub.f32 %v2292, %v2374
      %v2500 = vsub.f32 %v2293, %v2374
      %v2501 = vsub.f32 %v2294, %v2374
      %v2502 = vsub.f32 %v2295, %v2374
      %v2503 = vsub.f32 %v2296, %v2374
      %v2504 = vsub.f32 %v2297, %v2374
      %v2505 = vsub.f32 %v2298, %v2374
      %v2506 = vsub.f32 %v2299, %v2374
      %v2507 = vsub.f32 %v2300, %v2374
      %v2508 = vsub.f32 %v2301, %v2374
      %v2509 = vsub.f32 %v2302, %v2374
      %v2510 = vsub.f32 %v2303, %v2374
      %v2511 = vsub.f32 %v2304, %v2374
      %v2512 = vadd.f32 %v2479, 1e-05
      %v2513 = vrsqrt.pop %v2512
      %v2514 = vmul.f32 %v2480, %v2513
      %v2515 = vmul.f32 %v2481, %v2513
      %v2516 = vmul.f32 %v2482, %v2513
      %v2517 = vmul.f32 %v2483, %v2513
      %v2518 = vmul.f32 %v2484, %v2513
      %v2519 = vmul.f32 %v2485, %v2513
      %v2520 = vmul.f32 %v2486, %v2513
      %v2521 = vmul.f32 %v2487, %v2513
      %v2522 = vmul.f32 %v2488, %v2513
      %v2523 = vmul.f32 %v2489, %v2513
      %v2524 = vmul.f32 %v2490, %v2513
      %v2525 = vmul.f32 %v2491, %v2513
      %v2526 = vmul.f32 %v2492, %v2513
      %v2527 = vmul.f32 %v2493, %v2513
      %v2528 = vmul.f32 %v2494, %v2513
      %v2529 = vmul.f32 %v2495, %v2513
      %v2530 = vmul.f32 %v2496, %v2513
      %v2531 = vmul.f32 %v2497, %v2513
      %v2532 = vmul.f32 %v2498, %v2513
      %v2533 = vmul.f32 %v2499, %v2513
      %v2534 = vmul.f32 %v2500, %v2513
      %v2535 = vmul.f32 %v2501, %v2513
      %v2536 = vmul.f32 %v2502, %v2513
      %v2537 = vmul.f32 %v2503, %v2513
      %v2538 = vmul.f32 %v2504, %v2513
      %v2539 = vmul.f32 %v2505, %v2513
      %v2540 = vmul.f32 %v2506, %v2513
      %v2541 = vmul.f32 %v2507, %v2513
      %v2542 = vmul.f32 %v2508, %v2513
      %v2543 = vmul.f32 %v2509, %v2513
      %v2544 = vmul.f32 %v2510, %v2513
      %v2545 = vmul.f32 %v2511, %v2513
      %v2546 = vmax.f32 %v2514, 0.0
      %v2547 = vmax.f32 %v2515, 0.0
      %v2548 = vmax.f32 %v2516, 0.0
      %v2549 = vmax.f32 %v2517, 0.0
      %v2550 = vmax.f32 %v2518, 0.0
      %v2551 = vmax.f32 %v2519, 0.0
      %v2552 = vmax.f32 %v2520, 0.0
      %v2553 = vmax.f32 %v2521, 0.0
      %v2554 = vmax.f32 %v2522, 0.0
      %v2555 = vmax.f32 %v2523, 0.0
      %v2556 = vmax.f32 %v2524, 0.0
      %v2557 = vmax.f32 %v2525, 0.0
      %v2558 = vmax.f32 %v2526, 0.0
      %v2559 = vmax.f32 %v2527, 0.0
      %v2560 = vmax.f32 %v2528, 0.0
      %v2561 = vmax.f32 %v2529, 0.0
      %v2562 = vmax.f32 %v2530, 0.0
      %v2563 = vmax.f32 %v2531, 0.0
      %v2564 = vmax.f32 %v2532, 0.0
      %v2565 = vmax.f32 %v2533, 0.0
      %v2566 = vmax.f32 %v2534, 0.0
      %v2567 = vmax.f32 %v2535, 0.0
      %v2568 = vmax.f32 %v2536, 0.0
      %v2569 = vmax.f32 %v2537, 0.0
      %v2570 = vmax.f32 %v2538, 0.0
      %v2571 = vmax.f32 %v2539, 0.0
      %v2572 = vmax.f32 %v2540, 0.0
      %v2573 = vmax.f32 %v2541, 0.0
      %v2574 = vmax.f32 %v2542, 0.0
      %v2575 = vmax.f32 %v2543, 0.0
      %v2576 = vmax.f32 %v2544, 0.0
      %v2577 = vmax.f32 %v2545, 0.0
      %v2578 = vld [vmem:[%s2] sm:$0x3]
      %v2579 = vld [vmem:[%s2 + $0x2] sm:$0x3]
      %v2580 = vld [vmem:[%s2 + $0x4] sm:$0x3]
      %v2581 = vld [vmem:[%s2 + $0x6] sm:$0x3]
      %v2582 = vld [vmem:[%s2 + $0x8] sm:$0x3]
      %v2583 = vld [vmem:[%s2 + $0xa] sm:$0x3]
      %v2584 = vld [vmem:[%s2 + $0xc] sm:$0x3]
      %v2585 = vld [vmem:[%s2 + $0xe] sm:$0x3]
      %v2586 = vld [vmem:[%s2 + $0x10] sm:$0x3]
      %v2587 = vpack.c.bf16 %v2547, %v2546
      %v2588 = vpack.c.bf16 %v2549, %v2548
      %v2589 = vpack.c.bf16 %v2551, %v2550
      %v2590 = vpack.c.bf16 %v2553, %v2552
      %v2591 = vpack.c.bf16 %v2555, %v2554
      %v2592 = vpack.c.bf16 %v2557, %v2556
      %v2593 = vpack.c.bf16 %v2559, %v2558
      %v2594 = vpack.c.bf16 %v2561, %v2560
      %v2595 = vpack.c.bf16 %v2563, %v2562
      %v2596 = vpack.c.bf16 %v2565, %v2564
      %v2597 = vpack.c.bf16 %v2567, %v2566
      %v2598 = vpack.c.bf16 %v2569, %v2568
      %v2599 = vpack.c.bf16 %v2571, %v2570
      %v2600 = vpack.c.bf16 %v2573, %v2572
      %v2601 = vpack.c.bf16 %v2575, %v2574
      %v2602 = vpack.c.bf16 %v2577, %v2576
      %v2604 = vshrl.u32 %v2588, 16
      %v2607 = vshrl.u32 %v2587, 16
      %v2610 = vshrl.u32 %v2589, 16
      %v2613 = vshrl.u32 %v2590, 16
      %v2616 = vshrl.u32 %v2591, 16
      %v2619 = vshrl.u32 %v2592, 16
      %v2622 = vshrl.u32 %v2593, 16
      %v2625 = vshrl.u32 %v2594, 16
      %v2628 = vshrl.u32 %v2595, 16
      %v2631 = vshrl.u32 %v2596, 16
      %v2634 = vshrl.u32 %v2597, 16
      %v2637 = vshrl.u32 %v2598, 16
      %v2640 = vshrl.u32 %v2599, 16
      %v2643 = vshrl.u32 %v2600, 16
      %v2646 = vshrl.u32 %v2601, 16
      %v2649 = vshrl.u32 %v2602, 16
      %v2667 = vrot.slane %v2604, 7
      %v2668 = vshll.u32 %v2588, 16
      %v2670 = vor.u32 %v2667, %v2668
      %v2671 = vrot.slane %v2607, 7
      %v2672 = vshll.u32 %v2587, 16
      %v2674 = vor.u32 %v2671, %v2672
      %v2675 = vrot.slane %v2610, 7
      %v2676 = vshll.u32 %v2589, 16
      %v2678 = vor.u32 %v2675, %v2676
      %v2679 = vrot.slane %v2613, 7
      %v2680 = vshll.u32 %v2590, 16
      %v2682 = vor.u32 %v2679, %v2680
      %v2683 = vrot.slane %v2616, 7
      %v2684 = vshll.u32 %v2591, 16
      %v2686 = vor.u32 %v2683, %v2684
      %v2687 = vrot.slane %v2619, 7
      %v2688 = vshll.u32 %v2592, 16
      %v2690 = vor.u32 %v2687, %v2688
      %v2691 = vrot.slane %v2622, 7
      %v2692 = vshll.u32 %v2593, 16
      %v2694 = vor.u32 %v2691, %v2692
      %v2695 = vrot.slane %v2625, 7
      %v2696 = vshll.u32 %v2594, 16
      %v2698 = vor.u32 %v2695, %v2696
      %v2699 = vrot.slane %v2628, 7
      %v2700 = vshll.u32 %v2595, 16
      %v2702 = vor.u32 %v2699, %v2700
      %v2703 = vrot.slane %v2631, 7
      %v2704 = vshll.u32 %v2596, 16
      %v2706 = vor.u32 %v2703, %v2704
      %v2707 = vrot.slane %v2634, 7
      %v2708 = vshll.u32 %v2597, 16
      %v2710 = vor.u32 %v2707, %v2708
      %v2711 = vrot.slane %v2637, 7
      %v2712 = vshll.u32 %v2598, 16
      %v2714 = vor.u32 %v2711, %v2712
      %v2715 = vrot.slane %v2640, 7
      %v2716 = vshll.u32 %v2599, 16
      %v2718 = vor.u32 %v2715, %v2716
      %v2719 = vrot.slane %v2643, 7
      %v2720 = vshll.u32 %v2600, 16
      %v2722 = vor.u32 %v2719, %v2720
      %v2723 = vrot.slane %v2646, 7
      %v2724 = vshll.u32 %v2601, 16
      %v2726 = vor.u32 %v2723, %v2724
      %v2727 = vrot.slane %v2649, 7
      %v2728 = vshll.u32 %v2602, 16
      %v2730 = vor.u32 %v2727, %v2728
      %v2747 = vsel %vm375, %v2604, %v2670
      %v2748 = vsel %vm375, %v2607, %v2674
      %v2749 = vsel %vm375, %v2610, %v2678
      %v2750 = vsel %vm375, %v2613, %v2682
      %v2751 = vsel %vm375, %v2616, %v2686
      %v2752 = vsel %vm375, %v2619, %v2690
      %v2753 = vsel %vm375, %v2622, %v2694
      %v2754 = vsel %vm375, %v2625, %v2698
      %v2755 = vsel %vm375, %v2628, %v2702
      %v2756 = vsel %vm375, %v2631, %v2706
      %v2757 = vsel %vm375, %v2634, %v2710
      %v2758 = vsel %vm375, %v2637, %v2714
      %v2759 = vsel %vm375, %v2640, %v2718
      %v2760 = vsel %vm375, %v2643, %v2722
      %v2761 = vsel %vm375, %v2646, %v2726
      %v2762 = vsel %vm375, %v2649, %v2730
      %v2763 = vrot.slane %v2668, 1
      %v2764 = vor.u32 %v2604, %v2763
      %v2765 = vrot.slane %v2672, 1
      %v2766 = vor.u32 %v2607, %v2765
      %v2767 = vrot.slane %v2676, 1
      %v2768 = vor.u32 %v2610, %v2767
      %v2769 = vrot.slane %v2680, 1
      %v2770 = vor.u32 %v2613, %v2769
      %v2771 = vrot.slane %v2684, 1
      %v2772 = vor.u32 %v2616, %v2771
      %v2773 = vrot.slane %v2688, 1
      %v2774 = vor.u32 %v2619, %v2773
      %v2775 = vrot.slane %v2692, 1
      %v2776 = vor.u32 %v2622, %v2775
      %v2777 = vrot.slane %v2696, 1
      %v2778 = vor.u32 %v2625, %v2777
      %v2779 = vrot.slane %v2700, 1
      %v2780 = vor.u32 %v2628, %v2779
      %v2781 = vrot.slane %v2704, 1
      %v2782 = vor.u32 %v2631, %v2781
      %v2783 = vrot.slane %v2708, 1
      %v2784 = vor.u32 %v2634, %v2783
      %v2785 = vrot.slane %v2712, 1
      %v2786 = vor.u32 %v2637, %v2785
      %v2787 = vrot.slane %v2716, 1
      %v2788 = vor.u32 %v2640, %v2787
      %v2789 = vrot.slane %v2720, 1
      %v2790 = vor.u32 %v2643, %v2789
      %v2791 = vrot.slane %v2724, 1
      %v2792 = vor.u32 %v2646, %v2791
      %v2793 = vrot.slane %v2728, 1
      %v2794 = vor.u32 %v2649, %v2793
      %v2827 = vsel %vm458, %v2764, %v2668
      %v2828 = vsel %vm458, %v2766, %v2672
      %v2829 = vsel %vm458, %v2768, %v2676
      %v2830 = vsel %vm458, %v2770, %v2680
      %v2831 = vsel %vm458, %v2772, %v2684
      %v2832 = vsel %vm458, %v2774, %v2688
      %v2833 = vsel %vm458, %v2776, %v2692
      %v2834 = vsel %vm458, %v2778, %v2696
      %v2835 = vsel %vm458, %v2780, %v2700
      %v2836 = vsel %vm458, %v2782, %v2704
      %v2837 = vsel %vm458, %v2784, %v2708
      %v2838 = vsel %vm458, %v2786, %v2712
      %v2839 = vsel %vm458, %v2788, %v2716
      %v2840 = vsel %vm458, %v2790, %v2720
      %v2841 = vsel %vm458, %v2792, %v2724
      %v2842 = vsel %vm458, %v2794, %v2728
      %v2843 = vsel %vm475, %v2588, 0
      %v2845 = vsel %vm475, %v2587, 0
      %v2847 = vsel %vm475, %v2589, 0
      %v2849 = vsel %vm475, %v2590, 0
      %v2851 = vsel %vm475, %v2591, 0
      %v2853 = vsel %vm475, %v2592, 0
      %v2855 = vsel %vm475, %v2593, 0
      %v2857 = vsel %vm475, %v2594, 0
      %v2859 = vsel %vm475, %v2595, 0
      %v2861 = vsel %vm475, %v2596, 0
      %v2863 = vsel %vm475, %v2597, 0
      %v2865 = vsel %vm475, %v2598, 0
      %v2867 = vsel %vm475, %v2599, 0
      %v2869 = vsel %vm475, %v2600, 0
      %v2871 = vsel %vm475, %v2601, 0
      %v2874 = vsel %vm506, %v2579, 0
      %2876 = vmatprep.subr.bf16.mxu0 0
      %2877 = vmatpush1.bf16.msra.mxu0 %v2874
      %2878 = vmatprep.subr.bf16.mxu0 0
      %2879 = vmatpush1.bf16.msra.mxu0 0
      %2880 = vmatprep.subr.bf16.mxu0 0
      %2881 = vmatpush1.bf16.msra.mxu0 0
      %2882 = vmatprep.subr.bf16.mxu0 0
      %2883 = vmatpush1.bf16.msra.mxu0 0
      %2884 = vmatprep.subr.bf16.mxu0 0
      %2885 = vmatpush1.bf16.msra.mxu0 0
      %2886 = vmatprep.subr.bf16.mxu0 0
      %2887 = vmatpush1.bf16.msra.mxu0 0
      %2888 = vmatprep.subr.bf16.mxu0 0
      %2889 = vmatpush1.bf16.msra.mxu0 0
      %2890 = vmatprep.subr.bf16.mxu0 0
      %2891 = vmatpush1.bf16.msra.mxu0 0
      %2892 = vmatprep.subr.bf16.mxu0 0
      %2893 = vmatpush1.bf16.msra.mxu0 0
      %2894 = vmatprep.subr.bf16.mxu0 0
      %2895 = vmatpush1.bf16.msra.mxu0 0
      %2896 = vmatprep.subr.bf16.mxu0 0
      %2897 = vmatpush1.bf16.msra.mxu0 0
      %2898 = vmatprep.subr.bf16.mxu0 0
      %2899 = vmatpush1.bf16.msra.mxu0 0
      %2900 = vmatprep.subr.bf16.mxu0 0
      %2901 = vmatpush1.bf16.msra.mxu0 0
      %2902 = vmatprep.subr.bf16.mxu0 0
      %2903 = vmatpush1.bf16.msra.mxu0 0
      %2904 = vmatprep.subr.bf16.mxu0 0
      %2905 = vmatpush1.bf16.msra.mxu0 0
      %2906 = vmatprep.subr.bf16.mxu0 0
      %2907 = vmatpush1.bf16.msra.mxu0 0
      %2908 = vmatprep.mubr.bf16.mxu0 0
      %2909 = vmatmul.mubr.bf16.gmra.mrb[0].mxu0 %v2843
      %v2910 = vpop.f32.mrb[0].mxu0
      %v2911 = vadd.f32 0.0, %v2910
      %v2912 = vpop.f32.mrb[0].mxu0
      %v2913 = vpop.f32.mrb[0].mxu0
      %v2914 = vadd.f32 0.0, %v2913
      %v2915 = vpop.f32.mrb[0].mxu0
      %2916 = vmatprep.mubr.bf16.mxu0 0
      %2917 = vmatmul.mubr.bf16.gmra.mrb[0].mxu0 %v2845
      %v2918 = vpop.f32.mrb[0].mxu0
      %v2919 = vadd.f32 0.0, %v2918
      %v2920 = vpop.f32.mrb[0].mxu0
      %v2921 = vpop.f32.mrb[0].mxu0
      %v2922 = vadd.f32 0.0, %v2921
      %v2923 = vpop.f32.mrb[0].mxu0
      %2924 = vmatprep.mubr.bf16.mxu0 0
      %2925 = vmatmul.mubr.bf16.gmra.mrb[0].mxu0 %v2843
      %v2926 = vpop.f32.mrb[0].mxu0
      %v2927 = vadd.f32 0.0, %v2926
      %v2928 = vpop.f32.mrb[0].mxu0
      %v2929 = vpop.f32.mrb[0].mxu0
      %v2930 = vadd.f32 0.0, %v2929
      %v2931 = vpop.f32.mrb[0].mxu0
      %2932 = vmatprep.mubr.bf16.mxu0 0
      %2933 = vmatmul.mubr.bf16.gmra.mrb[0].mxu0 %v2847
      %v2934 = vpop.f32.mrb[0].mxu0
      %v2935 = vadd.f32 0.0, %v2934
      %v2936 = vpop.f32.mrb[0].mxu0
      %v2937 = vpop.f32.mrb[0].mxu0
      %v2938 = vadd.f32 0.0, %v2937
      %v2939 = vpop.f32.mrb[0].mxu0
      %2940 = vmatprep.mubr.bf16.mxu0 0
      %2941 = vmatmul.mubr.bf16.gmra.mrb[0].mxu0 %v2849
      %v2942 = vpop.f32.mrb[0].mxu0
      %v2943 = vadd.f32 0.0, %v2942
      %v2944 = vpop.f32.mrb[0].mxu0
      %v2945 = vpop.f32.mrb[0].mxu0
      %v2946 = vadd.f32 0.0, %v2945
      %v2947 = vpop.f32.mrb[0].mxu0
      %2948 = vmatprep.mubr.bf16.mxu0 0
      %2949 = vmatmul.mubr.bf16.gmra.mrb[0].mxu0 %v2851
      %v2950 = vpop.f32.mrb[0].mxu0
      %v2951 = vadd.f32 0.0, %v2950
      %v2952 = vpop.f32.mrb[0].mxu0
      %v2953 = vpop.f32.mrb[0].mxu0
      %v2954 = vadd.f32 0.0, %v2953
      %v2955 = vpop.f32.mrb[0].mxu0
      %2956 = vmatprep.mubr.bf16.mxu0 0
      %2957 = vmatmul.mubr.bf16.gmra.mrb[0].mxu0 %v2853
      %v2958 = vpop.f32.mrb[0].mxu0
      %v2959 = vadd.f32 0.0, %v2958
      %v2960 = vpop.f32.mrb[0].mxu0
      %v2961 = vpop.f32.mrb[0].mxu0
      %v2962 = vadd.f32 0.0, %v2961
      %v2963 = vpop.f32.mrb[0].mxu0
      %2964 = vmatprep.mubr.bf16.mxu0 0
      %2965 = vmatmul.mubr.bf16.gmra.mrb[0].mxu0 %v2855
      %v2966 = vpop.f32.mrb[0].mxu0
      %v2967 = vadd.f32 0.0, %v2966
      %v2968 = vpop.f32.mrb[0].mxu0
      %v2969 = vpop.f32.mrb[0].mxu0
      %v2970 = vadd.f32 0.0, %v2969
      %v2971 = vpop.f32.mrb[0].mxu0
      %2972 = vmatprep.mubr.bf16.mxu0 0
      %2973 = vmatmul.mubr.bf16.gmra.mrb[0].mxu0 %v2857
      %v2974 = vpop.f32.mrb[0].mxu0
      %v2975 = vadd.f32 0.0, %v2974
      %v2976 = vpop.f32.mrb[0].mxu0
      %v2977 = vpop.f32.mrb[0].mxu0
      %v2978 = vadd.f32 0.0, %v2977
      %v2979 = vpop.f32.mrb[0].mxu0
      %2980 = vmatprep.mubr.bf16.mxu0 0
      %2981 = vmatmul.mubr.bf16.gmra.mrb[0].mxu0 %v2859
      %v2982 = vpop.f32.mrb[0].mxu0
      %v2983 = vadd.f32 0.0, %v2982
      %v2984 = vpop.f32.mrb[0].mxu0
      %v2985 = vpop.f32.mrb[0].mxu0
      %v2986 = vadd.f32 0.0, %v2985
      %v2987 = vpop.f32.mrb[0].mxu0
      %2988 = vmatprep.mubr.bf16.mxu0 0
      %2989 = vmatmul.mubr.bf16.gmra.mrb[0].mxu0 %v2861
      %v2990 = vpop.f32.mrb[0].mxu0
      %v2991 = vadd.f32 0.0, %v2990
      %v2992 = vpop.f32.mrb[0].mxu0
      %v2993 = vpop.f32.mrb[0].mxu0
      %v2994 = vadd.f32 0.0, %v2993
      %v2995 = vpop.f32.mrb[0].mxu0
      %2996 = vmatprep.mubr.bf16.mxu0 0
      %2997 = vmatmul.mubr.bf16.gmra.mrb[0].mxu0 %v2863
      %v2998 = vpop.f32.mrb[0].mxu0
      %v2999 = vadd.f32 0.0, %v2998
      %v3000 = vpop.f32.mrb[0].mxu0
      %v3001 = vpop.f32.mrb[0].mxu0
      %v3002 = vadd.f32 0.0, %v3001
      %v3003 = vpop.f32.mrb[0].mxu0
      %3004 = vmatprep.mubr.bf16.mxu0 0
      %3005 = vmatmul.mubr.bf16.gmra.mrb[0].mxu0 %v2865
      %v3006 = vpop.f32.mrb[0].mxu0
      %v3007 = vadd.f32 0.0, %v3006
      %v3008 = vpop.f32.mrb[0].mxu0
      %v3009 = vpop.f32.mrb[0].mxu0
      %v3010 = vadd.f32 0.0, %v3009
      %v3011 = vpop.f32.mrb[0].mxu0
      %3012 = vmatprep.mubr.bf16.mxu0 0
      %3013 = vmatmul.mubr.bf16.gmra.mrb[0].mxu0 %v2867
      %v3014 = vpop.f32.mrb[0].mxu0
      %v3015 = vadd.f32 0.0, %v3014
      %v3016 = vpop.f32.mrb[0].mxu0
      %v3017 = vpop.f32.mrb[0].mxu0
      %v3018 = vadd.f32 0.0, %v3017
      %v3019 = vpop.f32.mrb[0].mxu0
      %3020 = vmatprep.mubr.bf16.mxu0 0
      %3021 = vmatmul.mubr.bf16.gmra.mrb[0].mxu0 %v2869
      %v3022 = vpop.f32.mrb[0].mxu0
      %v3023 = vadd.f32 0.0, %v3022
      %v3024 = vpop.f32.mrb[0].mxu0
      %v3025 = vpop.f32.mrb[0].mxu0
      %v3026 = vadd.f32 0.0, %v3025
      %v3027 = vpop.f32.mrb[0].mxu0
      %3028 = vmatprep.mubr.bf16.mxu0 0
      %3029 = vmatmul.mubr.bf16.gmra.mrb[0].mxu0 %v2871
      %v3030 = vpop.f32.mrb[0].mxu0
      %v3031 = vadd.f32 0.0, %v3030
      %v3032 = vpop.f32.mrb[0].mxu0
      %v3033 = vpop.f32.mrb[0].mxu0
      %v3034 = vadd.f32 0.0, %v3033
      %v3035 = vpop.f32.mrb[0].mxu0
      %3036 = vdwg.mxu0
      %v3038 = vsel %vm475, %v2747, 0
      %v3041 = vsel %vm475, %v2748, 0
      %v3044 = vsel %vm475, %v2749, 0
      %v3047 = vsel %vm475, %v2750, 0
      %v3050 = vsel %vm475, %v2751, 0
      %v3053 = vsel %vm475, %v2752, 0
      %v3056 = vsel %vm475, %v2753, 0
      %v3059 = vsel %vm475, %v2754, 0
      %v3062 = vsel %vm475, %v2755, 0
      %v3065 = vsel %vm475, %v2756, 0
      %v3068 = vsel %vm475, %v2757, 0
      %v3071 = vsel %vm475, %v2758, 0
      %v3074 = vsel %vm475, %v2759, 0
      %v3077 = vsel %vm475, %v2760, 0
      %v3080 = vsel %vm475, %v2761, 0
      %v3083 = vsel %vm506, %v2578, 0
      %3085 = vmatprep.subr.bf16.mxu0 0
      %3086 = vmatpush1.bf16.msra.mxu0 %v3083
      %3087 = vmatprep.subr.bf16.mxu0 0
      %3088 = vmatpush1.bf16.msra.mxu0 0
      %3089 = vmatprep.subr.bf16.mxu0 0
      %3090 = vmatpush1.bf16.msra.mxu0 0
      %3091 = vmatprep.subr.bf16.mxu0 0
      %3092 = vmatpush1.bf16.msra.mxu0 0
      %3093 = vmatprep.subr.bf16.mxu0 0
      %3094 = vmatpush1.bf16.msra.mxu0 0
      %3095 = vmatprep.subr.bf16.mxu0 0
      %3096 = vmatpush1.bf16.msra.mxu0 0
      %3097 = vmatprep.subr.bf16.mxu0 0
      %3098 = vmatpush1.bf16.msra.mxu0 0
      %3099 = vmatprep.subr.bf16.mxu0 0
      %3100 = vmatpush1.bf16.msra.mxu0 0
      %3101 = vmatprep.subr.bf16.mxu0 0
      %3102 = vmatpush1.bf16.msra.mxu0 0
      %3103 = vmatprep.subr.bf16.mxu0 0
      %3104 = vmatpush1.bf16.msra.mxu0 0
      %3105 = vmatprep.subr.bf16.mxu0 0
      %3106 = vmatpush1.bf16.msra.mxu0 0
      %3107 = vmatprep.subr.bf16.mxu0 0
      %3108 = vmatpush1.bf16.msra.mxu0 0
      %3109 = vmatprep.subr.bf16.mxu0 0
      %3110 = vmatpush1.bf16.msra.mxu0 0
      %3111 = vmatprep.subr.bf16.mxu0 0
      %3112 = vmatpush1.bf16.msra.mxu0 0
      %3113 = vmatprep.subr.bf16.mxu0 0
      %3114 = vmatpush1.bf16.msra.mxu0 0
      %3115 = vmatprep.subr.bf16.mxu0 0
      %3116 = vmatpush1.bf16.msra.mxu0 0
      %3117 = vmatprep.mubr.bf16.mxu0 0
      %3118 = vmatmul.mubr.bf16.gmra.mrb[0].mxu0 %v3038
      %v3119 = vpop.f32.mrb[0].mxu0
      %v3120 = vadd.f32 %v2911, %v3119
      %v3121 = vpop.f32.mrb[0].mxu0
      %v3122 = vpop.f32.mrb[0].mxu0
      %v3123 = vadd.f32 %v2914, %v3122
      %v3124 = vpop.f32.mrb[0].mxu0
      %3125 = vmatprep.mubr.bf16.mxu0 0
      %3126 = vmatmul.mubr.bf16.gmra.mrb[0].mxu0 %v3041
      %v3127 = vpop.f32.mrb[0].mxu0
      %v3128 = vadd.f32 %v2919, %v3127
      %v3129 = vpop.f32.mrb[0].mxu0
      %v3130 = vpop.f32.mrb[0].mxu0
      %v3131 = vadd.f32 %v2922, %v3130
      %v3132 = vpop.f32.mrb[0].mxu0
      %3133 = vmatprep.mubr.bf16.mxu0 0
      %3134 = vmatmul.mubr.bf16.gmra.mrb[0].mxu0 %v3038
      %v3135 = vpop.f32.mrb[0].mxu0
      %v3136 = vadd.f32 %v2927, %v3135
      %v3137 = vpop.f32.mrb[0].mxu0
      %v3138 = vpop.f32.mrb[0].mxu0
      %v3139 = vadd.f32 %v2930, %v3138
      %v3140 = vpop.f32.mrb[0].mxu0
      %3141 = vmatprep.mubr.bf16.mxu0 0
      %3142 = vmatmul.mubr.bf16.gmra.mrb[0].mxu0 %v3044
      %v3143 = vpop.f32.mrb[0].mxu0
      %v3144 = vadd.f32 %v2935, %v3143
      %v3145 = vpop.f32.mrb[0].mxu0
      %v3146 = vpop.f32.mrb[0].mxu0
      %v3147 = vadd.f32 %v2938, %v3146
      %v3148 = vpop.f32.mrb[0].mxu0
      %3149 = vmatprep.mubr.bf16.mxu0 0
      %3150 = vmatmul.mubr.bf16.gmra.mrb[0].mxu0 %v3047
      %v3151 = vpop.f32.mrb[0].mxu0
      %v3152 = vadd.f32 %v2943, %v3151
      %v3153 = vpop.f32.mrb[0].mxu0
      %v3154 = vpop.f32.mrb[0].mxu0
      %v3155 = vadd.f32 %v2946, %v3154
      %v3156 = vpop.f32.mrb[0].mxu0
      %3157 = vmatprep.mubr.bf16.mxu0 0
      %3158 = vmatmul.mubr.bf16.gmra.mrb[0].mxu0 %v3050
      %v3159 = vpop.f32.mrb[0].mxu0
      %v3160 = vadd.f32 %v2951, %v3159
      %v3161 = vpop.f32.mrb[0].mxu0
      %v3162 = vpop.f32.mrb[0].mxu0
      %v3163 = vadd.f32 %v2954, %v3162
      %v3164 = vpop.f32.mrb[0].mxu0
      %3165 = vmatprep.mubr.bf16.mxu0 0
      %3166 = vmatmul.mubr.bf16.gmra.mrb[0].mxu0 %v3053
      %v3167 = vpop.f32.mrb[0].mxu0
      %v3168 = vadd.f32 %v2959, %v3167
      %v3169 = vpop.f32.mrb[0].mxu0
      %v3170 = vpop.f32.mrb[0].mxu0
      %v3171 = vadd.f32 %v2962, %v3170
      %v3172 = vpop.f32.mrb[0].mxu0
      %3173 = vmatprep.mubr.bf16.mxu0 0
      %3174 = vmatmul.mubr.bf16.gmra.mrb[0].mxu0 %v3056
      %v3175 = vpop.f32.mrb[0].mxu0
      %v3176 = vadd.f32 %v2967, %v3175
      %v3177 = vpop.f32.mrb[0].mxu0
      %v3178 = vpop.f32.mrb[0].mxu0
      %v3179 = vadd.f32 %v2970, %v3178
      %v3180 = vpop.f32.mrb[0].mxu0
      %3181 = vmatprep.mubr.bf16.mxu0 0
      %3182 = vmatmul.mubr.bf16.gmra.mrb[0].mxu0 %v3059
      %v3183 = vpop.f32.mrb[0].mxu0
      %v3184 = vadd.f32 %v2975, %v3183
      %v3185 = vpop.f32.mrb[0].mxu0
      %v3186 = vpop.f32.mrb[0].mxu0
      %v3187 = vadd.f32 %v2978, %v3186
      %v3188 = vpop.f32.mrb[0].mxu0
      %3189 = vmatprep.mubr.bf16.mxu0 0
      %3190 = vmatmul.mubr.bf16.gmra.mrb[0].mxu0 %v3062
      %v3191 = vpop.f32.mrb[0].mxu0
      %v3192 = vadd.f32 %v2983, %v3191
      %v3193 = vpop.f32.mrb[0].mxu0
      %v3194 = vpop.f32.mrb[0].mxu0
      %v3195 = vadd.f32 %v2986, %v3194
      %v3196 = vpop.f32.mrb[0].mxu0
      %3197 = vmatprep.mubr.bf16.mxu0 0
      %3198 = vmatmul.mubr.bf16.gmra.mrb[0].mxu0 %v3065
      %v3199 = vpop.f32.mrb[0].mxu0
      %v3200 = vadd.f32 %v2991, %v3199
      %v3201 = vpop.f32.mrb[0].mxu0
      %v3202 = vpop.f32.mrb[0].mxu0
      %v3203 = vadd.f32 %v2994, %v3202
      %v3204 = vpop.f32.mrb[0].mxu0
      %3205 = vmatprep.mubr.bf16.mxu0 0
      %3206 = vmatmul.mubr.bf16.gmra.mrb[0].mxu0 %v3068
      %v3207 = vpop.f32.mrb[0].mxu0
      %v3208 = vadd.f32 %v2999, %v3207
      %v3209 = vpop.f32.mrb[0].mxu0
      %v3210 = vpop.f32.mrb[0].mxu0
      %v3211 = vadd.f32 %v3002, %v3210
      %v3212 = vpop.f32.mrb[0].mxu0
      %3213 = vmatprep.mubr.bf16.mxu0 0
      %3214 = vmatmul.mubr.bf16.gmra.mrb[0].mxu0 %v3071
      %v3215 = vpop.f32.mrb[0].mxu0
      %v3216 = vadd.f32 %v3007, %v3215
      %v3217 = vpop.f32.mrb[0].mxu0
      %v3218 = vpop.f32.mrb[0].mxu0
      %v3219 = vadd.f32 %v3010, %v3218
      %v3220 = vpop.f32.mrb[0].mxu0
      %3221 = vmatprep.mubr.bf16.mxu0 0
      %3222 = vmatmul.mubr.bf16.gmra.mrb[0].mxu0 %v3074
      %v3223 = vpop.f32.mrb[0].mxu0
      %v3224 = vadd.f32 %v3015, %v3223
      %v3225 = vpop.f32.mrb[0].mxu0
      %v3226 = vpop.f32.mrb[0].mxu0
      %v3227 = vadd.f32 %v3018, %v3226
      %v3228 = vpop.f32.mrb[0].mxu0
      %3229 = vmatprep.mubr.bf16.mxu0 0
      %3230 = vmatmul.mubr.bf16.gmra.mrb[0].mxu0 %v3077
      %v3231 = vpop.f32.mrb[0].mxu0
      %v3232 = vadd.f32 %v3023, %v3231
      %v3233 = vpop.f32.mrb[0].mxu0
      %v3234 = vpop.f32.mrb[0].mxu0
      %v3235 = vadd.f32 %v3026, %v3234
      %v3236 = vpop.f32.mrb[0].mxu0
      %3237 = vmatprep.mubr.bf16.mxu0 0
      %3238 = vmatmul.mubr.bf16.gmra.mrb[0].mxu0 %v3080
      %v3239 = vpop.f32.mrb[0].mxu0
      %v3240 = vadd.f32 %v3031, %v3239
      %v3241 = vpop.f32.mrb[0].mxu0
      %v3242 = vpop.f32.mrb[0].mxu0
      %v3243 = vadd.f32 %v3034, %v3242
      %v3244 = vpop.f32.mrb[0].mxu0
      %3245 = vdwg.mxu0
      %v3247 = vsel %vm475, %v2827, 0
      %v3250 = vsel %vm475, %v2828, 0
      %v3253 = vsel %vm475, %v2829, 0
      %v3256 = vsel %vm475, %v2830, 0
      %v3259 = vsel %vm475, %v2831, 0
      %v3262 = vsel %vm475, %v2832, 0
      %v3265 = vsel %vm475, %v2833, 0
      %v3268 = vsel %vm475, %v2834, 0
      %v3271 = vsel %vm475, %v2835, 0
      %v3274 = vsel %vm475, %v2836, 0
      %v3277 = vsel %vm475, %v2837, 0
      %v3280 = vsel %vm475, %v2838, 0
      %v3283 = vsel %vm475, %v2839, 0
      %v3286 = vsel %vm475, %v2840, 0
      %v3289 = vsel %vm475, %v2841, 0
      %v3292 = vsel %vm506, %v2580, 0
      %3294 = vmatprep.subr.bf16.mxu0 0
      %3295 = vmatpush1.bf16.msra.mxu0 %v3292
      %3296 = vmatprep.subr.bf16.mxu0 0
      %3297 = vmatpush1.bf16.msra.mxu0 0
      %3298 = vmatprep.subr.bf16.mxu0 0
      %3299 = vmatpush1.bf16.msra.mxu0 0
      %3300 = vmatprep.subr.bf16.mxu0 0
      %3301 = vmatpush1.bf16.msra.mxu0 0
      %3302 = vmatprep.subr.bf16.mxu0 0
      %3303 = vmatpush1.bf16.msra.mxu0 0
      %3304 = vmatprep.subr.bf16.mxu0 0
      %3305 = vmatpush1.bf16.msra.mxu0 0
      %3306 = vmatprep.subr.bf16.mxu0 0
      %3307 = vmatpush1.bf16.msra.mxu0 0
      %3308 = vmatprep.subr.bf16.mxu0 0
      %3309 = vmatpush1.bf16.msra.mxu0 0
      %3310 = vmatprep.subr.bf16.mxu0 0
      %3311 = vmatpush1.bf16.msra.mxu0 0
      %3312 = vmatprep.subr.bf16.mxu0 0
      %3313 = vmatpush1.bf16.msra.mxu0 0
      %3314 = vmatprep.subr.bf16.mxu0 0
      %3315 = vmatpush1.bf16.msra.mxu0 0
      %3316 = vmatprep.subr.bf16.mxu0 0
      %3317 = vmatpush1.bf16.msra.mxu0 0
      %3318 = vmatprep.subr.bf16.mxu0 0
      %3319 = vmatpush1.bf16.msra.mxu0 0
      %3320 = vmatprep.subr.bf16.mxu0 0
      %3321 = vmatpush1.bf16.msra.mxu0 0
      %3322 = vmatprep.subr.bf16.mxu0 0
      %3323 = vmatpush1.bf16.msra.mxu0 0
      %3324 = vmatprep.subr.bf16.mxu0 0
      %3325 = vmatpush1.bf16.msra.mxu0 0
      %3326 = vmatprep.mubr.bf16.mxu0 0
      %3327 = vmatmul.mubr.bf16.gmra.mrb[0].mxu0 %v3247
      %v3328 = vpop.f32.mrb[0].mxu0
      %v3329 = vadd.f32 0.0, %v3328
      %v3330 = vpop.f32.mrb[0].mxu0
      %v3331 = vpop.f32.mrb[0].mxu0
      %v3332 = vadd.f32 0.0, %v3331
      %v3333 = vpop.f32.mrb[0].mxu0
      %3334 = vmatprep.mubr.bf16.mxu0 0
      %3335 = vmatmul.mubr.bf16.gmra.mrb[0].mxu0 %v3250
      %v3336 = vpop.f32.mrb[0].mxu0
      %v3337 = vadd.f32 0.0, %v3336
      %v3338 = vpop.f32.mrb[0].mxu0
      %v3339 = vpop.f32.mrb[0].mxu0
      %v3340 = vadd.f32 0.0, %v3339
      %v3341 = vpop.f32.mrb[0].mxu0
      %3342 = vmatprep.mubr.bf16.mxu0 0
      %3343 = vmatmul.mubr.bf16.gmra.mrb[0].mxu0 %v3247
      %v3344 = vpop.f32.mrb[0].mxu0
      %v3345 = vadd.f32 0.0, %v3344
      %v3346 = vpop.f32.mrb[0].mxu0
      %v3347 = vpop.f32.mrb[0].mxu0
      %v3348 = vadd.f32 0.0, %v3347
      %v3349 = vpop.f32.mrb[0].mxu0
      %3350 = vmatprep.mubr.bf16.mxu0 0
      %3351 = vmatmul.mubr.bf16.gmra.mrb[0].mxu0 %v3253
      %v3352 = vpop.f32.mrb[0].mxu0
      %v3353 = vadd.f32 0.0, %v3352
      %v3354 = vpop.f32.mrb[0].mxu0
      %v3355 = vpop.f32.mrb[0].mxu0
      %v3356 = vadd.f32 0.0, %v3355
      %v3357 = vpop.f32.mrb[0].mxu0
      %3358 = vmatprep.mubr.bf16.mxu0 0
      %3359 = vmatmul.mubr.bf16.gmra.mrb[0].mxu0 %v3256
      %v3360 = vpop.f32.mrb[0].mxu0
      %v3361 = vadd.f32 0.0, %v3360
      %v3362 = vpop.f32.mrb[0].mxu0
      %v3363 = vpop.f32.mrb[0].mxu0
      %v3364 = vadd.f32 0.0, %v3363
      %v3365 = vpop.f32.mrb[0].mxu0
      %3366 = vmatprep.mubr.bf16.mxu0 0
      %3367 = vmatmul.mubr.bf16.gmra.mrb[0].mxu0 %v3259
      %v3368 = vpop.f32.mrb[0].mxu0
      %v3369 = vadd.f32 0.0, %v3368
      %v3370 = vpop.f32.mrb[0].mxu0
      %v3371 = vpop.f32.mrb[0].mxu0
      %v3372 = vadd.f32 0.0, %v3371
      %v3373 = vpop.f32.mrb[0].mxu0
      %3374 = vmatprep.mubr.bf16.mxu0 0
      %3375 = vmatmul.mubr.bf16.gmra.mrb[0].mxu0 %v3262
      %v3376 = vpop.f32.mrb[0].mxu0
      %v3377 = vadd.f32 0.0, %v3376
      %v3378 = vpop.f32.mrb[0].mxu0
      %v3379 = vpop.f32.mrb[0].mxu0
      %v3380 = vadd.f32 0.0, %v3379
      %v3381 = vpop.f32.mrb[0].mxu0
      %3382 = vmatprep.mubr.bf16.mxu0 0
      %3383 = vmatmul.mubr.bf16.gmra.mrb[0].mxu0 %v3265
      %v3384 = vpop.f32.mrb[0].mxu0
      %v3385 = vadd.f32 0.0, %v3384
      %v3386 = vpop.f32.mrb[0].mxu0
      %v3387 = vpop.f32.mrb[0].mxu0
      %v3388 = vadd.f32 0.0, %v3387
      %v3389 = vpop.f32.mrb[0].mxu0
      %3390 = vmatprep.mubr.bf16.mxu0 0
      %3391 = vmatmul.mubr.bf16.gmra.mrb[0].mxu0 %v3268
      %v3392 = vpop.f32.mrb[0].mxu0
      %v3393 = vadd.f32 0.0, %v3392
      %v3394 = vpop.f32.mrb[0].mxu0
      %v3395 = vpop.f32.mrb[0].mxu0
      %v3396 = vadd.f32 0.0, %v3395
      %v3397 = vpop.f32.mrb[0].mxu0
      %3398 = vmatprep.mubr.bf16.mxu0 0
      %3399 = vmatmul.mubr.bf16.gmra.mrb[0].mxu0 %v3271
      %v3400 = vpop.f32.mrb[0].mxu0
      %v3401 = vadd.f32 0.0, %v3400
      %v3402 = vpop.f32.mrb[0].mxu0
      %v3403 = vpop.f32.mrb[0].mxu0
      %v3404 = vadd.f32 0.0, %v3403
      %v3405 = vpop.f32.mrb[0].mxu0
      %3406 = vmatprep.mubr.bf16.mxu0 0
      %3407 = vmatmul.mubr.bf16.gmra.mrb[0].mxu0 %v3274
      %v3408 = vpop.f32.mrb[0].mxu0
      %v3409 = vadd.f32 0.0, %v3408
      %v3410 = vpop.f32.mrb[0].mxu0
      %v3411 = vpop.f32.mrb[0].mxu0
      %v3412 = vadd.f32 0.0, %v3411
      %v3413 = vpop.f32.mrb[0].mxu0
      %3414 = vmatprep.mubr.bf16.mxu0 0
      %3415 = vmatmul.mubr.bf16.gmra.mrb[0].mxu0 %v3277
      %v3416 = vpop.f32.mrb[0].mxu0
      %v3417 = vadd.f32 0.0, %v3416
      %v3418 = vpop.f32.mrb[0].mxu0
      %v3419 = vpop.f32.mrb[0].mxu0
      %v3420 = vadd.f32 0.0, %v3419
      %v3421 = vpop.f32.mrb[0].mxu0
      %3422 = vmatprep.mubr.bf16.mxu0 0
      %3423 = vmatmul.mubr.bf16.gmra.mrb[0].mxu0 %v3280
      %v3424 = vpop.f32.mrb[0].mxu0
      %v3425 = vadd.f32 0.0, %v3424
      %v3426 = vpop.f32.mrb[0].mxu0
      %v3427 = vpop.f32.mrb[0].mxu0
      %v3428 = vadd.f32 0.0, %v3427
      %v3429 = vpop.f32.mrb[0].mxu0
      %3430 = vmatprep.mubr.bf16.mxu0 0
      %3431 = vmatmul.mubr.bf16.gmra.mrb[0].mxu0 %v3283
      %v3432 = vpop.f32.mrb[0].mxu0
      %v3433 = vadd.f32 0.0, %v3432
      %v3434 = vpop.f32.mrb[0].mxu0
      %v3435 = vpop.f32.mrb[0].mxu0
      %v3436 = vadd.f32 0.0, %v3435
      %v3437 = vpop.f32.mrb[0].mxu0
      %3438 = vmatprep.mubr.bf16.mxu0 0
      %3439 = vmatmul.mubr.bf16.gmra.mrb[0].mxu0 %v3286
      %v3440 = vpop.f32.mrb[0].mxu0
      %v3441 = vadd.f32 0.0, %v3440
      %v3442 = vpop.f32.mrb[0].mxu0
      %v3443 = vpop.f32.mrb[0].mxu0
      %v3444 = vadd.f32 0.0, %v3443
      %v3445 = vpop.f32.mrb[0].mxu0
      %3446 = vmatprep.mubr.bf16.mxu0 0
      %3447 = vmatmul.mubr.bf16.gmra.mrb[0].mxu0 %v3289
      %v3448 = vpop.f32.mrb[0].mxu0
      %v3449 = vadd.f32 0.0, %v3448
      %v3450 = vpop.f32.mrb[0].mxu0
      %v3451 = vpop.f32.mrb[0].mxu0
      %v3452 = vadd.f32 0.0, %v3451
      %v3453 = vpop.f32.mrb[0].mxu0
      %3454 = vdwg.mxu0
      %v3455 = vadd.f32 %v3120, %v3329
      %v3456 = vadd.f32 %v3123, %v3332
      %v3457 = vadd.f32 %v3128, %v3337
      %v3458 = vadd.f32 %v3131, %v3340
      %v3459 = vadd.f32 %v3136, %v3345
      %v3460 = vadd.f32 %v3139, %v3348
      %v3461 = vadd.f32 %v3144, %v3353
      %v3462 = vadd.f32 %v3147, %v3356
      %v3463 = vadd.f32 %v3152, %v3361
      %v3464 = vadd.f32 %v3155, %v3364
      %v3465 = vadd.f32 %v3160, %v3369
      %v3466 = vadd.f32 %v3163, %v3372
      %v3467 = vadd.f32 %v3168, %v3377
      %v3468 = vadd.f32 %v3171, %v3380
      %v3469 = vadd.f32 %v3176, %v3385
      %v3470 = vadd.f32 %v3179, %v3388
      %v3471 = vadd.f32 %v3184, %v3393
      %v3472 = vadd.f32 %v3187, %v3396
      %v3473 = vadd.f32 %v3192, %v3401
      %v3474 = vadd.f32 %v3195, %v3404
      %v3475 = vadd.f32 %v3200, %v3409
      %v3476 = vadd.f32 %v3203, %v3412
      %v3477 = vadd.f32 %v3208, %v3417
      %v3478 = vadd.f32 %v3211, %v3420
      %v3479 = vadd.f32 %v3216, %v3425
      %v3480 = vadd.f32 %v3219, %v3428
      %v3481 = vadd.f32 %v3224, %v3433
      %v3482 = vadd.f32 %v3227, %v3436
      %v3483 = vadd.f32 %v3232, %v3441
      %v3484 = vadd.f32 %v3235, %v3444
      %v3485 = vadd.f32 %v3240, %v3449
      %v3486 = vadd.f32 %v3243, %v3452
      %v3488 = vsel %vm475, %v2762, 0
      %v3491 = vsel %vm506, %v2581, 0
      %3493 = vmatprep.subr.bf16.mxu0 0
      %3494 = vmatpush1.bf16.msra.mxu0 %v3491
      %3495 = vmatprep.subr.bf16.mxu0 0
      %3496 = vmatpush1.bf16.msra.mxu0 0
      %3497 = vmatprep.subr.bf16.mxu0 0
      %3498 = vmatpush1.bf16.msra.mxu0 0
      %3499 = vmatprep.subr.bf16.mxu0 0
      %3500 = vmatpush1.bf16.msra.mxu0 0
      %3501 = vmatprep.subr.bf16.mxu0 0
      %3502 = vmatpush1.bf16.msra.mxu0 0
      %3503 = vmatprep.subr.bf16.mxu0 0
      %3504 = vmatpush1.bf16.msra.mxu0 0
      %3505 = vmatprep.subr.bf16.mxu0 0
      %3506 = vmatpush1.bf16.msra.mxu0 0
      %3507 = vmatprep.subr.bf16.mxu0 0
      %3508 = vmatpush1.bf16.msra.mxu0 0
      %3509 = vmatprep.subr.bf16.mxu0 0
      %3510 = vmatpush1.bf16.msra.mxu0 0
      %3511 = vmatprep.subr.bf16.mxu0 0
      %3512 = vmatpush1.bf16.msra.mxu0 0
      %3513 = vmatprep.subr.bf16.mxu0 0
      %3514 = vmatpush1.bf16.msra.mxu0 0
      %3515 = vmatprep.subr.bf16.mxu0 0
      %3516 = vmatpush1.bf16.msra.mxu0 0
      %3517 = vmatprep.subr.bf16.mxu0 0
      %3518 = vmatpush1.bf16.msra.mxu0 0
      %3519 = vmatprep.subr.bf16.mxu0 0
      %3520 = vmatpush1.bf16.msra.mxu0 0
      %3521 = vmatprep.subr.bf16.mxu0 0
      %3522 = vmatpush1.bf16.msra.mxu0 0
      %3523 = vmatprep.subr.bf16.mxu0 0
      %3524 = vmatpush1.bf16.msra.mxu0 0
      %3525 = vmatprep.mubr.bf16.mxu0 0
      %3526 = vmatmul.mubr.bf16.gmra.mrb[0].mxu0 %v3041
      %v3527 = vpop.f32.mrb[0].mxu0
      %v3528 = vadd.f32 0.0, %v3527
      %v3529 = vpop.f32.mrb[0].mxu0
      %v3530 = vpop.f32.mrb[0].mxu0
      %v3531 = vadd.f32 0.0, %v3530
      %v3532 = vpop.f32.mrb[0].mxu0
      %3533 = vmatprep.mubr.bf16.mxu0 0
      %3534 = vmatmul.mubr.bf16.gmra.mrb[0].mxu0 %v3038
      %v3535 = vpop.f32.mrb[0].mxu0
      %v3536 = vadd.f32 0.0, %v3535
      %v3537 = vpop.f32.mrb[0].mxu0
      %v3538 = vpop.f32.mrb[0].mxu0
      %v3539 = vadd.f32 0.0, %v3538
      %v3540 = vpop.f32.mrb[0].mxu0
      %3541 = vmatprep.mubr.bf16.mxu0 0
      %3542 = vmatmul.mubr.bf16.gmra.mrb[0].mxu0 %v3044
      %v3543 = vpop.f32.mrb[0].mxu0
      %v3544 = vadd.f32 0.0, %v3543
      %v3545 = vpop.f32.mrb[0].mxu0
      %v3546 = vpop.f32.mrb[0].mxu0
      %v3547 = vadd.f32 0.0, %v3546
      %v3548 = vpop.f32.mrb[0].mxu0
      %3549 = vmatprep.mubr.bf16.mxu0 0
      %3550 = vmatmul.mubr.bf16.gmra.mrb[0].mxu0 %v3047
      %v3551 = vpop.f32.mrb[0].mxu0
      %v3552 = vadd.f32 0.0, %v3551
      %v3553 = vpop.f32.mrb[0].mxu0
      %v3554 = vpop.f32.mrb[0].mxu0
      %v3555 = vadd.f32 0.0, %v3554
      %v3556 = vpop.f32.mrb[0].mxu0
      %3557 = vmatprep.mubr.bf16.mxu0 0
      %3558 = vmatmul.mubr.bf16.gmra.mrb[0].mxu0 %v3050
      %v3559 = vpop.f32.mrb[0].mxu0
      %v3560 = vadd.f32 0.0, %v3559
      %v3561 = vpop.f32.mrb[0].mxu0
      %v3562 = vpop.f32.mrb[0].mxu0
      %v3563 = vadd.f32 0.0, %v3562
      %v3564 = vpop.f32.mrb[0].mxu0
      %3565 = vmatprep.mubr.bf16.mxu0 0
      %3566 = vmatmul.mubr.bf16.gmra.mrb[0].mxu0 %v3053
      %v3567 = vpop.f32.mrb[0].mxu0
      %v3568 = vadd.f32 0.0, %v3567
      %v3569 = vpop.f32.mrb[0].mxu0
      %v3570 = vpop.f32.mrb[0].mxu0
      %v3571 = vadd.f32 0.0, %v3570
      %v3572 = vpop.f32.mrb[0].mxu0
      %3573 = vmatprep.mubr.bf16.mxu0 0
      %3574 = vmatmul.mubr.bf16.gmra.mrb[0].mxu0 %v3056
      %v3575 = vpop.f32.mrb[0].mxu0
      %v3576 = vadd.f32 0.0, %v3575
      %v3577 = vpop.f32.mrb[0].mxu0
      %v3578 = vpop.f32.mrb[0].mxu0
      %v3579 = vadd.f32 0.0, %v3578
      %v3580 = vpop.f32.mrb[0].mxu0
      %3581 = vmatprep.mubr.bf16.mxu0 0
      %3582 = vmatmul.mubr.bf16.gmra.mrb[0].mxu0 %v3059
      %v3583 = vpop.f32.mrb[0].mxu0
      %v3584 = vadd.f32 0.0, %v3583
      %v3585 = vpop.f32.mrb[0].mxu0
      %v3586 = vpop.f32.mrb[0].mxu0
      %v3587 = vadd.f32 0.0, %v3586
      %v3588 = vpop.f32.mrb[0].mxu0
      %3589 = vmatprep.mubr.bf16.mxu0 0
      %3590 = vmatmul.mubr.bf16.gmra.mrb[0].mxu0 %v3062
      %v3591 = vpop.f32.mrb[0].mxu0
      %v3592 = vadd.f32 0.0, %v3591
      %v3593 = vpop.f32.mrb[0].mxu0
      %v3594 = vpop.f32.mrb[0].mxu0
      %v3595 = vadd.f32 0.0, %v3594
      %v3596 = vpop.f32.mrb[0].mxu0
      %3597 = vmatprep.mubr.bf16.mxu0 0
      %3598 = vmatmul.mubr.bf16.gmra.mrb[0].mxu0 %v3065
      %v3599 = vpop.f32.mrb[0].mxu0
      %v3600 = vadd.f32 0.0, %v3599
      %v3601 = vpop.f32.mrb[0].mxu0
      %v3602 = vpop.f32.mrb[0].mxu0
      %v3603 = vadd.f32 0.0, %v3602
      %v3604 = vpop.f32.mrb[0].mxu0
      %3605 = vmatprep.mubr.bf16.mxu0 0
      %3606 = vmatmul.mubr.bf16.gmra.mrb[0].mxu0 %v3068
      %v3607 = vpop.f32.mrb[0].mxu0
      %v3608 = vadd.f32 0.0, %v3607
      %v3609 = vpop.f32.mrb[0].mxu0
      %v3610 = vpop.f32.mrb[0].mxu0
      %v3611 = vadd.f32 0.0, %v3610
      %v3612 = vpop.f32.mrb[0].mxu0
      %3613 = vmatprep.mubr.bf16.mxu0 0
      %3614 = vmatmul.mubr.bf16.gmra.mrb[0].mxu0 %v3071
      %v3615 = vpop.f32.mrb[0].mxu0
      %v3616 = vadd.f32 0.0, %v3615
      %v3617 = vpop.f32.mrb[0].mxu0
      %v3618 = vpop.f32.mrb[0].mxu0
      %v3619 = vadd.f32 0.0, %v3618
      %v3620 = vpop.f32.mrb[0].mxu0
      %3621 = vmatprep.mubr.bf16.mxu0 0
      %3622 = vmatmul.mubr.bf16.gmra.mrb[0].mxu0 %v3074
      %v3623 = vpop.f32.mrb[0].mxu0
      %v3624 = vadd.f32 0.0, %v3623
      %v3625 = vpop.f32.mrb[0].mxu0
      %v3626 = vpop.f32.mrb[0].mxu0
      %v3627 = vadd.f32 0.0, %v3626
      %v3628 = vpop.f32.mrb[0].mxu0
      %3629 = vmatprep.mubr.bf16.mxu0 0
      %3630 = vmatmul.mubr.bf16.gmra.mrb[0].mxu0 %v3077
      %v3631 = vpop.f32.mrb[0].mxu0
      %v3632 = vadd.f32 0.0, %v3631
      %v3633 = vpop.f32.mrb[0].mxu0
      %v3634 = vpop.f32.mrb[0].mxu0
      %v3635 = vadd.f32 0.0, %v3634
      %v3636 = vpop.f32.mrb[0].mxu0
      %3637 = vmatprep.mubr.bf16.mxu0 0
      %3638 = vmatmul.mubr.bf16.gmra.mrb[0].mxu0 %v3080
      %v3639 = vpop.f32.mrb[0].mxu0
      %v3640 = vadd.f32 0.0, %v3639
      %v3641 = vpop.f32.mrb[0].mxu0
      %v3642 = vpop.f32.mrb[0].mxu0
      %v3643 = vadd.f32 0.0, %v3642
      %v3644 = vpop.f32.mrb[0].mxu0
      %3645 = vmatprep.mubr.bf16.mxu0 0
      %3646 = vmatmul.mubr.bf16.gmra.mrb[0].mxu0 %v3488
      %v3647 = vpop.f32.mrb[0].mxu0
      %v3648 = vadd.f32 0.0, %v3647
      %v3649 = vpop.f32.mrb[0].mxu0
      %v3650 = vpop.f32.mrb[0].mxu0
      %v3651 = vadd.f32 0.0, %v3650
      %v3652 = vpop.f32.mrb[0].mxu0
      %3653 = vdwg.mxu0
      %v3654 = vadd.f32 %v3455, %v3528
      %v3655 = vadd.f32 %v3456, %v3531
      %v3656 = vadd.f32 %v3457, %v3536
      %v3657 = vadd.f32 %v3458, %v3539
      %v3658 = vadd.f32 %v3459, %v3544
      %v3659 = vadd.f32 %v3460, %v3547
      %v3660 = vadd.f32 %v3461, %v3552
      %v3661 = vadd.f32 %v3462, %v3555
      %v3662 = vadd.f32 %v3463, %v3560
      %v3663 = vadd.f32 %v3464, %v3563
      %v3664 = vadd.f32 %v3465, %v3568
      %v3665 = vadd.f32 %v3466, %v3571
      %v3666 = vadd.f32 %v3467, %v3576
      %v3667 = vadd.f32 %v3468, %v3579
      %v3668 = vadd.f32 %v3469, %v3584
      %v3669 = vadd.f32 %v3470, %v3587
      %v3670 = vadd.f32 %v3471, %v3592
      %v3671 = vadd.f32 %v3472, %v3595
      %v3672 = vadd.f32 %v3473, %v3600
      %v3673 = vadd.f32 %v3474, %v3603
      %v3674 = vadd.f32 %v3475, %v3608
      %v3675 = vadd.f32 %v3476, %v3611
      %v3676 = vadd.f32 %v3477, %v3616
      %v3677 = vadd.f32 %v3478, %v3619
      %v3678 = vadd.f32 %v3479, %v3624
      %v3679 = vadd.f32 %v3480, %v3627
      %v3680 = vadd.f32 %v3481, %v3632
      %v3681 = vadd.f32 %v3482, %v3635
      %v3682 = vadd.f32 %v3483, %v3640
      %v3683 = vadd.f32 %v3484, %v3643
      %v3684 = vadd.f32 %v3485, %v3648
      %v3685 = vadd.f32 %v3486, %v3651
      %v3686 = vsel %vm475, %v2602, 0
      %v3689 = vsel %vm506, %v2582, 0
      %3691 = vmatprep.subr.bf16.mxu0 0
      %3692 = vmatpush1.bf16.msra.mxu0 %v3689
      %3693 = vmatprep.subr.bf16.mxu0 0
      %3694 = vmatpush1.bf16.msra.mxu0 0
      %3695 = vmatprep.subr.bf16.mxu0 0
      %3696 = vmatpush1.bf16.msra.mxu0 0
      %3697 = vmatprep.subr.bf16.mxu0 0
      %3698 = vmatpush1.bf16.msra.mxu0 0
      %3699 = vmatprep.subr.bf16.mxu0 0
      %3700 = vmatpush1.bf16.msra.mxu0 0
      %3701 = vmatprep.subr.bf16.mxu0 0
      %3702 = vmatpush1.bf16.msra.mxu0 0
      %3703 = vmatprep.subr.bf16.mxu0 0
      %3704 = vmatpush1.bf16.msra.mxu0 0
      %3705 = vmatprep.subr.bf16.mxu0 0
      %3706 = vmatpush1.bf16.msra.mxu0 0
      %3707 = vmatprep.subr.bf16.mxu0 0
      %3708 = vmatpush1.bf16.msra.mxu0 0
      %3709 = vmatprep.subr.bf16.mxu0 0
      %3710 = vmatpush1.bf16.msra.mxu0 0
      %3711 = vmatprep.subr.bf16.mxu0 0
      %3712 = vmatpush1.bf16.msra.mxu0 0
      %3713 = vmatprep.subr.bf16.mxu0 0
      %3714 = vmatpush1.bf16.msra.mxu0 0
      %3715 = vmatprep.subr.bf16.mxu0 0
      %3716 = vmatpush1.bf16.msra.mxu0 0
      %3717 = vmatprep.subr.bf16.mxu0 0
      %3718 = vmatpush1.bf16.msra.mxu0 0
      %3719 = vmatprep.subr.bf16.mxu0 0
      %3720 = vmatpush1.bf16.msra.mxu0 0
      %3721 = vmatprep.subr.bf16.mxu0 0
      %3722 = vmatpush1.bf16.msra.mxu0 0
      %3723 = vmatprep.mubr.bf16.mxu0 0
      %3724 = vmatmul.mubr.bf16.gmra.mrb[0].mxu0 %v2845
      %v3725 = vpop.f32.mrb[0].mxu0
      %v3726 = vadd.f32 0.0, %v3725
      %v3727 = vpop.f32.mrb[0].mxu0
      %v3728 = vpop.f32.mrb[0].mxu0
      %v3729 = vadd.f32 0.0, %v3728
      %v3730 = vpop.f32.mrb[0].mxu0
      %3731 = vmatprep.mubr.bf16.mxu0 0
      %3732 = vmatmul.mubr.bf16.gmra.mrb[0].mxu0 %v2843
      %v3733 = vpop.f32.mrb[0].mxu0
      %v3734 = vadd.f32 0.0, %v3733
      %v3735 = vpop.f32.mrb[0].mxu0
      %v3736 = vpop.f32.mrb[0].mxu0
      %v3737 = vadd.f32 0.0, %v3736
      %v3738 = vpop.f32.mrb[0].mxu0
      %3739 = vmatprep.mubr.bf16.mxu0 0
      %3740 = vmatmul.mubr.bf16.gmra.mrb[0].mxu0 %v2847
      %v3741 = vpop.f32.mrb[0].mxu0
      %v3742 = vadd.f32 0.0, %v3741
      %v3743 = vpop.f32.mrb[0].mxu0
      %v3744 = vpop.f32.mrb[0].mxu0
      %v3745 = vadd.f32 0.0, %v3744
      %v3746 = vpop.f32.mrb[0].mxu0
      %3747 = vmatprep.mubr.bf16.mxu0 0
      %3748 = vmatmul.mubr.bf16.gmra.mrb[0].mxu0 %v2849
      %v3749 = vpop.f32.mrb[0].mxu0
      %v3750 = vadd.f32 0.0, %v3749
      %v3751 = vpop.f32.mrb[0].mxu0
      %v3752 = vpop.f32.mrb[0].mxu0
      %v3753 = vadd.f32 0.0, %v3752
      %v3754 = vpop.f32.mrb[0].mxu0
      %3755 = vmatprep.mubr.bf16.mxu0 0
      %3756 = vmatmul.mubr.bf16.gmra.mrb[0].mxu0 %v2851
      %v3757 = vpop.f32.mrb[0].mxu0
      %v3758 = vadd.f32 0.0, %v3757
      %v3759 = vpop.f32.mrb[0].mxu0
      %v3760 = vpop.f32.mrb[0].mxu0
      %v3761 = vadd.f32 0.0, %v3760
      %v3762 = vpop.f32.mrb[0].mxu0
      %3763 = vmatprep.mubr.bf16.mxu0 0
      %3764 = vmatmul.mubr.bf16.gmra.mrb[0].mxu0 %v2853
      %v3765 = vpop.f32.mrb[0].mxu0
      %v3766 = vadd.f32 0.0, %v3765
      %v3767 = vpop.f32.mrb[0].mxu0
      %v3768 = vpop.f32.mrb[0].mxu0
      %v3769 = vadd.f32 0.0, %v3768
      %v3770 = vpop.f32.mrb[0].mxu0
      %3771 = vmatprep.mubr.bf16.mxu0 0
      %3772 = vmatmul.mubr.bf16.gmra.mrb[0].mxu0 %v2855
      %v3773 = vpop.f32.mrb[0].mxu0
      %v3774 = vadd.f32 0.0, %v3773
      %v3775 = vpop.f32.mrb[0].mxu0
      %v3776 = vpop.f32.mrb[0].mxu0
      %v3777 = vadd.f32 0.0, %v3776
      %v3778 = vpop.f32.mrb[0].mxu0
      %3779 = vmatprep.mubr.bf16.mxu0 0
      %3780 = vmatmul.mubr.bf16.gmra.mrb[0].mxu0 %v2857
      %v3781 = vpop.f32.mrb[0].mxu0
      %v3782 = vadd.f32 0.0, %v3781
      %v3783 = vpop.f32.mrb[0].mxu0
      %v3784 = vpop.f32.mrb[0].mxu0
      %v3785 = vadd.f32 0.0, %v3784
      %v3786 = vpop.f32.mrb[0].mxu0
      %3787 = vmatprep.mubr.bf16.mxu0 0
      %3788 = vmatmul.mubr.bf16.gmra.mrb[0].mxu0 %v2859
      %v3789 = vpop.f32.mrb[0].mxu0
      %v3790 = vadd.f32 0.0, %v3789
      %v3791 = vpop.f32.mrb[0].mxu0
      %v3792 = vpop.f32.mrb[0].mxu0
      %v3793 = vadd.f32 0.0, %v3792
      %v3794 = vpop.f32.mrb[0].mxu0
      %3795 = vmatprep.mubr.bf16.mxu0 0
      %3796 = vmatmul.mubr.bf16.gmra.mrb[0].mxu0 %v2861
      %v3797 = vpop.f32.mrb[0].mxu0
      %v3798 = vadd.f32 0.0, %v3797
      %v3799 = vpop.f32.mrb[0].mxu0
      %v3800 = vpop.f32.mrb[0].mxu0
      %v3801 = vadd.f32 0.0, %v3800
      %v3802 = vpop.f32.mrb[0].mxu0
      %3803 = vmatprep.mubr.bf16.mxu0 0
      %3804 = vmatmul.mubr.bf16.gmra.mrb[0].mxu0 %v2863
      %v3805 = vpop.f32.mrb[0].mxu0
      %v3806 = vadd.f32 0.0, %v3805
      %v3807 = vpop.f32.mrb[0].mxu0
      %v3808 = vpop.f32.mrb[0].mxu0
      %v3809 = vadd.f32 0.0, %v3808
      %v3810 = vpop.f32.mrb[0].mxu0
      %3811 = vmatprep.mubr.bf16.mxu0 0
      %3812 = vmatmul.mubr.bf16.gmra.mrb[0].mxu0 %v2865
      %v3813 = vpop.f32.mrb[0].mxu0
      %v3814 = vadd.f32 0.0, %v3813
      %v3815 = vpop.f32.mrb[0].mxu0
      %v3816 = vpop.f32.mrb[0].mxu0
      %v3817 = vadd.f32 0.0, %v3816
      %v3818 = vpop.f32.mrb[0].mxu0
      %3819 = vmatprep.mubr.bf16.mxu0 0
      %3820 = vmatmul.mubr.bf16.gmra.mrb[0].mxu0 %v2867
      %v3821 = vpop.f32.mrb[0].mxu0
      %v3822 = vadd.f32 0.0, %v3821
      %v3823 = vpop.f32.mrb[0].mxu0
      %v3824 = vpop.f32.mrb[0].mxu0
      %v3825 = vadd.f32 0.0, %v3824
      %v3826 = vpop.f32.mrb[0].mxu0
      %3827 = vmatprep.mubr.bf16.mxu0 0
      %3828 = vmatmul.mubr.bf16.gmra.mrb[0].mxu0 %v2869
      %v3829 = vpop.f32.mrb[0].mxu0
      %v3830 = vadd.f32 0.0, %v3829
      %v3831 = vpop.f32.mrb[0].mxu0
      %v3832 = vpop.f32.mrb[0].mxu0
      %v3833 = vadd.f32 0.0, %v3832
      %v3834 = vpop.f32.mrb[0].mxu0
      %3835 = vmatprep.mubr.bf16.mxu0 0
      %3836 = vmatmul.mubr.bf16.gmra.mrb[0].mxu0 %v2871
      %v3837 = vpop.f32.mrb[0].mxu0
      %v3838 = vadd.f32 0.0, %v3837
      %v3839 = vpop.f32.mrb[0].mxu0
      %v3840 = vpop.f32.mrb[0].mxu0
      %v3841 = vadd.f32 0.0, %v3840
      %v3842 = vpop.f32.mrb[0].mxu0
      %3843 = vmatprep.mubr.bf16.mxu0 0
      %3844 = vmatmul.mubr.bf16.gmra.mrb[0].mxu0 %v3686
      %v3845 = vpop.f32.mrb[0].mxu0
      %v3846 = vadd.f32 0.0, %v3845
      %v3847 = vpop.f32.mrb[0].mxu0
      %v3848 = vpop.f32.mrb[0].mxu0
      %v3849 = vadd.f32 0.0, %v3848
      %v3850 = vpop.f32.mrb[0].mxu0
      %3851 = vdwg.mxu0
      %v3852 = vadd.f32 %v3654, %v3726
      %v3853 = vadd.f32 %v3655, %v3729
      %v3854 = vadd.f32 %v3656, %v3734
      %v3855 = vadd.f32 %v3657, %v3737
      %v3856 = vadd.f32 %v3658, %v3742
      %v3857 = vadd.f32 %v3659, %v3745
      %v3858 = vadd.f32 %v3660, %v3750
      %v3859 = vadd.f32 %v3661, %v3753
      %v3860 = vadd.f32 %v3662, %v3758
      %v3861 = vadd.f32 %v3663, %v3761
      %v3862 = vadd.f32 %v3664, %v3766
      %v3863 = vadd.f32 %v3665, %v3769
      %v3864 = vadd.f32 %v3666, %v3774
      %v3865 = vadd.f32 %v3667, %v3777
      %v3866 = vadd.f32 %v3668, %v3782
      %v3867 = vadd.f32 %v3669, %v3785
      %v3868 = vadd.f32 %v3670, %v3790
      %v3869 = vadd.f32 %v3671, %v3793
      %v3870 = vadd.f32 %v3672, %v3798
      %v3871 = vadd.f32 %v3673, %v3801
      %v3872 = vadd.f32 %v3674, %v3806
      %v3873 = vadd.f32 %v3675, %v3809
      %v3874 = vadd.f32 %v3676, %v3814
      %v3875 = vadd.f32 %v3677, %v3817
      %v3876 = vadd.f32 %v3678, %v3822
      %v3877 = vadd.f32 %v3679, %v3825
      %v3878 = vadd.f32 %v3680, %v3830
      %v3879 = vadd.f32 %v3681, %v3833
      %v3880 = vadd.f32 %v3682, %v3838
      %v3881 = vadd.f32 %v3683, %v3841
      %v3882 = vadd.f32 %v3684, %v3846
      %v3883 = vadd.f32 %v3685, %v3849
      %v3885 = vsel %vm475, %v2842, 0
      %v3888 = vsel %vm506, %v2583, 0
      %3890 = vmatprep.subr.bf16.mxu0 0
      %3891 = vmatpush1.bf16.msra.mxu0 %v3888
      %3892 = vmatprep.subr.bf16.mxu0 0
      %3893 = vmatpush1.bf16.msra.mxu0 0
      %3894 = vmatprep.subr.bf16.mxu0 0
      %3895 = vmatpush1.bf16.msra.mxu0 0
      %3896 = vmatprep.subr.bf16.mxu0 0
      %3897 = vmatpush1.bf16.msra.mxu0 0
      %3898 = vmatprep.subr.bf16.mxu0 0
      %3899 = vmatpush1.bf16.msra.mxu0 0
      %3900 = vmatprep.subr.bf16.mxu0 0
      %3901 = vmatpush1.bf16.msra.mxu0 0
      %3902 = vmatprep.subr.bf16.mxu0 0
      %3903 = vmatpush1.bf16.msra.mxu0 0
      %3904 = vmatprep.subr.bf16.mxu0 0
      %3905 = vmatpush1.bf16.msra.mxu0 0
      %3906 = vmatprep.subr.bf16.mxu0 0
      %3907 = vmatpush1.bf16.msra.mxu0 0
      %3908 = vmatprep.subr.bf16.mxu0 0
      %3909 = vmatpush1.bf16.msra.mxu0 0
      %3910 = vmatprep.subr.bf16.mxu0 0
      %3911 = vmatpush1.bf16.msra.mxu0 0
      %3912 = vmatprep.subr.bf16.mxu0 0
      %3913 = vmatpush1.bf16.msra.mxu0 0
      %3914 = vmatprep.subr.bf16.mxu0 0
      %3915 = vmatpush1.bf16.msra.mxu0 0
      %3916 = vmatprep.subr.bf16.mxu0 0
      %3917 = vmatpush1.bf16.msra.mxu0 0
      %3918 = vmatprep.subr.bf16.mxu0 0
      %3919 = vmatpush1.bf16.msra.mxu0 0
      %3920 = vmatprep.subr.bf16.mxu0 0
      %3921 = vmatpush1.bf16.msra.mxu0 0
      %3922 = vmatprep.mubr.bf16.mxu0 0
      %3923 = vmatmul.mubr.bf16.gmra.mrb[0].mxu0 %v3250
      %v3924 = vpop.f32.mrb[0].mxu0
      %v3925 = vadd.f32 0.0, %v3924
      %v3926 = vpop.f32.mrb[0].mxu0
      %v3927 = vpop.f32.mrb[0].mxu0
      %v3928 = vadd.f32 0.0, %v3927
      %v3929 = vpop.f32.mrb[0].mxu0
      %3930 = vmatprep.mubr.bf16.mxu0 0
      %3931 = vmatmul.mubr.bf16.gmra.mrb[0].mxu0 %v3247
      %v3932 = vpop.f32.mrb[0].mxu0
      %v3933 = vadd.f32 0.0, %v3932
      %v3934 = vpop.f32.mrb[0].mxu0
      %v3935 = vpop.f32.mrb[0].mxu0
      %v3936 = vadd.f32 0.0, %v3935
      %v3937 = vpop.f32.mrb[0].mxu0
      %3938 = vmatprep.mubr.bf16.mxu0 0
      %3939 = vmatmul.mubr.bf16.gmra.mrb[0].mxu0 %v3253
      %v3940 = vpop.f32.mrb[0].mxu0
      %v3941 = vadd.f32 0.0, %v3940
      %v3942 = vpop.f32.mrb[0].mxu0
      %v3943 = vpop.f32.mrb[0].mxu0
      %v3944 = vadd.f32 0.0, %v3943
      %v3945 = vpop.f32.mrb[0].mxu0
      %3946 = vmatprep.mubr.bf16.mxu0 0
      %3947 = vmatmul.mubr.bf16.gmra.mrb[0].mxu0 %v3256
      %v3948 = vpop.f32.mrb[0].mxu0
      %v3949 = vadd.f32 0.0, %v3948
      %v3950 = vpop.f32.mrb[0].mxu0
      %v3951 = vpop.f32.mrb[0].mxu0
      %v3952 = vadd.f32 0.0, %v3951
      %v3953 = vpop.f32.mrb[0].mxu0
      %3954 = vmatprep.mubr.bf16.mxu0 0
      %3955 = vmatmul.mubr.bf16.gmra.mrb[0].mxu0 %v3259
      %v3956 = vpop.f32.mrb[0].mxu0
      %v3957 = vadd.f32 0.0, %v3956
      %v3958 = vpop.f32.mrb[0].mxu0
      %v3959 = vpop.f32.mrb[0].mxu0
      %v3960 = vadd.f32 0.0, %v3959
      %v3961 = vpop.f32.mrb[0].mxu0
      %3962 = vmatprep.mubr.bf16.mxu0 0
      %3963 = vmatmul.mubr.bf16.gmra.mrb[0].mxu0 %v3262
      %v3964 = vpop.f32.mrb[0].mxu0
      %v3965 = vadd.f32 0.0, %v3964
      %v3966 = vpop.f32.mrb[0].mxu0
      %v3967 = vpop.f32.mrb[0].mxu0
      %v3968 = vadd.f32 0.0, %v3967
      %v3969 = vpop.f32.mrb[0].mxu0
      %3970 = vmatprep.mubr.bf16.mxu0 0
      %3971 = vmatmul.mubr.bf16.gmra.mrb[0].mxu0 %v3265
      %v3972 = vpop.f32.mrb[0].mxu0
      %v3973 = vadd.f32 0.0, %v3972
      %v3974 = vpop.f32.mrb[0].mxu0
      %v3975 = vpop.f32.mrb[0].mxu0
      %v3976 = vadd.f32 0.0, %v3975
      %v3977 = vpop.f32.mrb[0].mxu0
      %3978 = vmatprep.mubr.bf16.mxu0 0
      %3979 = vmatmul.mubr.bf16.gmra.mrb[0].mxu0 %v3268
      %v3980 = vpop.f32.mrb[0].mxu0
      %v3981 = vadd.f32 0.0, %v3980
      %v3982 = vpop.f32.mrb[0].mxu0
      %v3983 = vpop.f32.mrb[0].mxu0
      %v3984 = vadd.f32 0.0, %v3983
      %v3985 = vpop.f32.mrb[0].mxu0
      %3986 = vmatprep.mubr.bf16.mxu0 0
      %3987 = vmatmul.mubr.bf16.gmra.mrb[0].mxu0 %v3271
      %v3988 = vpop.f32.mrb[0].mxu0
      %v3989 = vadd.f32 0.0, %v3988
      %v3990 = vpop.f32.mrb[0].mxu0
      %v3991 = vpop.f32.mrb[0].mxu0
      %v3992 = vadd.f32 0.0, %v3991
      %v3993 = vpop.f32.mrb[0].mxu0
      %3994 = vmatprep.mubr.bf16.mxu0 0
      %3995 = vmatmul.mubr.bf16.gmra.mrb[0].mxu0 %v3274
      %v3996 = vpop.f32.mrb[0].mxu0
      %v3997 = vadd.f32 0.0, %v3996
      %v3998 = vpop.f32.mrb[0].mxu0
      %v3999 = vpop.f32.mrb[0].mxu0
      %v4000 = vadd.f32 0.0, %v3999
      %v4001 = vpop.f32.mrb[0].mxu0
      %4002 = vmatprep.mubr.bf16.mxu0 0
      %4003 = vmatmul.mubr.bf16.gmra.mrb[0].mxu0 %v3277
      %v4004 = vpop.f32.mrb[0].mxu0
      %v4005 = vadd.f32 0.0, %v4004
      %v4006 = vpop.f32.mrb[0].mxu0
      %v4007 = vpop.f32.mrb[0].mxu0
      %v4008 = vadd.f32 0.0, %v4007
      %v4009 = vpop.f32.mrb[0].mxu0
      %4010 = vmatprep.mubr.bf16.mxu0 0
      %4011 = vmatmul.mubr.bf16.gmra.mrb[0].mxu0 %v3280
      %v4012 = vpop.f32.mrb[0].mxu0
      %v4013 = vadd.f32 0.0, %v4012
      %v4014 = vpop.f32.mrb[0].mxu0
      %v4015 = vpop.f32.mrb[0].mxu0
      %v4016 = vadd.f32 0.0, %v4015
      %v4017 = vpop.f32.mrb[0].mxu0
      %4018 = vmatprep.mubr.bf16.mxu0 0
      %4019 = vmatmul.mubr.bf16.gmra.mrb[0].mxu0 %v3283
      %v4020 = vpop.f32.mrb[0].mxu0
      %v4021 = vadd.f32 0.0, %v4020
      %v4022 = vpop.f32.mrb[0].mxu0
      %v4023 = vpop.f32.mrb[0].mxu0
      %v4024 = vadd.f32 0.0, %v4023
      %v4025 = vpop.f32.mrb[0].mxu0
      %4026 = vmatprep.mubr.bf16.mxu0 0
      %4027 = vmatmul.mubr.bf16.gmra.mrb[0].mxu0 %v3286
      %v4028 = vpop.f32.mrb[0].mxu0
      %v4029 = vadd.f32 0.0, %v4028
      %v4030 = vpop.f32.mrb[0].mxu0
      %v4031 = vpop.f32.mrb[0].mxu0
      %v4032 = vadd.f32 0.0, %v4031
      %v4033 = vpop.f32.mrb[0].mxu0
      %4034 = vmatprep.mubr.bf16.mxu0 0
      %4035 = vmatmul.mubr.bf16.gmra.mrb[0].mxu0 %v3289
      %v4036 = vpop.f32.mrb[0].mxu0
      %v4037 = vadd.f32 0.0, %v4036
      %v4038 = vpop.f32.mrb[0].mxu0
      %v4039 = vpop.f32.mrb[0].mxu0
      %v4040 = vadd.f32 0.0, %v4039
      %v4041 = vpop.f32.mrb[0].mxu0
      %4042 = vmatprep.mubr.bf16.mxu0 0
      %4043 = vmatmul.mubr.bf16.gmra.mrb[0].mxu0 %v3885
      %v4044 = vpop.f32.mrb[0].mxu0
      %v4045 = vadd.f32 0.0, %v4044
      %v4046 = vpop.f32.mrb[0].mxu0
      %v4047 = vpop.f32.mrb[0].mxu0
      %v4048 = vadd.f32 0.0, %v4047
      %v4049 = vpop.f32.mrb[0].mxu0
      %4050 = vdwg.mxu0
      %v4051 = vadd.f32 %v3852, %v3925
      %v4052 = vadd.f32 %v3853, %v3928
      %v4053 = vadd.f32 %v3854, %v3933
      %v4054 = vadd.f32 %v3855, %v3936
      %v4055 = vadd.f32 %v3856, %v3941
      %v4056 = vadd.f32 %v3857, %v3944
      %v4057 = vadd.f32 %v3858, %v3949
      %v4058 = vadd.f32 %v3859, %v3952
      %v4059 = vadd.f32 %v3860, %v3957
      %v4060 = vadd.f32 %v3861, %v3960
      %v4061 = vadd.f32 %v3862, %v3965
      %v4062 = vadd.f32 %v3863, %v3968
      %v4063 = vadd.f32 %v3864, %v3973
      %v4064 = vadd.f32 %v3865, %v3976
      %v4065 = vadd.f32 %v3866, %v3981
      %v4066 = vadd.f32 %v3867, %v3984
      %v4067 = vadd.f32 %v3868, %v3989
      %v4068 = vadd.f32 %v3869, %v3992
      %v4069 = vadd.f32 %v3870, %v3997
      %v4070 = vadd.f32 %v3871, %v4000
      %v4071 = vadd.f32 %v3872, %v4005
      %v4072 = vadd.f32 %v3873, %v4008
      %v4073 = vadd.f32 %v3874, %v4013
      %v4074 = vadd.f32 %v3875, %v4016
      %v4075 = vadd.f32 %v3876, %v4021
      %v4076 = vadd.f32 %v3877, %v4024
      %v4077 = vadd.f32 %v3878, %v4029
      %v4078 = vadd.f32 %v3879, %v4032
      %v4079 = vadd.f32 %v3880, %v4037
      %v4080 = vadd.f32 %v3881, %v4040
      %v4081 = vadd.f32 %v3882, %v4045
      %v4082 = vadd.f32 %v3883, %v4048
      %v4084 = vsel %vm506, %v2584, 0
      %4086 = vmatprep.subr.bf16.mxu0 0
      %4087 = vmatpush1.bf16.msra.mxu0 %v4084
      %4088 = vmatprep.subr.bf16.mxu0 0
      %4089 = vmatpush1.bf16.msra.mxu0 0
      %4090 = vmatprep.subr.bf16.mxu0 0
      %4091 = vmatpush1.bf16.msra.mxu0 0
      %4092 = vmatprep.subr.bf16.mxu0 0
      %4093 = vmatpush1.bf16.msra.mxu0 0
      %4094 = vmatprep.subr.bf16.mxu0 0
      %4095 = vmatpush1.bf16.msra.mxu0 0
      %4096 = vmatprep.subr.bf16.mxu0 0
      %4097 = vmatpush1.bf16.msra.mxu0 0
      %4098 = vmatprep.subr.bf16.mxu0 0
      %4099 = vmatpush1.bf16.msra.mxu0 0
      %4100 = vmatprep.subr.bf16.mxu0 0
      %4101 = vmatpush1.bf16.msra.mxu0 0
      %4102 = vmatprep.subr.bf16.mxu0 0
      %4103 = vmatpush1.bf16.msra.mxu0 0
      %4104 = vmatprep.subr.bf16.mxu0 0
      %4105 = vmatpush1.bf16.msra.mxu0 0
      %4106 = vmatprep.subr.bf16.mxu0 0
      %4107 = vmatpush1.bf16.msra.mxu0 0
      %4108 = vmatprep.subr.bf16.mxu0 0
      %4109 = vmatpush1.bf16.msra.mxu0 0
      %4110 = vmatprep.subr.bf16.mxu0 0
      %4111 = vmatpush1.bf16.msra.mxu0 0
      %4112 = vmatprep.subr.bf16.mxu0 0
      %4113 = vmatpush1.bf16.msra.mxu0 0
      %4114 = vmatprep.subr.bf16.mxu0 0
      %4115 = vmatpush1.bf16.msra.mxu0 0
      %4116 = vmatprep.subr.bf16.mxu0 0
      %4117 = vmatpush1.bf16.msra.mxu0 0
      %4118 = vmatprep.mubr.bf16.mxu0 0
      %4119 = vmatmul.mubr.bf16.gmra.mrb[0].mxu0 %v3038
      %v4120 = vpop.f32.mrb[0].mxu0
      %v4121 = vadd.f32 0.0, %v4120
      %v4122 = vpop.f32.mrb[0].mxu0
      %v4123 = vpop.f32.mrb[0].mxu0
      %v4124 = vadd.f32 0.0, %v4123
      %v4125 = vpop.f32.mrb[0].mxu0
      %4126 = vmatprep.mubr.bf16.mxu0 0
      %4127 = vmatmul.mubr.bf16.gmra.mrb[0].mxu0 %v3044
      %v4128 = vpop.f32.mrb[0].mxu0
      %v4129 = vadd.f32 0.0, %v4128
      %v4130 = vpop.f32.mrb[0].mxu0
      %v4131 = vpop.f32.mrb[0].mxu0
      %v4132 = vadd.f32 0.0, %v4131
      %v4133 = vpop.f32.mrb[0].mxu0
      %4134 = vmatprep.mubr.bf16.mxu0 0
      %4135 = vmatmul.mubr.bf16.gmra.mrb[0].mxu0 %v3047
      %v4136 = vpop.f32.mrb[0].mxu0
      %v4137 = vadd.f32 0.0, %v4136
      %v4138 = vpop.f32.mrb[0].mxu0
      %v4139 = vpop.f32.mrb[0].mxu0
      %v4140 = vadd.f32 0.0, %v4139
      %v4141 = vpop.f32.mrb[0].mxu0
      %4142 = vmatprep.mubr.bf16.mxu0 0
      %4143 = vmatmul.mubr.bf16.gmra.mrb[0].mxu0 %v3050
      %v4144 = vpop.f32.mrb[0].mxu0
      %v4145 = vadd.f32 0.0, %v4144
      %v4146 = vpop.f32.mrb[0].mxu0
      %v4147 = vpop.f32.mrb[0].mxu0
      %v4148 = vadd.f32 0.0, %v4147
      %v4149 = vpop.f32.mrb[0].mxu0
      %4150 = vmatprep.mubr.bf16.mxu0 0
      %4151 = vmatmul.mubr.bf16.gmra.mrb[0].mxu0 %v3053
      %v4152 = vpop.f32.mrb[0].mxu0
      %v4153 = vadd.f32 0.0, %v4152
      %v4154 = vpop.f32.mrb[0].mxu0
      %v4155 = vpop.f32.mrb[0].mxu0
      %v4156 = vadd.f32 0.0, %v4155
      %v4157 = vpop.f32.mrb[0].mxu0
      %4158 = vmatprep.mubr.bf16.mxu0 0
      %4159 = vmatmul.mubr.bf16.gmra.mrb[0].mxu0 %v3056
      %v4160 = vpop.f32.mrb[0].mxu0
      %v4161 = vadd.f32 0.0, %v4160
      %v4162 = vpop.f32.mrb[0].mxu0
      %v4163 = vpop.f32.mrb[0].mxu0
      %v4164 = vadd.f32 0.0, %v4163
      %v4165 = vpop.f32.mrb[0].mxu0
      %4166 = vmatprep.mubr.bf16.mxu0 0
      %4167 = vmatmul.mubr.bf16.gmra.mrb[0].mxu0 %v3059
      %v4168 = vpop.f32.mrb[0].mxu0
      %v4169 = vadd.f32 0.0, %v4168
      %v4170 = vpop.f32.mrb[0].mxu0
      %v4171 = vpop.f32.mrb[0].mxu0
      %v4172 = vadd.f32 0.0, %v4171
      %v4173 = vpop.f32.mrb[0].mxu0
      %4174 = vmatprep.mubr.bf16.mxu0 0
      %4175 = vmatmul.mubr.bf16.gmra.mrb[0].mxu0 %v3062
      %v4176 = vpop.f32.mrb[0].mxu0
      %v4177 = vadd.f32 0.0, %v4176
      %v4178 = vpop.f32.mrb[0].mxu0
      %v4179 = vpop.f32.mrb[0].mxu0
      %v4180 = vadd.f32 0.0, %v4179
      %v4181 = vpop.f32.mrb[0].mxu0
      %4182 = vmatprep.mubr.bf16.mxu0 0
      %4183 = vmatmul.mubr.bf16.gmra.mrb[0].mxu0 %v3065
      %v4184 = vpop.f32.mrb[0].mxu0
      %v4185 = vadd.f32 0.0, %v4184
      %v4186 = vpop.f32.mrb[0].mxu0
      %v4187 = vpop.f32.mrb[0].mxu0
      %v4188 = vadd.f32 0.0, %v4187
      %v4189 = vpop.f32.mrb[0].mxu0
      %4190 = vmatprep.mubr.bf16.mxu0 0
      %4191 = vmatmul.mubr.bf16.gmra.mrb[0].mxu0 %v3068
      %v4192 = vpop.f32.mrb[0].mxu0
      %v4193 = vadd.f32 0.0, %v4192
      %v4194 = vpop.f32.mrb[0].mxu0
      %v4195 = vpop.f32.mrb[0].mxu0
      %v4196 = vadd.f32 0.0, %v4195
      %v4197 = vpop.f32.mrb[0].mxu0
      %4198 = vmatprep.mubr.bf16.mxu0 0
      %4199 = vmatmul.mubr.bf16.gmra.mrb[0].mxu0 %v3071
      %v4200 = vpop.f32.mrb[0].mxu0
      %v4201 = vadd.f32 0.0, %v4200
      %v4202 = vpop.f32.mrb[0].mxu0
      %v4203 = vpop.f32.mrb[0].mxu0
      %v4204 = vadd.f32 0.0, %v4203
      %v4205 = vpop.f32.mrb[0].mxu0
      %4206 = vmatprep.mubr.bf16.mxu0 0
      %4207 = vmatmul.mubr.bf16.gmra.mrb[0].mxu0 %v3074
      %v4208 = vpop.f32.mrb[0].mxu0
      %v4209 = vadd.f32 0.0, %v4208
      %v4210 = vpop.f32.mrb[0].mxu0
      %v4211 = vpop.f32.mrb[0].mxu0
      %v4212 = vadd.f32 0.0, %v4211
      %v4213 = vpop.f32.mrb[0].mxu0
      %4214 = vmatprep.mubr.bf16.mxu0 0
      %4215 = vmatmul.mubr.bf16.gmra.mrb[0].mxu0 %v3077
      %v4216 = vpop.f32.mrb[0].mxu0
      %v4217 = vadd.f32 0.0, %v4216
      %v4218 = vpop.f32.mrb[0].mxu0
      %v4219 = vpop.f32.mrb[0].mxu0
      %v4220 = vadd.f32 0.0, %v4219
      %v4221 = vpop.f32.mrb[0].mxu0
      %4222 = vmatprep.mubr.bf16.mxu0 0
      %4223 = vmatmul.mubr.bf16.gmra.mrb[0].mxu0 %v3080
      %v4224 = vpop.f32.mrb[0].mxu0
      %v4225 = vadd.f32 0.0, %v4224
      %v4226 = vpop.f32.mrb[0].mxu0
      %v4227 = vpop.f32.mrb[0].mxu0
      %v4228 = vadd.f32 0.0, %v4227
      %v4229 = vpop.f32.mrb[0].mxu0
      %4230 = vmatprep.mubr.bf16.mxu0 0
      %4231 = vmatmul.mubr.bf16.gmra.mrb[0].mxu0 %v3488
      %v4232 = vpop.f32.mrb[0].mxu0
      %v4233 = vadd.f32 0.0, %v4232
      %v4234 = vpop.f32.mrb[0].mxu0
      %v4235 = vpop.f32.mrb[0].mxu0
      %v4236 = vadd.f32 0.0, %v4235
      %v4237 = vpop.f32.mrb[0].mxu0
      %4238 = vmatprep.mubr.bf16.mxu0 0
      %4239 = vmatmul.mubr.bf16.gmra.mrb[0].mxu0 %v3080
      %v4240 = vpop.f32.mrb[0].mxu0
      %v4241 = vadd.f32 0.0, %v4240
      %v4242 = vpop.f32.mrb[0].mxu0
      %v4243 = vpop.f32.mrb[0].mxu0
      %v4244 = vadd.f32 0.0, %v4243
      %v4245 = vpop.f32.mrb[0].mxu0
      %4246 = vdwg.mxu0
      %v4247 = vadd.f32 %v4051, %v4121
      %v4248 = vadd.f32 %v4052, %v4124
      %v4249 = vadd.f32 %v4053, %v4129
      %v4250 = vadd.f32 %v4054, %v4132
      %v4251 = vadd.f32 %v4055, %v4137
      %v4252 = vadd.f32 %v4056, %v4140
      %v4253 = vadd.f32 %v4057, %v4145
      %v4254 = vadd.f32 %v4058, %v4148
      %v4255 = vadd.f32 %v4059, %v4153
      %v4256 = vadd.f32 %v4060, %v4156
      %v4257 = vadd.f32 %v4061, %v4161
      %v4258 = vadd.f32 %v4062, %v4164
      %v4259 = vadd.f32 %v4063, %v4169
      %v4260 = vadd.f32 %v4064, %v4172
      %v4261 = vadd.f32 %v4065, %v4177
      %v4262 = vadd.f32 %v4066, %v4180
      %v4263 = vadd.f32 %v4067, %v4185
      %v4264 = vadd.f32 %v4068, %v4188
      %v4265 = vadd.f32 %v4069, %v4193
      %v4266 = vadd.f32 %v4070, %v4196
      %v4267 = vadd.f32 %v4071, %v4201
      %v4268 = vadd.f32 %v4072, %v4204
      %v4269 = vadd.f32 %v4073, %v4209
      %v4270 = vadd.f32 %v4074, %v4212
      %v4271 = vadd.f32 %v4075, %v4217
      %v4272 = vadd.f32 %v4076, %v4220
      %v4273 = vadd.f32 %v4077, %v4225
      %v4274 = vadd.f32 %v4078, %v4228
      %v4275 = vadd.f32 %v4079, %v4233
      %v4276 = vadd.f32 %v4080, %v4236
      %v4277 = vadd.f32 %v4081, %v4241
      %v4278 = vadd.f32 %v4082, %v4244
      %v4280 = vsel %vm506, %v2585, 0
      %4282 = vmatprep.subr.bf16.mxu0 0
      %4283 = vmatpush1.bf16.msra.mxu0 %v4280
      %4284 = vmatprep.subr.bf16.mxu0 0
      %4285 = vmatpush1.bf16.msra.mxu0 0
      %4286 = vmatprep.subr.bf16.mxu0 0
      %4287 = vmatpush1.bf16.msra.mxu0 0
      %4288 = vmatprep.subr.bf16.mxu0 0
      %4289 = vmatpush1.bf16.msra.mxu0 0
      %4290 = vmatprep.subr.bf16.mxu0 0
      %4291 = vmatpush1.bf16.msra.mxu0 0
      %4292 = vmatprep.subr.bf16.mxu0 0
      %4293 = vmatpush1.bf16.msra.mxu0 0
      %4294 = vmatprep.subr.bf16.mxu0 0
      %4295 = vmatpush1.bf16.msra.mxu0 0
      %4296 = vmatprep.subr.bf16.mxu0 0
      %4297 = vmatpush1.bf16.msra.mxu0 0
      %4298 = vmatprep.subr.bf16.mxu0 0
      %4299 = vmatpush1.bf16.msra.mxu0 0
      %4300 = vmatprep.subr.bf16.mxu0 0
      %4301 = vmatpush1.bf16.msra.mxu0 0
      %4302 = vmatprep.subr.bf16.mxu0 0
      %4303 = vmatpush1.bf16.msra.mxu0 0
      %4304 = vmatprep.subr.bf16.mxu0 0
      %4305 = vmatpush1.bf16.msra.mxu0 0
      %4306 = vmatprep.subr.bf16.mxu0 0
      %4307 = vmatpush1.bf16.msra.mxu0 0
      %4308 = vmatprep.subr.bf16.mxu0 0
      %4309 = vmatpush1.bf16.msra.mxu0 0
      %4310 = vmatprep.subr.bf16.mxu0 0
      %4311 = vmatpush1.bf16.msra.mxu0 0
      %4312 = vmatprep.subr.bf16.mxu0 0
      %4313 = vmatpush1.bf16.msra.mxu0 0
      %4314 = vmatprep.mubr.bf16.mxu0 0
      %4315 = vmatmul.mubr.bf16.gmra.mrb[0].mxu0 %v2843
      %v4316 = vpop.f32.mrb[0].mxu0
      %v4317 = vadd.f32 0.0, %v4316
      %v4318 = vpop.f32.mrb[0].mxu0
      %v4319 = vpop.f32.mrb[0].mxu0
      %v4320 = vadd.f32 0.0, %v4319
      %v4321 = vpop.f32.mrb[0].mxu0
      %4322 = vmatprep.mubr.bf16.mxu0 0
      %4323 = vmatmul.mubr.bf16.gmra.mrb[0].mxu0 %v2847
      %v4324 = vpop.f32.mrb[0].mxu0
      %v4325 = vadd.f32 0.0, %v4324
      %v4326 = vpop.f32.mrb[0].mxu0
      %v4327 = vpop.f32.mrb[0].mxu0
      %v4328 = vadd.f32 0.0, %v4327
      %v4329 = vpop.f32.mrb[0].mxu0
      %4330 = vmatprep.mubr.bf16.mxu0 0
      %4331 = vmatmul.mubr.bf16.gmra.mrb[0].mxu0 %v2849
      %v4332 = vpop.f32.mrb[0].mxu0
      %v4333 = vadd.f32 0.0, %v4332
      %v4334 = vpop.f32.mrb[0].mxu0
      %v4335 = vpop.f32.mrb[0].mxu0
      %v4336 = vadd.f32 0.0, %v4335
      %v4337 = vpop.f32.mrb[0].mxu0
      %4338 = vmatprep.mubr.bf16.mxu0 0
      %4339 = vmatmul.mubr.bf16.gmra.mrb[0].mxu0 %v2851
      %v4340 = vpop.f32.mrb[0].mxu0
      %v4341 = vadd.f32 0.0, %v4340
      %v4342 = vpop.f32.mrb[0].mxu0
      %v4343 = vpop.f32.mrb[0].mxu0
      %v4344 = vadd.f32 0.0, %v4343
      %v4345 = vpop.f32.mrb[0].mxu0
      %4346 = vmatprep.mubr.bf16.mxu0 0
      %4347 = vmatmul.mubr.bf16.gmra.mrb[0].mxu0 %v2853
      %v4348 = vpop.f32.mrb[0].mxu0
      %v4349 = vadd.f32 0.0, %v4348
      %v4350 = vpop.f32.mrb[0].mxu0
      %v4351 = vpop.f32.mrb[0].mxu0
      %v4352 = vadd.f32 0.0, %v4351
      %v4353 = vpop.f32.mrb[0].mxu0
      %4354 = vmatprep.mubr.bf16.mxu0 0
      %4355 = vmatmul.mubr.bf16.gmra.mrb[0].mxu0 %v2855
      %v4356 = vpop.f32.mrb[0].mxu0
      %v4357 = vadd.f32 0.0, %v4356
      %v4358 = vpop.f32.mrb[0].mxu0
      %v4359 = vpop.f32.mrb[0].mxu0
      %v4360 = vadd.f32 0.0, %v4359
      %v4361 = vpop.f32.mrb[0].mxu0
      %4362 = vmatprep.mubr.bf16.mxu0 0
      %4363 = vmatmul.mubr.bf16.gmra.mrb[0].mxu0 %v2857
      %v4364 = vpop.f32.mrb[0].mxu0
      %v4365 = vadd.f32 0.0, %v4364
      %v4366 = vpop.f32.mrb[0].mxu0
      %v4367 = vpop.f32.mrb[0].mxu0
      %v4368 = vadd.f32 0.0, %v4367
      %v4369 = vpop.f32.mrb[0].mxu0
      %4370 = vmatprep.mubr.bf16.mxu0 0
      %4371 = vmatmul.mubr.bf16.gmra.mrb[0].mxu0 %v2859
      %v4372 = vpop.f32.mrb[0].mxu0
      %v4373 = vadd.f32 0.0, %v4372
      %v4374 = vpop.f32.mrb[0].mxu0
      %v4375 = vpop.f32.mrb[0].mxu0
      %v4376 = vadd.f32 0.0, %v4375
      %v4377 = vpop.f32.mrb[0].mxu0
      %4378 = vmatprep.mubr.bf16.mxu0 0
      %4379 = vmatmul.mubr.bf16.gmra.mrb[0].mxu0 %v2861
      %v4380 = vpop.f32.mrb[0].mxu0
      %v4381 = vadd.f32 0.0, %v4380
      %v4382 = vpop.f32.mrb[0].mxu0
      %v4383 = vpop.f32.mrb[0].mxu0
      %v4384 = vadd.f32 0.0, %v4383
      %v4385 = vpop.f32.mrb[0].mxu0
      %4386 = vmatprep.mubr.bf16.mxu0 0
      %4387 = vmatmul.mubr.bf16.gmra.mrb[0].mxu0 %v2863
      %v4388 = vpop.f32.mrb[0].mxu0
      %v4389 = vadd.f32 0.0, %v4388
      %v4390 = vpop.f32.mrb[0].mxu0
      %v4391 = vpop.f32.mrb[0].mxu0
      %v4392 = vadd.f32 0.0, %v4391
      %v4393 = vpop.f32.mrb[0].mxu0
      %4394 = vmatprep.mubr.bf16.mxu0 0
      %4395 = vmatmul.mubr.bf16.gmra.mrb[0].mxu0 %v2865
      %v4396 = vpop.f32.mrb[0].mxu0
      %v4397 = vadd.f32 0.0, %v4396
      %v4398 = vpop.f32.mrb[0].mxu0
      %v4399 = vpop.f32.mrb[0].mxu0
      %v4400 = vadd.f32 0.0, %v4399
      %v4401 = vpop.f32.mrb[0].mxu0
      %4402 = vmatprep.mubr.bf16.mxu0 0
      %4403 = vmatmul.mubr.bf16.gmra.mrb[0].mxu0 %v2867
      %v4404 = vpop.f32.mrb[0].mxu0
      %v4405 = vadd.f32 0.0, %v4404
      %v4406 = vpop.f32.mrb[0].mxu0
      %v4407 = vpop.f32.mrb[0].mxu0
      %v4408 = vadd.f32 0.0, %v4407
      %v4409 = vpop.f32.mrb[0].mxu0
      %4410 = vmatprep.mubr.bf16.mxu0 0
      %4411 = vmatmul.mubr.bf16.gmra.mrb[0].mxu0 %v2869
      %v4412 = vpop.f32.mrb[0].mxu0
      %v4413 = vadd.f32 0.0, %v4412
      %v4414 = vpop.f32.mrb[0].mxu0
      %v4415 = vpop.f32.mrb[0].mxu0
      %v4416 = vadd.f32 0.0, %v4415
      %v4417 = vpop.f32.mrb[0].mxu0
      %4418 = vmatprep.mubr.bf16.mxu0 0
      %4419 = vmatmul.mubr.bf16.gmra.mrb[0].mxu0 %v2871
      %v4420 = vpop.f32.mrb[0].mxu0
      %v4421 = vadd.f32 0.0, %v4420
      %v4422 = vpop.f32.mrb[0].mxu0
      %v4423 = vpop.f32.mrb[0].mxu0
      %v4424 = vadd.f32 0.0, %v4423
      %v4425 = vpop.f32.mrb[0].mxu0
      %4426 = vmatprep.mubr.bf16.mxu0 0
      %4427 = vmatmul.mubr.bf16.gmra.mrb[0].mxu0 %v3686
      %v4428 = vpop.f32.mrb[0].mxu0
      %v4429 = vadd.f32 0.0, %v4428
      %v4430 = vpop.f32.mrb[0].mxu0
      %v4431 = vpop.f32.mrb[0].mxu0
      %v4432 = vadd.f32 0.0, %v4431
      %v4433 = vpop.f32.mrb[0].mxu0
      %4434 = vmatprep.mubr.bf16.mxu0 0
      %4435 = vmatmul.mubr.bf16.gmra.mrb[0].mxu0 %v2871
      %v4436 = vpop.f32.mrb[0].mxu0
      %v4437 = vadd.f32 0.0, %v4436
      %v4438 = vpop.f32.mrb[0].mxu0
      %v4439 = vpop.f32.mrb[0].mxu0
      %v4440 = vadd.f32 0.0, %v4439
      %v4441 = vpop.f32.mrb[0].mxu0
      %4442 = vdwg.mxu0
      %v4443 = vadd.f32 %v4247, %v4317
      %v4444 = vadd.f32 %v4248, %v4320
      %v4445 = vadd.f32 %v4249, %v4325
      %v4446 = vadd.f32 %v4250, %v4328
      %v4447 = vadd.f32 %v4251, %v4333
      %v4448 = vadd.f32 %v4252, %v4336
      %v4449 = vadd.f32 %v4253, %v4341
      %v4450 = vadd.f32 %v4254, %v4344
      %v4451 = vadd.f32 %v4255, %v4349
      %v4452 = vadd.f32 %v4256, %v4352
      %v4453 = vadd.f32 %v4257, %v4357
      %v4454 = vadd.f32 %v4258, %v4360
      %v4455 = vadd.f32 %v4259, %v4365
      %v4456 = vadd.f32 %v4260, %v4368
      %v4457 = vadd.f32 %v4261, %v4373
      %v4458 = vadd.f32 %v4262, %v4376
      %v4459 = vadd.f32 %v4263, %v4381
      %v4460 = vadd.f32 %v4264, %v4384
      %v4461 = vadd.f32 %v4265, %v4389
      %v4462 = vadd.f32 %v4266, %v4392
      %v4463 = vadd.f32 %v4267, %v4397
      %v4464 = vadd.f32 %v4268, %v4400
      %v4465 = vadd.f32 %v4269, %v4405
      %v4466 = vadd.f32 %v4270, %v4408
      %v4467 = vadd.f32 %v4271, %v4413
      %v4468 = vadd.f32 %v4272, %v4416
      %v4469 = vadd.f32 %v4273, %v4421
      %v4470 = vadd.f32 %v4274, %v4424
      %v4471 = vadd.f32 %v4275, %v4429
      %v4472 = vadd.f32 %v4276, %v4432
      %v4473 = vadd.f32 %v4277, %v4437
      %v4474 = vadd.f32 %v4278, %v4440
      %v4476 = vsel %vm506, %v2586, 0
      %4478 = vmatprep.subr.bf16.mxu0 0
      %4479 = vmatpush1.bf16.msra.mxu0 %v4476
      %4480 = vmatprep.subr.bf16.mxu0 0
      %4481 = vmatpush1.bf16.msra.mxu0 0
      %4482 = vmatprep.subr.bf16.mxu0 0
      %4483 = vmatpush1.bf16.msra.mxu0 0
      %4484 = vmatprep.subr.bf16.mxu0 0
      %4485 = vmatpush1.bf16.msra.mxu0 0
      %4486 = vmatprep.subr.bf16.mxu0 0
      %4487 = vmatpush1.bf16.msra.mxu0 0
      %4488 = vmatprep.subr.bf16.mxu0 0
      %4489 = vmatpush1.bf16.msra.mxu0 0
      %4490 = vmatprep.subr.bf16.mxu0 0
      %4491 = vmatpush1.bf16.msra.mxu0 0
      %4492 = vmatprep.subr.bf16.mxu0 0
      %4493 = vmatpush1.bf16.msra.mxu0 0
      %4494 = vmatprep.subr.bf16.mxu0 0
      %4495 = vmatpush1.bf16.msra.mxu0 0
      %4496 = vmatprep.subr.bf16.mxu0 0
      %4497 = vmatpush1.bf16.msra.mxu0 0
      %4498 = vmatprep.subr.bf16.mxu0 0
      %4499 = vmatpush1.bf16.msra.mxu0 0
      %4500 = vmatprep.subr.bf16.mxu0 0
      %4501 = vmatpush1.bf16.msra.mxu0 0
      %4502 = vmatprep.subr.bf16.mxu0 0
      %4503 = vmatpush1.bf16.msra.mxu0 0
      %4504 = vmatprep.subr.bf16.mxu0 0
      %4505 = vmatpush1.bf16.msra.mxu0 0
      %4506 = vmatprep.subr.bf16.mxu0 0
      %4507 = vmatpush1.bf16.msra.mxu0 0
      %4508 = vmatprep.subr.bf16.mxu0 0
      %4509 = vmatpush1.bf16.msra.mxu0 0
      %4510 = vmatprep.mubr.bf16.mxu0 0
      %4511 = vmatmul.mubr.bf16.gmra.mrb[0].mxu0 %v3247
      %v4512 = vpop.f32.mrb[0].mxu0
      %v4513 = vadd.f32 0.0, %v4512
      %v4514 = vpop.f32.mrb[0].mxu0
      %v4515 = vpop.f32.mrb[0].mxu0
      %v4516 = vadd.f32 0.0, %v4515
      %v4517 = vpop.f32.mrb[0].mxu0
      %4518 = vmatprep.mubr.bf16.mxu0 0
      %4519 = vmatmul.mubr.bf16.gmra.mrb[0].mxu0 %v3253
      %v4520 = vpop.f32.mrb[0].mxu0
      %v4521 = vadd.f32 0.0, %v4520
      %v4522 = vpop.f32.mrb[0].mxu0
      %v4523 = vpop.f32.mrb[0].mxu0
      %v4524 = vadd.f32 0.0, %v4523
      %v4525 = vpop.f32.mrb[0].mxu0
      %4526 = vmatprep.mubr.bf16.mxu0 0
      %4527 = vmatmul.mubr.bf16.gmra.mrb[0].mxu0 %v3256
      %v4528 = vpop.f32.mrb[0].mxu0
      %v4529 = vadd.f32 0.0, %v4528
      %v4530 = vpop.f32.mrb[0].mxu0
      %v4531 = vpop.f32.mrb[0].mxu0
      %v4532 = vadd.f32 0.0, %v4531
      %v4533 = vpop.f32.mrb[0].mxu0
      %4534 = vmatprep.mubr.bf16.mxu0 0
      %4535 = vmatmul.mubr.bf16.gmra.mrb[0].mxu0 %v3259
      %v4536 = vpop.f32.mrb[0].mxu0
      %v4537 = vadd.f32 0.0, %v4536
      %v4538 = vpop.f32.mrb[0].mxu0
      %v4539 = vpop.f32.mrb[0].mxu0
      %v4540 = vadd.f32 0.0, %v4539
      %v4541 = vpop.f32.mrb[0].mxu0
      %4542 = vmatprep.mubr.bf16.mxu0 0
      %4543 = vmatmul.mubr.bf16.gmra.mrb[0].mxu0 %v3262
      %v4544 = vpop.f32.mrb[0].mxu0
      %v4545 = vadd.f32 0.0, %v4544
      %v4546 = vpop.f32.mrb[0].mxu0
      %v4547 = vpop.f32.mrb[0].mxu0
      %v4548 = vadd.f32 0.0, %v4547
      %v4549 = vpop.f32.mrb[0].mxu0
      %4550 = vmatprep.mubr.bf16.mxu0 0
      %4551 = vmatmul.mubr.bf16.gmra.mrb[0].mxu0 %v3265
      %v4552 = vpop.f32.mrb[0].mxu0
      %v4553 = vadd.f32 0.0, %v4552
      %v4554 = vpop.f32.mrb[0].mxu0
      %v4555 = vpop.f32.mrb[0].mxu0
      %v4556 = vadd.f32 0.0, %v4555
      %v4557 = vpop.f32.mrb[0].mxu0
      %4558 = vmatprep.mubr.bf16.mxu0 0
      %4559 = vmatmul.mubr.bf16.gmra.mrb[0].mxu0 %v3268
      %v4560 = vpop.f32.mrb[0].mxu0
      %v4561 = vadd.f32 0.0, %v4560
      %v4562 = vpop.f32.mrb[0].mxu0
      %v4563 = vpop.f32.mrb[0].mxu0
      %v4564 = vadd.f32 0.0, %v4563
      %v4565 = vpop.f32.mrb[0].mxu0
      %4566 = vmatprep.mubr.bf16.mxu0 0
      %4567 = vmatmul.mubr.bf16.gmra.mrb[0].mxu0 %v3271
      %v4568 = vpop.f32.mrb[0].mxu0
      %v4569 = vadd.f32 0.0, %v4568
      %v4570 = vpop.f32.mrb[0].mxu0
      %v4571 = vpop.f32.mrb[0].mxu0
      %v4572 = vadd.f32 0.0, %v4571
      %v4573 = vpop.f32.mrb[0].mxu0
      %4574 = vmatprep.mubr.bf16.mxu0 0
      %4575 = vmatmul.mubr.bf16.gmra.mrb[0].mxu0 %v3274
      %v4576 = vpop.f32.mrb[0].mxu0
      %v4577 = vadd.f32 0.0, %v4576
      %v4578 = vpop.f32.mrb[0].mxu0
      %v4579 = vpop.f32.mrb[0].mxu0
      %v4580 = vadd.f32 0.0, %v4579
      %v4581 = vpop.f32.mrb[0].mxu0
      %4582 = vmatprep.mubr.bf16.mxu0 0
      %4583 = vmatmul.mubr.bf16.gmra.mrb[0].mxu0 %v3277
      %v4584 = vpop.f32.mrb[0].mxu0
      %v4585 = vadd.f32 0.0, %v4584
      %v4586 = vpop.f32.mrb[0].mxu0
      %v4587 = vpop.f32.mrb[0].mxu0
      %v4588 = vadd.f32 0.0, %v4587
      %v4589 = vpop.f32.mrb[0].mxu0
      %4590 = vmatprep.mubr.bf16.mxu0 0
      %4591 = vmatmul.mubr.bf16.gmra.mrb[0].mxu0 %v3280
      %v4592 = vpop.f32.mrb[0].mxu0
      %v4593 = vadd.f32 0.0, %v4592
      %v4594 = vpop.f32.mrb[0].mxu0
      %v4595 = vpop.f32.mrb[0].mxu0
      %v4596 = vadd.f32 0.0, %v4595
      %v4597 = vpop.f32.mrb[0].mxu0
      %4598 = vmatprep.mubr.bf16.mxu0 0
      %4599 = vmatmul.mubr.bf16.gmra.mrb[0].mxu0 %v3283
      %v4600 = vpop.f32.mrb[0].mxu0
      %v4601 = vadd.f32 0.0, %v4600
      %v4602 = vpop.f32.mrb[0].mxu0
      %v4603 = vpop.f32.mrb[0].mxu0
      %v4604 = vadd.f32 0.0, %v4603
      %v4605 = vpop.f32.mrb[0].mxu0
      %4606 = vmatprep.mubr.bf16.mxu0 0
      %4607 = vmatmul.mubr.bf16.gmra.mrb[0].mxu0 %v3286
      %v4608 = vpop.f32.mrb[0].mxu0
      %v4609 = vadd.f32 0.0, %v4608
      %v4610 = vpop.f32.mrb[0].mxu0
      %v4611 = vpop.f32.mrb[0].mxu0
      %v4612 = vadd.f32 0.0, %v4611
      %v4613 = vpop.f32.mrb[0].mxu0
      %4614 = vmatprep.mubr.bf16.mxu0 0
      %4615 = vmatmul.mubr.bf16.gmra.mrb[0].mxu0 %v3289
      %v4616 = vpop.f32.mrb[0].mxu0
      %v4617 = vadd.f32 0.0, %v4616
      %v4618 = vpop.f32.mrb[0].mxu0
      %v4619 = vpop.f32.mrb[0].mxu0
      %v4620 = vadd.f32 0.0, %v4619
      %v4621 = vpop.f32.mrb[0].mxu0
      %4622 = vmatprep.mubr.bf16.mxu0 0
      %4623 = vmatmul.mubr.bf16.gmra.mrb[0].mxu0 %v3885
      %v4624 = vpop.f32.mrb[0].mxu0
      %v4625 = vadd.f32 0.0, %v4624
      %v4626 = vpop.f32.mrb[0].mxu0
      %v4627 = vpop.f32.mrb[0].mxu0
      %v4628 = vadd.f32 0.0, %v4627
      %v4629 = vpop.f32.mrb[0].mxu0
      %4630 = vmatprep.mubr.bf16.mxu0 0
      %4631 = vmatmul.mubr.bf16.gmra.mrb[0].mxu0 %v3289
      %v4632 = vpop.f32.mrb[0].mxu0
      %v4633 = vadd.f32 0.0, %v4632
      %v4634 = vpop.f32.mrb[0].mxu0
      %v4635 = vpop.f32.mrb[0].mxu0
      %v4636 = vadd.f32 0.0, %v4635
      %v4637 = vpop.f32.mrb[0].mxu0
      %4638 = vdwg.mxu0
      %v4639 = vadd.f32 %v4443, %v4513
      %v4640 = vadd.f32 %v4444, %v4516
      %v4641 = vadd.f32 %v4445, %v4521
      %v4642 = vadd.f32 %v4446, %v4524
      %v4643 = vadd.f32 %v4447, %v4529
      %v4644 = vadd.f32 %v4448, %v4532
      %v4645 = vadd.f32 %v4449, %v4537
      %v4646 = vadd.f32 %v4450, %v4540
      %v4647 = vadd.f32 %v4451, %v4545
      %v4648 = vadd.f32 %v4452, %v4548
      %v4649 = vadd.f32 %v4453, %v4553
      %v4650 = vadd.f32 %v4454, %v4556
      %v4651 = vadd.f32 %v4455, %v4561
      %v4652 = vadd.f32 %v4456, %v4564
      %v4653 = vadd.f32 %v4457, %v4569
      %v4654 = vadd.f32 %v4458, %v4572
      %v4655 = vadd.f32 %v4459, %v4577
      %v4656 = vadd.f32 %v4460, %v4580
      %v4657 = vadd.f32 %v4461, %v4585
      %v4658 = vadd.f32 %v4462, %v4588
      %v4659 = vadd.f32 %v4463, %v4593
      %v4660 = vadd.f32 %v4464, %v4596
      %v4661 = vadd.f32 %v4465, %v4601
      %v4662 = vadd.f32 %v4466, %v4604
      %v4663 = vadd.f32 %v4467, %v4609
      %v4664 = vadd.f32 %v4468, %v4612
      %v4665 = vadd.f32 %v4469, %v4617
      %v4666 = vadd.f32 %v4470, %v4620
      %v4667 = vadd.f32 %v4471, %v4625
      %v4668 = vadd.f32 %v4472, %v4628
      %v4669 = vadd.f32 %v4473, %v4633
      %v4670 = vadd.f32 %v4474, %v4636
      %v4671 = vsel %vm475, %v4639, 0.0
      %v4672 = vsel %vm475, %v4640, 0.0
      %v4673 = vadd.f32 %v4671, %v4672
      %v4674 = vsel %vm475, %v4641, 0.0
      %v4675 = vadd.f32 %v4673, %v4674
      %v4676 = vsel %vm475, %v4642, 0.0
      %v4677 = vadd.f32 %v4675, %v4676
      %v4678 = vsel %vm475, %v4643, 0.0
      %v4679 = vadd.f32 %v4677, %v4678
      %v4680 = vsel %vm475, %v4644, 0.0
      %v4681 = vadd.f32 %v4679, %v4680
      %v4682 = vsel %vm475, %v4645, 0.0
      %v4683 = vadd.f32 %v4681, %v4682
      %v4684 = vsel %vm475, %v4646, 0.0
      %v4685 = vadd.f32 %v4683, %v4684
      %v4686 = vsel %vm475, %v4647, 0.0
      %v4687 = vadd.f32 %v4685, %v4686
      %v4688 = vsel %vm475, %v4648, 0.0
      %v4689 = vadd.f32 %v4687, %v4688
      %v4690 = vsel %vm475, %v4649, 0.0
      %v4691 = vadd.f32 %v4689, %v4690
      %v4692 = vsel %vm475, %v4650, 0.0
      %v4693 = vadd.f32 %v4691, %v4692
      %v4694 = vsel %vm475, %v4651, 0.0
      %v4695 = vadd.f32 %v4693, %v4694
      %v4696 = vsel %vm475, %v4652, 0.0
      %v4697 = vadd.f32 %v4695, %v4696
      %v4698 = vsel %vm475, %v4653, 0.0
      %v4699 = vadd.f32 %v4697, %v4698
      %v4700 = vsel %vm475, %v4654, 0.0
      %v4701 = vadd.f32 %v4699, %v4700
      %v4702 = vsel %vm475, %v4655, 0.0
      %v4703 = vadd.f32 %v4701, %v4702
      %v4704 = vsel %vm475, %v4656, 0.0
      %v4705 = vadd.f32 %v4703, %v4704
      %v4706 = vsel %vm475, %v4657, 0.0
      %v4707 = vadd.f32 %v4705, %v4706
      %v4708 = vsel %vm475, %v4658, 0.0
      %v4709 = vadd.f32 %v4707, %v4708
      %v4710 = vsel %vm475, %v4659, 0.0
      %v4711 = vadd.f32 %v4709, %v4710
      %v4712 = vsel %vm475, %v4660, 0.0
      %v4713 = vadd.f32 %v4711, %v4712
      %v4714 = vsel %vm475, %v4661, 0.0
      %v4715 = vadd.f32 %v4713, %v4714
      %v4716 = vsel %vm475, %v4662, 0.0
      %v4717 = vadd.f32 %v4715, %v4716
      %v4718 = vsel %vm475, %v4663, 0.0
      %v4719 = vadd.f32 %v4717, %v4718
      %v4720 = vsel %vm475, %v4664, 0.0
      %v4721 = vadd.f32 %v4719, %v4720
      %v4722 = vsel %vm475, %v4665, 0.0
      %v4723 = vadd.f32 %v4721, %v4722
      %v4724 = vsel %vm475, %v4666, 0.0
      %v4725 = vadd.f32 %v4723, %v4724
      %v4726 = vsel %vm475, %v4667, 0.0
      %v4727 = vadd.f32 %v4725, %v4726
      %v4728 = vsel %vm475, %v4668, 0.0
      %v4729 = vadd.f32 %v4727, %v4728
      %v4730 = vsel %vm475, %v4669, 0.0
      %v4731 = vadd.f32 %v4729, %v4730
      %v4732 = vsel %vm475, %v4670, 0.0
      %v4733 = vadd.f32 %v4731, %v4732
      %v4734 = vrot.slane %v4733, 4
      %v4735 = vadd.f32 %v4733, %v4734
      %v4736 = vrot.slane %v4735, 2
      %v4737 = vadd.f32 %v4735, %v4736
      %v4738 = vrot.slane %v4737, 1
      %v4739 = vadd.f32 %v4737, %v4738
      %v4740 = vmul.f32 %v4739, 0.00390625
      %v4741 = vmul.f32 %v4639, %v4639
      %v4742 = vmul.f32 %v4640, %v4640
      %v4743 = vmul.f32 %v4641, %v4641
      %v4744 = vmul.f32 %v4642, %v4642
      %v4745 = vmul.f32 %v4643, %v4643
      %v4746 = vmul.f32 %v4644, %v4644
      %v4747 = vmul.f32 %v4645, %v4645
      %v4748 = vmul.f32 %v4646, %v4646
      %v4749 = vmul.f32 %v4647, %v4647
      %v4750 = vmul.f32 %v4648, %v4648
      %v4751 = vmul.f32 %v4649, %v4649
      %v4752 = vmul.f32 %v4650, %v4650
      %v4753 = vmul.f32 %v4651, %v4651
      %v4754 = vmul.f32 %v4652, %v4652
      %v4755 = vmul.f32 %v4653, %v4653
      %v4756 = vmul.f32 %v4654, %v4654
      %v4757 = vmul.f32 %v4655, %v4655
      %v4758 = vmul.f32 %v4656, %v4656
      %v4759 = vmul.f32 %v4657, %v4657
      %v4760 = vmul.f32 %v4658, %v4658
      %v4761 = vmul.f32 %v4659, %v4659
      %v4762 = vmul.f32 %v4660, %v4660
      %v4763 = vmul.f32 %v4661, %v4661
      %v4764 = vmul.f32 %v4662, %v4662
      %v4765 = vmul.f32 %v4663, %v4663
      %v4766 = vmul.f32 %v4664, %v4664
      %v4767 = vmul.f32 %v4665, %v4665
      %v4768 = vmul.f32 %v4666, %v4666
      %v4769 = vmul.f32 %v4667, %v4667
      %v4770 = vmul.f32 %v4668, %v4668
      %v4771 = vmul.f32 %v4669, %v4669
      %v4772 = vmul.f32 %v4670, %v4670
      %v4773 = vsel %vm475, %v4741, 0.0
      %v4774 = vsel %vm475, %v4742, 0.0
      %v4775 = vadd.f32 %v4773, %v4774
      %v4776 = vsel %vm475, %v4743, 0.0
      %v4777 = vadd.f32 %v4775, %v4776
      %v4778 = vsel %vm475, %v4744, 0.0
      %v4779 = vadd.f32 %v4777, %v4778
      %v4780 = vsel %vm475, %v4745, 0.0
      %v4781 = vadd.f32 %v4779, %v4780
      %v4782 = vsel %vm475, %v4746, 0.0
      %v4783 = vadd.f32 %v4781, %v4782
      %v4784 = vsel %vm475, %v4747, 0.0
      %v4785 = vadd.f32 %v4783, %v4784
      %v4786 = vsel %vm475, %v4748, 0.0
      %v4787 = vadd.f32 %v4785, %v4786
      %v4788 = vsel %vm475, %v4749, 0.0
      %v4789 = vadd.f32 %v4787, %v4788
      %v4790 = vsel %vm475, %v4750, 0.0
      %v4791 = vadd.f32 %v4789, %v4790
      %v4792 = vsel %vm475, %v4751, 0.0
      %v4793 = vadd.f32 %v4791, %v4792
      %v4794 = vsel %vm475, %v4752, 0.0
      %v4795 = vadd.f32 %v4793, %v4794
      %v4796 = vsel %vm475, %v4753, 0.0
      %v4797 = vadd.f32 %v4795, %v4796
      %v4798 = vsel %vm475, %v4754, 0.0
      %v4799 = vadd.f32 %v4797, %v4798
      %v4800 = vsel %vm475, %v4755, 0.0
      %v4801 = vadd.f32 %v4799, %v4800
      %v4802 = vsel %vm475, %v4756, 0.0
      %v4803 = vadd.f32 %v4801, %v4802
      %v4804 = vsel %vm475, %v4757, 0.0
      %v4805 = vadd.f32 %v4803, %v4804
      %v4806 = vsel %vm475, %v4758, 0.0
      %v4807 = vadd.f32 %v4805, %v4806
      %v4808 = vsel %vm475, %v4759, 0.0
      %v4809 = vadd.f32 %v4807, %v4808
      %v4810 = vsel %vm475, %v4760, 0.0
      %v4811 = vadd.f32 %v4809, %v4810
      %v4812 = vsel %vm475, %v4761, 0.0
      %v4813 = vadd.f32 %v4811, %v4812
      %v4814 = vsel %vm475, %v4762, 0.0
      %v4815 = vadd.f32 %v4813, %v4814
      %v4816 = vsel %vm475, %v4763, 0.0
      %v4817 = vadd.f32 %v4815, %v4816
      %v4818 = vsel %vm475, %v4764, 0.0
      %v4819 = vadd.f32 %v4817, %v4818
      %v4820 = vsel %vm475, %v4765, 0.0
      %v4821 = vadd.f32 %v4819, %v4820
      %v4822 = vsel %vm475, %v4766, 0.0
      %v4823 = vadd.f32 %v4821, %v4822
      %v4824 = vsel %vm475, %v4767, 0.0
      %v4825 = vadd.f32 %v4823, %v4824
      %v4826 = vsel %vm475, %v4768, 0.0
      %v4827 = vadd.f32 %v4825, %v4826
      %v4828 = vsel %vm475, %v4769, 0.0
      %v4829 = vadd.f32 %v4827, %v4828
      %v4830 = vsel %vm475, %v4770, 0.0
      %v4831 = vadd.f32 %v4829, %v4830
      %v4832 = vsel %vm475, %v4771, 0.0
      %v4833 = vadd.f32 %v4831, %v4832
      %v4834 = vsel %vm475, %v4772, 0.0
      %v4835 = vadd.f32 %v4833, %v4834
      %v4836 = vrot.slane %v4835, 4
      %v4837 = vadd.f32 %v4835, %v4836
      %v4838 = vrot.slane %v4837, 2
      %v4839 = vadd.f32 %v4837, %v4838
      %v4840 = vrot.slane %v4839, 1
      %v4841 = vadd.f32 %v4839, %v4840
      %v4842 = vmul.f32 %v4841, 0.00390625
      %v4843 = vmul.f32 %v4740, %v4740
      %v4844 = vsub.f32 %v4842, %v4843
      %v4845 = vmax.f32 %v4844, 0.0
      %v4846 = vsub.f32 %v4639, %v4740
      %v4847 = vsub.f32 %v4640, %v4740
      %v4848 = vsub.f32 %v4641, %v4740
      %v4849 = vsub.f32 %v4642, %v4740
      %v4850 = vsub.f32 %v4643, %v4740
      %v4851 = vsub.f32 %v4644, %v4740
      %v4852 = vsub.f32 %v4645, %v4740
      %v4853 = vsub.f32 %v4646, %v4740
      %v4854 = vsub.f32 %v4647, %v4740
      %v4855 = vsub.f32 %v4648, %v4740
      %v4856 = vsub.f32 %v4649, %v4740
      %v4857 = vsub.f32 %v4650, %v4740
      %v4858 = vsub.f32 %v4651, %v4740
      %v4859 = vsub.f32 %v4652, %v4740
      %v4860 = vsub.f32 %v4653, %v4740
      %v4861 = vsub.f32 %v4654, %v4740
      %v4862 = vsub.f32 %v4655, %v4740
      %v4863 = vsub.f32 %v4656, %v4740
      %v4864 = vsub.f32 %v4657, %v4740
      %v4865 = vsub.f32 %v4658, %v4740
      %v4866 = vsub.f32 %v4659, %v4740
      %v4867 = vsub.f32 %v4660, %v4740
      %v4868 = vsub.f32 %v4661, %v4740
      %v4869 = vsub.f32 %v4662, %v4740
      %v4870 = vsub.f32 %v4663, %v4740
      %v4871 = vsub.f32 %v4664, %v4740
      %v4872 = vsub.f32 %v4665, %v4740
      %v4873 = vsub.f32 %v4666, %v4740
      %v4874 = vsub.f32 %v4667, %v4740
      %v4875 = vsub.f32 %v4668, %v4740
      %v4876 = vsub.f32 %v4669, %v4740
      %v4877 = vsub.f32 %v4670, %v4740
      %v4878 = vadd.f32 %v4845, 1e-05
      %v4879 = vrsqrt.pop %v4878
      %v4880 = vmul.f32 %v4846, %v4879
      %v4881 = vmul.f32 %v4847, %v4879
      %v4882 = vmul.f32 %v4848, %v4879
      %v4883 = vmul.f32 %v4849, %v4879
      %v4884 = vmul.f32 %v4850, %v4879
      %v4885 = vmul.f32 %v4851, %v4879
      %v4886 = vmul.f32 %v4852, %v4879
      %v4887 = vmul.f32 %v4853, %v4879
      %v4888 = vmul.f32 %v4854, %v4879
      %v4889 = vmul.f32 %v4855, %v4879
      %v4890 = vmul.f32 %v4856, %v4879
      %v4891 = vmul.f32 %v4857, %v4879
      %v4892 = vmul.f32 %v4858, %v4879
      %v4893 = vmul.f32 %v4859, %v4879
      %v4894 = vmul.f32 %v4860, %v4879
      %v4895 = vmul.f32 %v4861, %v4879
      %v4896 = vmul.f32 %v4862, %v4879
      %v4897 = vmul.f32 %v4863, %v4879
      %v4898 = vmul.f32 %v4864, %v4879
      %v4899 = vmul.f32 %v4865, %v4879
      %v4900 = vmul.f32 %v4866, %v4879
      %v4901 = vmul.f32 %v4867, %v4879
      %v4902 = vmul.f32 %v4868, %v4879
      %v4903 = vmul.f32 %v4869, %v4879
      %v4904 = vmul.f32 %v4870, %v4879
      %v4905 = vmul.f32 %v4871, %v4879
      %v4906 = vmul.f32 %v4872, %v4879
      %v4907 = vmul.f32 %v4873, %v4879
      %v4908 = vmul.f32 %v4874, %v4879
      %v4909 = vmul.f32 %v4875, %v4879
      %v4910 = vmul.f32 %v4876, %v4879
      %v4911 = vmul.f32 %v4877, %v4879
      %v4912 = vadd.f32 %v172, %v4880
      %v4913 = vadd.f32 %v173, %v4881
      %v4914 = vadd.f32 %v174, %v4882
      %v4915 = vadd.f32 %v175, %v4883
      %v4916 = vadd.f32 %v176, %v4884
      %v4917 = vadd.f32 %v177, %v4885
      %v4918 = vadd.f32 %v178, %v4886
      %v4919 = vadd.f32 %v179, %v4887
      %v4920 = vadd.f32 %v180, %v4888
      %v4921 = vadd.f32 %v181, %v4889
      %v4922 = vadd.f32 %v182, %v4890
      %v4923 = vadd.f32 %v183, %v4891
      %v4924 = vadd.f32 %v184, %v4892
      %v4925 = vadd.f32 %v185, %v4893
      %v4926 = vadd.f32 %v186, %v4894
      %v4927 = vadd.f32 %v187, %v4895
      %v4928 = vadd.f32 %v188, %v4896
      %v4929 = vadd.f32 %v189, %v4897
      %v4930 = vadd.f32 %v190, %v4898
      %v4931 = vadd.f32 %v191, %v4899
      %v4932 = vadd.f32 %v192, %v4900
      %v4933 = vadd.f32 %v193, %v4901
      %v4934 = vadd.f32 %v194, %v4902
      %v4935 = vadd.f32 %v195, %v4903
      %v4936 = vadd.f32 %v196, %v4904
      %v4937 = vadd.f32 %v197, %v4905
      %v4938 = vadd.f32 %v198, %v4906
      %v4939 = vadd.f32 %v199, %v4907
      %v4940 = vadd.f32 %v200, %v4908
      %v4941 = vadd.f32 %v201, %v4909
      %v4942 = vadd.f32 %v202, %v4910
      %v4943 = vadd.f32 %v203, %v4911
      %4944 = vst.msk [vmem:[%s170] sm:$0xff] %vm475, %v4912
      %4945 = vst.msk [vmem:[%s170 + $0x8] sm:$0xff] %vm475, %v4913
      %4946 = vst.msk [vmem:[%s170 + $0x10] sm:$0xff] %vm475, %v4914
      %4947 = vst.msk [vmem:[%s170 + $0x18] sm:$0xff] %vm475, %v4915
      %4948 = vst.msk [vmem:[%s170 + $0x20] sm:$0xff] %vm475, %v4916
      %4949 = vst.msk [vmem:[%s170 + $0x28] sm:$0xff] %vm475, %v4917
      %4950 = vst.msk [vmem:[%s170 + $0x30] sm:$0xff] %vm475, %v4918
      %4951 = vst.msk [vmem:[%s170 + $0x38] sm:$0xff] %vm475, %v4919
      %4952 = vst.msk [vmem:[%s170 + $0x40] sm:$0xff] %vm475, %v4920
      %4953 = vst.msk [vmem:[%s170 + $0x48] sm:$0xff] %vm475, %v4921
      %4954 = vst.msk [vmem:[%s170 + $0x50] sm:$0xff] %vm475, %v4922
      %4955 = vst.msk [vmem:[%s170 + $0x58] sm:$0xff] %vm475, %v4923
      %4956 = vst.msk [vmem:[%s170 + $0x60] sm:$0xff] %vm475, %v4924
      %4957 = vst.msk [vmem:[%s170 + $0x68] sm:$0xff] %vm475, %v4925
      %4958 = vst.msk [vmem:[%s170 + $0x70] sm:$0xff] %vm475, %v4926
      %4959 = vst.msk [vmem:[%s170 + $0x78] sm:$0xff] %vm475, %v4927
      %4960 = vst.msk [vmem:[%s170 + $0x80] sm:$0xff] %vm475, %v4928
      %4961 = vst.msk [vmem:[%s170 + $0x88] sm:$0xff] %vm475, %v4929
      %4962 = vst.msk [vmem:[%s170 + $0x90] sm:$0xff] %vm475, %v4930
      %4963 = vst.msk [vmem:[%s170 + $0x98] sm:$0xff] %vm475, %v4931
      %4964 = vst.msk [vmem:[%s170 + $0xa0] sm:$0xff] %vm475, %v4932
      %4965 = vst.msk [vmem:[%s170 + $0xa8] sm:$0xff] %vm475, %v4933
      %4966 = vst.msk [vmem:[%s170 + $0xb0] sm:$0xff] %vm475, %v4934
      %4967 = vst.msk [vmem:[%s170 + $0xb8] sm:$0xff] %vm475, %v4935
      %4968 = vst.msk [vmem:[%s170 + $0xc0] sm:$0xff] %vm475, %v4936
      %4969 = vst.msk [vmem:[%s170 + $0xc8] sm:$0xff] %vm475, %v4937
      %4970 = vst.msk [vmem:[%s170 + $0xd0] sm:$0xff] %vm475, %v4938
      %4971 = vst.msk [vmem:[%s170 + $0xd8] sm:$0xff] %vm475, %v4939
      %4972 = vst.msk [vmem:[%s170 + $0xe0] sm:$0xff] %vm475, %v4940
      %4973 = vst.msk [vmem:[%s170 + $0xe8] sm:$0xff] %vm475, %v4941
      %4974 = vst.msk [vmem:[%s170 + $0xf0] sm:$0xff] %vm475, %v4942
      %4975 = vst.msk [vmem:[%s170 + $0xf8] sm:$0xff] %vm475, %v4943
      %p4976 = scmp.lt.s32.totalorder %s14, 1
      %s4977 = scalar_select %p4976, %s14, 1
      %s4978 = smul.addr %s4977, 32
      %s4979 = smul.addr %s4978, 8
      %s4980 = scalar_lea.vmem %s3, %s4979
      // Predicated region
      $region33: #{resnet_block_nchw.1} parent=31 // pred_check
        %p4981 = pneg %p100
      $region34: #{resnet_block_nchw.1} parent=31 // pred_check_branch
        %4983 = sbr.rel (%p4981) target = $region36
      $region35: #{resnet_block_nchw.1} parent=31 // pred_region
        _
      $region36: #{resnet_block_nchw.1} parent=31 // pred_fallthru
        _
    $region32: #{resnet_block_nchw.1} parent=5 // pred_fallthru
      _
    %p4984 = scmp.le.s32.totalorder 2, %s9
    // Predicated region
    $region37: #{resnet_block_nchw.1} parent=5 // pred_check
      %p4985 = pneg %p4984
    $region38: #{resnet_block_nchw.1} parent=5 // pred_check_branch
      %4987 = sbr.rel (%p4985) target = $region40
    $region39: #{resnet_block_nchw.1} parent=5 // pred_region
      %s4988 = ssub.s32 %s9, 2
      // Predicated region
      $region41: #{resnet_block_nchw.1} parent=39 // pred_check
        %p4989 = pneg %p106
      $region42: #{resnet_block_nchw.1} parent=39 // pred_check_branch
        %4991 = sbr.rel (%p4989) target = $region44
      $region43: #{resnet_block_nchw.1} parent=39 // pred_region
        %p4992 = scmp.lt.s32.totalorder %s15, 1
        %s4993 = scalar_select %p4992, %s15, 1
        %s4994 = smul.addr %s4993, 32
        %s4995 = smul.addr %s4994, 8
        %s4996 = scalar_lea.vmem %s3, %s4995
      $region44: #{resnet_block_nchw.1} parent=39 // pred_fallthru
        _
    $region40: #{resnet_block_nchw.1} parent=5 // pred_fallthru
      _
  $region6: #{resnet_block_nchw.1} parent=0 // loop_footer
    %s13 = sadd.s32 1, %s9
  $region7: #{resnet_block_nchw.1} parent=0 // loop_footer_branch
    %8 = sbr.rel target = $region3
  $region8: #{resnet_block_nchw.1} parent=0 // loop_exit
    _

</llo_original>
